<compile_context>
chip_gen: v7x
topology: tpu7x:2x2x1
jax: 0.10.0
libtpu: 0.0.40
codegen_flags: <defaults>
</compile_context>

<pallas_src>
import math
import functools

import jax
import jax.numpy as jnp
from jax.experimental import pallas as pl
from jax.experimental.pallas import tpu as pltpu

NEG_F16_MIN = float(jnp.finfo(jnp.float16).min)   # matches torch.finfo(float16).min


def _round_up(x, m):
    return ((x + m - 1) // m) * m


def _pick(dim, pref):
    """Largest block <= pref that divides dim (full dim when small)."""
    if dim <= pref:
        return dim
    if dim % pref == 0:
        return pref
    for b in range(pref, 0, -1):
        if dim % b == 0:
            return b
    return dim


# ---------------------------------------------------------------------------
# Embedding
# ---------------------------------------------------------------------------
def _embed_onehot_kernel(ids_ref, table_ref, out_ref, acc_ref):
    v = pl.program_id(1)
    vt = table_ref.shape[0]

    @pl.when(v == 0)
    def _():
        acc_ref[...] = jnp.zeros_like(acc_ref)

    ids = ids_ref[...]                                             # (tile, 1) int32
    tile = ids.shape[0]
    col = jax.lax.broadcasted_iota(jnp.int32, (tile, vt), 1) + v * vt
    onehot = (col == ids).astype(table_ref.dtype)                  # (tile, vt)
    acc_ref[...] += jnp.dot(onehot, table_ref[...],
                            preferred_element_type=jnp.float32)

    @pl.when(v == pl.num_programs(1) - 1)
    def _():
        out_ref[...] = acc_ref[...].astype(out_ref.dtype)


def _embed_gather_kernel(ids_smem, table_row_ref, out_ref):
    del ids_smem
    out_ref[...] = table_row_ref[...]


def _embed_gather(ids_flat, table):
    """Scalar-prefetch DMA row gather (for realistic vocab sizes)."""
    n = ids_flat.shape[0]
    _, D = table.shape
    return pl.pallas_call(
        _embed_gather_kernel,
        out_shape=jax.ShapeDtypeStruct((n, D), table.dtype),
        grid_spec=pltpu.PrefetchScalarGridSpec(
            num_scalar_prefetch=1,
            grid=(n,),
            in_specs=[pl.BlockSpec((pl.Element(1), D), lambda i, ids: (ids[i], 0))],
            out_specs=pl.BlockSpec((1, D), lambda i, ids: (i, 0)),
        ),
    )(ids_flat, table)


def embed_lookup(ids, table):
    """ids [B,S] int32, table [V,D] -> [B,S,D] (eval-mode nn.Embedding)."""
    B, S = ids.shape
    V, D = table.shape
    n = B * S
    ids_flat = ids.reshape(-1).astype(jnp.int32)

    if V > 2048:   # realistic vocab: DMA row gather, O(n*D) bytes
        return _embed_gather(ids_flat, table).reshape(B, S, D)

    # toy vocab: one-hot MXU gather, table streamed in vocab tiles
    n8 = _round_up(n, 8)
    t = min(256, n8)
    n_pad = _round_up(n8, t)
    ids_p = jnp.pad(ids_flat, (0, n_pad - n)).reshape(n_pad, 1)
    vt = _pick(V, 1024)
    out = pl.pallas_call(
        _embed_onehot_kernel,
        out_shape=jax.ShapeDtypeStruct((n_pad, D), table.dtype),
        grid=(n_pad // t, V // vt),
        in_specs=[pl.BlockSpec((t, 1), lambda i, v: (i, 0)),
                  pl.BlockSpec((vt, D), lambda i, v: (v, 0))],
        out_specs=pl.BlockSpec((t, D), lambda i, v: (i, 0)),
        scratch_shapes=[pltpu.VMEM((t, D), jnp.float32)],
        compiler_params=pltpu.CompilerParams(
            dimension_semantics=("parallel", "arbitrary")),
    )(ids_p, table)
    return out[:n].reshape(B, S, D)


# ---------------------------------------------------------------------------
# Standalone T5LayerNorm (RMS norm) — only used for the encoder final norm
# ---------------------------------------------------------------------------
def _rmsnorm_kernel(x_ref, w_ref, o_ref, *, eps):
    x = x_ref[...].astype(jnp.float32)
    var = jnp.mean(x * x, axis=-1, keepdims=True)
    o_ref[...] = (w_ref[...] * (x * jax.lax.rsqrt(var + eps))).astype(o_ref.dtype)


def rms_norm(x, weight, eps):
    B, S, D = x.shape
    T = B * S
    Tp = _round_up(T, 8)
    xf = x.reshape(T, D)
    if Tp != T:
        xf = jnp.pad(xf, ((0, Tp - T), (0, 0)))
    rt = _pick(Tp, 512)
    out = pl.pallas_call(
        functools.partial(_rmsnorm_kernel, eps=eps),
        out_shape=jax.ShapeDtypeStruct((Tp, D), x.dtype),
        grid=(Tp // rt,),
        in_specs=[pl.BlockSpec((rt, D), lambda i: (i, 0)),
                  pl.BlockSpec((1, D), lambda i: (0, 0))],
        out_specs=pl.BlockSpec((rt, D), lambda i: (i, 0)),
        compiler_params=pltpu.CompilerParams(dimension_semantics=("parallel",)),
    )(xf, weight.reshape(1, D))
    return out[:T].reshape(B, S, D)


# ---------------------------------------------------------------------------
# Fused (optional RMS-norm) -> matmul -> (+bias) -> (+residual)
# ---------------------------------------------------------------------------
def _fused_linear_kernel(*refs, eps, normalize, has_bias, has_residual):
    i = 0
    x_ref = refs[i]; i += 1
    nw_ref = None
    if normalize:
        nw_ref = refs[i]; i += 1
    w_ref = refs[i]; i += 1
    b_ref = None
    if has_bias:
        b_ref = refs[i]; i += 1
    r_ref = None
    if has_residual:
        r_ref = refs[i]; i += 1
    o_ref = refs[i]

    x = x_ref[...].astype(jnp.float32)
    if normalize:
        var = jnp.mean(x * x, axis=-1, keepdims=True)
        x = nw_ref[...] * (x * jax.lax.rsqrt(var + eps))
    acc = jnp.dot(x, w_ref[...].astype(jnp.float32),
                  preferred_element_type=jnp.float32)
    if has_bias:
        acc = acc + b_ref[...]
    if has_residual:
        acc = acc + r_ref[...].astype(jnp.float32)
    o_ref[...] = acc.astype(o_ref.dtype)


def fused_linear(x, w, *, norm_weight=None, bias=None, residual=None,
                 eps=1e-6, bm=256, bn=512):
    """x [M,K] @ w [K,N]; optionally RMS-norm(x) first, add bias [N], add residual [M,N]."""
    M, K = x.shape
    Kw, N = w.shape
    assert K == Kw
    Mp = _round_up(M, 8)
    if Mp != M:
        x = jnp.pad(x, ((0, Mp - M), (0, 0)))
        if residual is not None:
            residual = jnp.pad(residual, ((0, Mp - M), (0, 0)))
    bm = _pick(Mp, bm)
    bn = _pick(N, bn)

    in_specs = [pl.BlockSpec((bm, K), lambda i, j: (i, 0))]
    args = [x]
    if norm_weight is not None:
        in_specs.append(pl.BlockSpec((1, K), lambda i, j: (0, 0)))
        args.append(norm_weight.reshape(1, K))
    in_specs.append(pl.BlockSpec((K, bn), lambda i, j: (0, j)))
    args.append(w)
    if bias is not None:
        in_specs.append(pl.BlockSpec((1, bn), lambda i, j: (0, j)))
        args.append(bias.reshape(1, N))
    if residual is not None:
        in_specs.append(pl.BlockSpec((bm, bn), lambda i, j: (i, j)))
        args.append(residual)

    kernel = functools.partial(
        _fused_linear_kernel, eps=eps, normalize=norm_weight is not None,
        has_bias=bias is not None, has_residual=residual is not None)

    out = pl.pallas_call(
        kernel,
        out_shape=jax.ShapeDtypeStruct((Mp, N), x.dtype),
        grid=(Mp // bm, N // bn),
        in_specs=in_specs,
        out_specs=pl.BlockSpec((bm, bn), lambda i, j: (i, j)),
        compiler_params=pltpu.CompilerParams(
            dimension_semantics=("parallel", "parallel")),
    )(*args)
    return out[:M]


# ---------------------------------------------------------------------------
# Fused FFN: (optional norm) -> W1 -> ReLU -> W2 -> +residual, tiled over F
# ---------------------------------------------------------------------------
def _ffn_kernel(x_ref, nw_ref, w1_ref, w2_ref, o_ref, xn_ref, acc_ref,
                *, eps, normalize):
    f = pl.program_id(1)

    @pl.when(f == 0)
    def _():
        x = x_ref[...].astype(jnp.float32)
        if normalize:
            var = jnp.mean(x * x, axis=-1, keepdims=True)
            x = nw_ref[...] * (x * jax.lax.rsqrt(var + eps))
        xn_ref[...] = x
        acc_ref[...] = jnp.zeros_like(acc_ref)

    h = jnp.maximum(
        jnp.dot(xn_ref[...], w1_ref[...].astype(jnp.float32),
                preferred_element_type=jnp.float32), 0.0)
    acc_ref[...] += jnp.dot(h, w2_ref[...].astype(jnp.float32),
                            preferred_element_type=jnp.float32)

    @pl.when(f == pl.num_programs(1) - 1)
    def _():
        o_ref[...] = (acc_ref[...] + x_ref[...].astype(jnp.float32)).astype(o_ref.dtype)


def ffn(x, norm_weight, w1, w2, *, normalize, eps, rt=256, ft=1024):
    """x [B,S,D] -> relu((norm?)(x) @ w1) @ w2 + x, hidden dim F tiled."""
    B, S, D = x.shape
    F = w1.shape[1]
    T = B * S
    Tp = _round_up(T, 8)
    xf = x.reshape(T, D)
    if Tp != T:
        xf = jnp.pad(xf, ((0, Tp - T), (0, 0)))
    rt = _pick(Tp, rt)
    ft = _pick(F, ft)
    kernel = functools.partial(_ffn_kernel, eps=eps, normalize=normalize)
    out = pl.pallas_call(
        kernel,
        out_shape=jax.ShapeDtypeStruct((Tp, D), x.dtype),
        grid=(Tp // rt, F // ft),
        in_specs=[pl.BlockSpec((rt, D), lambda i, f: (i, 0)),
                  pl.BlockSpec((1, D), lambda i, f: (0, 0)),
                  pl.BlockSpec((D, ft), lambda i, f: (0, f)),
                  pl.BlockSpec((ft, D), lambda i, f: (f, 0))],
        out_specs=pl.BlockSpec((rt, D), lambda i, f: (i, 0)),
        scratch_shapes=[pltpu.VMEM((rt, D), jnp.float32),
                        pltpu.VMEM((rt, D), jnp.float32)],
        compiler_params=pltpu.CompilerParams(
            dimension_semantics=("parallel", "arbitrary")),
    )(xf, norm_weight.reshape(1, D), w1, w2)
    return out[:T].reshape(B, S, D)


# ---------------------------------------------------------------------------
# Attention core: all heads per grid step, bias/mask blocks reused (no
# (B,H,Lq,Lk) broadcast materialized), softmax with EUP reciprocal.
# ---------------------------------------------------------------------------
def _attn_kernel(q_ref, k_ref, v_ref, pb_ref, m_ref, o_ref, p_ref):
    q = q_ref[0].astype(jnp.float32)            # (H, Lq, dh)
    k = k_ref[0].astype(jnp.float32)            # (H, Lk, dh)
    v = v_ref[0].astype(jnp.float32)            # (H, Lk, dh)
    s = jnp.einsum('hqd,hkd->hqk', q, k, preferred_element_type=jnp.float32)
    s = s + pb_ref[0] + m_ref[0]                # (H,Lq,Lk) + (1,Lm,Lk) broadcast
    mmax = jnp.max(s, axis=-1, keepdims=True)
    e = jnp.exp(s - mmax)
    denom = jnp.sum(e, axis=-1, keepdims=True)
    p = e * pl.reciprocal(denom, approx=True)
    p_ref[0] = p.astype(p_ref.dtype)
    o_ref[0] = jnp.einsum('hqk,hkd->hqd', p, v,
                          preferred_element_type=jnp.float32).astype(o_ref.dtype)


def attention_core(q, k, v, pos_bias, mask):
    """q [B,H,Lq,dh], k/v [B,H,Lk,dh], pos_bias [1,H,Lq,Lk], mask [B,1,{1|Lq},Lk]."""
    B, H, Lq, dh = q.shape
    Lk = k.shape[2]
    Lm = mask.shape[2]
    pos_bias = pos_bias.astype(jnp.float32)
    mask = mask.astype(jnp.float32)
    ctx, prob = pl.pallas_call(
        _attn_kernel,
        out_shape=(jax.ShapeDtypeStruct((B, H, Lq, dh), q.dtype),
                   jax.ShapeDtypeStruct((B, H, Lq, Lk), jnp.float32)),
        grid=(B,),
        in_specs=[pl.BlockSpec((1, H, Lq, dh), lambda b: (b, 0, 0, 0)),
                  pl.BlockSpec((1, H, Lk, dh), lambda b: (b, 0, 0, 0)),
                  pl.BlockSpec((1, H, Lk, dh), lambda b: (b, 0, 0, 0)),
                  pl.BlockSpec((1, H, Lq, Lk), lambda b: (0, 0, 0, 0)),   # shared over B
                  pl.BlockSpec((1, 1, Lm, Lk), lambda b: (b, 0, 0, 0))],
        out_specs=(pl.BlockSpec((1, H, Lq, dh), lambda b: (b, 0, 0, 0)),
                   pl.BlockSpec((1, H, Lq, Lk), lambda b: (b, 0, 0, 0))),
        compiler_params=pltpu.CompilerParams(dimension_semantics=("parallel",)),
    )(q, k, v, pos_bias, mask)
    return ctx, prob


# ---------------------------------------------------------------------------
# Plain-JAX helpers (mask + relative-position bias — tiny int32 setup)
# ---------------------------------------------------------------------------
def get_extended_attention_mask(attention_mask, autoregressive=False):
    mask = attention_mask[:, None, None, :].astype(jnp.int32)          # (B,1,1,S)
    if autoregressive:
        S = attention_mask.shape[1]
        sub = (jnp.triu(jnp.ones((S, S), jnp.int32), k=1) < 1).astype(jnp.int32)
        mask = ((mask + sub[None, None, :, :]) > 1).astype(jnp.int32)  # (B,1,S,S)
    mask = mask.astype(jnp.float32)
    return (1.0 - mask) * NEG_F16_MIN


def _relative_position_bucket(rel_pos, bidirectional, num_buckets, max_distance=128):
    buckets = jnp.zeros_like(rel_pos)
    if bidirectional:
        num_buckets //= 2
        buckets = buckets + (rel_pos > 0).astype(jnp.int32) * num_buckets
        rel_pos = jnp.abs(rel_pos)
    else:
        rel_pos = -jnp.minimum(rel_pos, jnp.zeros_like(rel_pos))
    max_exact = num_buckets // 2
    is_small = rel_pos < max_exact
    if_large = max_exact + (
        jnp.log(rel_pos.astype(jnp.float32) / max_exact)
        / math.log(max_distance / max_exact) * (num_buckets - max_exact)
    ).astype(jnp.int32)
    if_large = jnp.minimum(if_large, num_buckets - 1)
    return buckets + jnp.where(is_small, rel_pos, if_large)


def compute_position_bias(query_len, key_len, rel_bias_table, bidirectional, num_buckets):
    ctx = jnp.arange(query_len)[:, None]
    mem = jnp.arange(key_len)[None, :]
    buckets = _relative_position_bucket(mem - ctx, bidirectional, num_buckets)
    values = rel_bias_table[buckets]                     # (q, k, H)
    return jnp.transpose(values, (2, 0, 1))[None]        # (1, H, q, k)


# ---------------------------------------------------------------------------
# Model forward (shared by Pallas path and pure-JAX reference via `ops`)
# ---------------------------------------------------------------------------
def _split_heads(t, B, L, H, dh):
    return t.reshape(B, L, H, dh).transpose(0, 2, 1, 3)


def _merge_heads(t):
    B, H, L, dh = t.shape
    return t.transpose(0, 2, 1, 3).reshape(B * L, H * dh)


def t5_self_attention(ops, pa, norm_w, cfg, x, mask, bidirectional):
    B, L, D = x.shape
    H = cfg['num_att_heads']
    dh = D // H
    xf = x.reshape(-1, D)
    qkv = ops['fused_linear'](xf, pa['wqkv'], norm_weight=norm_w)   # norm fused
    q, k, v = jnp.split(qkv, 3, axis=-1)
    q = _split_heads(q, B, L, H, dh)
    k = _split_heads(k, B, L, H, dh)
    v = _split_heads(v, B, L, H, dh)
    pos_bias = compute_position_bias(L, L, pa['rel_bias'], bidirectional,
                                     cfg['relative_attention_num_buckets'])
    ctx, prob = ops['attn_core'](q, k, v, pos_bias, mask)
    out = ops['fused_linear'](_merge_heads(ctx), pa['wo'], residual=xf)  # +residual fused
    return out.reshape(B, L, D), prob     # dropout: eval-mode identity


def t5_cross_attention(ops, pa, norm_w, cfg, x, enc_out, mask):
    B, Lq, D = x.shape
    Lk = enc_out.shape[1]
    H = cfg['num_att_heads']
    dh = D // H
    xf = x.reshape(-1, D)
    ef = enc_out.reshape(-1, D)
    q = ops['fused_linear'](xf, pa['wq'], norm_weight=norm_w)
    kv = ops['fused_linear'](ef, pa['wkv'])                       # K|V fused, no norm
    k, v = jnp.split(kv, 2, axis=-1)
    q = _split_heads(q, B, Lq, H, dh)
    k = _split_heads(k, B, Lk, H, dh)
    v = _split_heads(v, B, Lk, H, dh)
    pos_bias = jnp.zeros((1, H, Lq, Lk), jnp.float32)             # no relative bias
    ctx, prob = ops['attn_core'](q, k, v, pos_bias, mask)
    out = ops['fused_linear'](_merge_heads(ctx), pa['wo'], residual=xf)
    return out.reshape(B, Lq, D), prob


def encoder_layer_fwd(ops, p, cfg, x, self_mask):
    x, prob = t5_self_attention(ops, p['self_attention'], p['self_attention_norm'],
                                cfg, x, self_mask, bidirectional=True)
    x = ops['ffn'](x, p['feed_forward_norm'], p['ffn_w1'], p['ffn_w2'], normalize=True)
    return x, prob


def decoder_layer_fwd(ops, p, cfg, x, self_mask, enc_out, cross_mask):
    x, sa_prob = t5_self_attention(ops, p['self_attention'], p['self_attention_norm'],
                                   cfg, x, self_mask, bidirectional=False)
    x, ca_prob = t5_cross_attention(ops, p['cross_attention'], p['cross_attention_norm'],
                                    cfg, x, enc_out, cross_mask)
    # NOTE: the reference T5DecoderLayer applies feed_forward to the *un-normed* stream.
    x = ops['ffn'](x, p['feed_forward_norm'], p['ffn_w1'], p['ffn_w2'], normalize=False)
    return x, sa_prob, ca_prob


def encoder_fwd(ops, p, cfg, input_ids, attention_mask):
    self_mask = get_extended_attention_mask(attention_mask, autoregressive=False)
    x = ops['embed'](input_ids, p['embedding'])
    probs = []
    for lp in p['layers']:
        x, prob = encoder_layer_fwd(ops, lp, cfg, x, self_mask)
        probs.append(prob)
    x = ops['rmsnorm'](x, p['final_layer_norm'])
    return x, probs, self_mask


def decoder_fwd(ops, p, cfg, input_ids, attention_mask, enc_out, enc_ext_mask):
    if attention_mask is None:
        attention_mask = (input_ids != cfg['pad_token_id']).astype(jnp.int32)
    self_mask = get_extended_attention_mask(attention_mask, autoregressive=True)
    x = ops['embed'](input_ids, p['embedding'])
    sa_probs, ca_probs = [], []
    for lp in p['layers']:
        x, sa, ca = decoder_layer_fwd(ops, lp, cfg, x, self_mask, enc_out, enc_ext_mask)
        sa_probs.append(sa)
        ca_probs.append(ca)
    B, S, D = x.shape
    # final norm + dropout(identity) + LM head fused into one matmul kernel
    logits = ops['fused_linear'](x.reshape(-1, D), p['lm_head_w'],
                                 norm_weight=p['final_layer_norm'],
                                 bias=p['lm_head_b']).reshape(B, S, -1)
    return logits, sa_probs, ca_probs


def t5_model_fwd(ops, params, cfg, enc_input_ids, enc_attention_mask,
                 dec_input_ids, dec_attention_mask):
    if enc_attention_mask is None:
        enc_attention_mask = (enc_input_ids != cfg['pad_token_id']).astype(jnp.int32)
    enc_out, enc_sa, enc_ext_mask = encoder_fwd(ops, params['encoder'], cfg,
                                                enc_input_ids, enc_attention_mask)
    logits, dec_sa, dec_ca = decoder_fwd(ops, params['decoder'], cfg, dec_input_ids,
                                         dec_attention_mask, enc_out, enc_ext_mask)
    return logits, enc_sa, dec_sa, dec_ca


# ---------------------------------------------------------------------------
# Op tables: Pallas implementation vs pure-JAX reference
# ---------------------------------------------------------------------------
def make_pallas_ops(eps):
    return dict(embed=embed_lookup,
                rmsnorm=lambda x, w: rms_norm(x, w, eps),
                fused_linear=functools.partial(fused_linear, eps=eps),
                ffn=functools.partial(ffn, eps=eps),
                attn_core=attention_core)


def make_reference_ops(eps):
    def ref_norm2d(x2d, w):
        xv = x2d.astype(jnp.float32)
        var = jnp.mean(xv * xv, axis=-1, keepdims=True)
        return w.reshape(1, -1) * (xv * jax.lax.rsqrt(var + eps))

    def ref_fused_linear(x, w, norm_weight=None, bias=None, residual=None):
        h = ref_norm2d(x, norm_weight) if norm_weight is not None else x.astype(jnp.float32)
        y = h @ w
        if bias is not None:
            y = y + bias
        if residual is not None:
            y = y + residual
        return y

    def ref_ffn(x, nw, w1, w2, normalize):
        B, S, D = x.shape
        xf = x.reshape(-1, D)
        h = ref_norm2d(xf, nw) if normalize else xf.astype(jnp.float32)
        y = jnp.maximum(h @ w1, 0.0) @ w2 + xf
        return y.reshape(B, S, D)

    def ref_attn(q, k, v, pos_bias, mask):
        s = jnp.einsum('bhqd,bhkd->bhqk', q, k) + pos_bias + mask
        p = jax.nn.softmax(s, axis=-1)
        return jnp.einsum('bhqk,bhkd->bhqd', p, v), p

    def ref_rmsnorm(x, w):
        xv = x.astype(jnp.float32)
        var = jnp.mean(xv * xv, axis=-1, keepdims=True)
        return w * (xv * jax.lax.rsqrt(var + eps))

    return dict(embed=lambda ids, table: jnp.take(table, ids, axis=0),
                rmsnorm=ref_rmsnorm,
                fused_linear=ref_fused_linear,
                ffn=ref_ffn,
                attn_core=ref_attn)


# ---------------------------------------------------------------------------
# Deterministic parameter init (matches module init: N(0, init_std), pad row 0)
# ---------------------------------------------------------------------------
def init_params(key, cfg):
    V, D = cfg['vocab_size'], cfg['d_model']
    H, F = cfg['num_att_heads'], cfg['feed_forward_dim']
    NB, L = cfg['relative_attention_num_buckets'], cfg['num_enc_layers']
    std = cfg['init_std']
    keys = iter(jax.random.split(key, 4096))

    def norm(shape):
        return jax.random.normal(next(keys), shape, jnp.float32) * std

    embedding = norm((V, D)).at[cfg['pad_token_id']].set(0.0)

    def self_attn_params():
        wq, wk, wv = norm((D, D)), norm((D, D)), norm((D, D))
        return dict(wqkv=jnp.concatenate([wq, wk, wv], axis=1),
                    wo=norm((D, D)), rel_bias=norm((NB, H)))

    def cross_attn_params():
        wk, wv = norm((D, D)), norm((D, D))
        return dict(wq=norm((D, D)),
                    wkv=jnp.concatenate([wk, wv], axis=1),
                    wo=norm((D, D)))

    def enc_layer():
        return dict(self_attention_norm=jnp.ones((D,), jnp.float32),
                    self_attention=self_attn_params(),
                    feed_forward_norm=jnp.ones((D,), jnp.float32),
                    ffn_w1=norm((D, F)), ffn_w2=norm((F, D)))

    def dec_layer():
        return dict(self_attention_norm=jnp.ones((D,), jnp.float32),
                    self_attention=self_attn_params(),
                    cross_attention_norm=jnp.ones((D,), jnp.float32),
                    cross_attention=cross_attn_params(),
                    feed_forward_norm=jnp.ones((D,), jnp.float32),  # unused in fwd (matches ref)
                    ffn_w1=norm((D, F)), ffn_w2=norm((F, D)))

    encoder = dict(embedding=embedding,
                   layers=[enc_layer() for _ in range(L)],
                   final_layer_norm=jnp.ones((D,), jnp.float32))
    decoder = dict(embedding=embedding,   # share_embedding=True
                   layers=[dec_layer() for _ in range(L)],
                   final_layer_norm=jnp.ones((D,), jnp.float32),
                   lm_head_w=norm((D, V)),
                   lm_head_b=jnp.zeros((V,), jnp.float32))
    return dict(encoder=encoder, decoder=decoder)


if __name__ == "__main__":
    cfg = dict(vocab_size=256, d_model=128, num_att_heads=4, feed_forward_dim=256,
               num_enc_layers=2, relative_attention_num_buckets=32,
               pad_token_id=0, layer_norm_eps=1e-6, init_std=0.02,
               drop_out_raito=0.1, share_embedding=True)
    B, S_ENC, S_DEC = 2, 8, 8

    root = jax.random.PRNGKey(0)
    k_params, k_enc, k_dec = jax.random.split(root, 3)
    params = init_params(k_params, cfg)

    enc_ids = jax.random.randint(k_enc, (B, S_ENC), 1, cfg['vocab_size'], dtype=jnp.int32)
    dec_ids = jax.random.randint(k_dec, (B, S_DEC), 1, cfg['vocab_size'], dtype=jnp.int32)
    enc_ids = enc_ids.at[1, -2:].set(cfg['pad_token_id'])   # exercise padding mask
    dec_ids = dec_ids.at[0, -1:].set(cfg['pad_token_id'])
    enc_mask = (enc_ids != cfg['pad_token_id']).astype(jnp.int32)
    dec_mask = (dec_ids != cfg['pad_token_id']).astype(jnp.int32)

    pallas_ops = make_pallas_ops(cfg['layer_norm_eps'])
    ref_ops = make_reference_ops(cfg['layer_norm_eps'])

    fwd = jax.jit(lambda p, a, b, c, d: t5_model_fwd(pallas_ops, p, cfg, a, b, c, d))
    logits, enc_sa, dec_sa, dec_ca = fwd(params, enc_ids, enc_mask, dec_ids, dec_mask)
    logits = jax.block_until_ready(logits)

    ref_logits, ref_enc_sa, ref_dec_sa, ref_dec_ca = t5_model_fwd(
        ref_ops, params, cfg, enc_ids, enc_mask, dec_ids, dec_mask)

    assert logits.shape == (B, S_DEC, cfg['vocab_size'])
    assert len(enc_sa) == cfg['num_enc_layers'] and len(dec_ca) == cfg['num_enc_layers']
    lerr = float(jnp.max(jnp.abs(logits - ref_logits)))
    assert jnp.allclose(logits, ref_logits, atol=5e-3, rtol=5e-3), \
        f"logits mismatch vs reference (max abs err={lerr})"
    perr = float(jnp.max(jnp.abs(dec_sa[-1] - ref_dec_sa[-1])))
    assert jnp.allclose(dec_sa[-1], ref_dec_sa[-1], atol=5e-3, rtol=5e-3), \
        f"attention prob mismatch vs reference (max abs err={perr})"
    cerr = float(jnp.max(jnp.abs(dec_ca[-1] - ref_dec_ca[-1])))
    assert jnp.allclose(dec_ca[-1], ref_dec_ca[-1], atol=5e-3, rtol=5e-3), \
        f"cross-attention prob mismatch vs reference (max abs err={cerr})"

    print("KERNEL_OK")
</pallas_src>

<mosaic_0001>
module attributes {stable_mosaic.version = 11 : i64} {
  func.func @_fused_linear_kernel(%arg0: i32, %arg1: i32, %arg2: memref<16x128xf32, #tpu.memory_space<vmem>>, %arg3: memref<1x128xf32, #tpu.memory_space<vmem>>, %arg4: memref<128x384xf32, #tpu.memory_space<vmem>>, %arg5: memref<16x384xf32, #tpu.memory_space<vmem>>) attributes {dimension_semantics = [#tpu.dimension_semantics<parallel>, #tpu.dimension_semantics<parallel>], iteration_bounds = array<i64: 1, 1>, scalar_prefetch = 0 : i64, scratch_operands = 0 : i64, tpu.core_type = #tpu.core_type<tc>, window_params = [{transform_indices = @transform_0, window_bounds = array<i64: 16, 128>}, {pipeline_mode = #tpu.pipeline_mode<synchronous>, transform_indices = @transform_1, window_bounds = array<i64: 1, 128>}, {transform_indices = @transform_2, window_bounds = array<i64: 128, 384>}, {transform_indices = @transform_3, window_bounds = array<i64: 16, 384>}]} {
    %c0 = arith.constant 0 : index
    %c0_0 = arith.constant 0 : index
    %0 = vector.load %arg2[%c0, %c0_0] : memref<16x128xf32, #tpu.memory_space<vmem>>, vector<16x128xf32>
    %1 = arith.mulf %0, %0 : vector<16x128xf32>
    %cst = arith.constant dense<0.000000e+00> : vector<16xf32>
    %2 = vector.multi_reduction <add>, %1, %cst [1] : vector<16x128xf32> to vector<16xf32>
    %3 = vector.shape_cast %2 : vector<16xf32> to vector<16x1xf32>
    %cst_1 = arith.constant 1.280000e+02 : f32
    %4 = vector.broadcast %cst_1 : f32 to vector<16x1xf32>
    %5 = arith.divf %3, %4 : vector<16x1xf32>
    %c0_2 = arith.constant 0 : index
    %c0_3 = arith.constant 0 : index
    %6 = vector.load %arg3[%c0_2, %c0_3] : memref<1x128xf32, #tpu.memory_space<vmem>>, vector<1x128xf32>
    %cst_4 = arith.constant 9.99999997E-7 : f32
    %7 = vector.broadcast %cst_4 : f32 to vector<16x1xf32>
    %8 = arith.addf %5, %7 : vector<16x1xf32>
    %9 = math.rsqrt %8 : vector<16x1xf32>
    %10 = vector.broadcast %9 : vector<16x1xf32> to vector<16x128xf32>
    %11 = arith.mulf %0, %10 : vector<16x128xf32>
    %12 = vector.broadcast %6 : vector<1x128xf32> to vector<16x128xf32>
    %13 = arith.mulf %12, %11 : vector<16x128xf32>
    %c0_5 = arith.constant 0 : index
    %c0_6 = arith.constant 0 : index
    %14 = vector.load %arg4[%c0_5, %c0_6] : memref<128x384xf32, #tpu.memory_space<vmem>>, vector<128x384xf32>
    %cst_7 = arith.constant dense<0.000000e+00> : vector<16x384xf32>
    %15 = tpu.matmul %13, %14, %cst_7 {dimension_numbers = #tpu.dot_dimension_numbers<[1], [0], [0], [1], [0, 0, 1, 1], [], []>} : vector<16x128xf32>, vector<128x384xf32>, vector<16x384xf32> -> vector<16x384xf32>
    %c0_8 = arith.constant 0 : index
    %c0_9 = arith.constant 0 : index
    %16 = vector.load %arg5[%c0_8, %c0_9] : memref<16x384xf32, #tpu.memory_space<vmem>>, vector<16x384xf32>
    tpu.vector_store %arg5[%c0_8, %c0_9], %15 {strides = array<i32>} : memref<16x384xf32, #tpu.memory_space<vmem>>, vector<16x384xf32>,
    return
  }
  func.func @transform_0(%arg0: i32, %arg1: i32) -> (i32, i32) {
    %c0_i32 = arith.constant 0 : i32
    %c0_i32_0 = arith.constant 0 : i32
    return %arg0, %c0_i32 : i32, i32
  }
  func.func @transform_1(%arg0: i32, %arg1: i32) -> (i32, i32) {
    %c0_i32 = arith.constant 0 : i32
    %c0_i32_0 = arith.constant 0 : i32
    %c0_i32_1 = arith.constant 0 : i32
    return %c0_i32, %c0_i32_0 : i32, i32
  }
  func.func @transform_2(%arg0: i32, %arg1: i32) -> (i32, i32) {
    %c0_i32 = arith.constant 0 : i32
    %c0_i32_0 = arith.constant 0 : i32
    return %c0_i32, %arg1 : i32, i32
  }
  func.func @transform_3(%arg0: i32, %arg1: i32) -> (i32, i32) {
    %c0_i32 = arith.constant 0 : i32
    return %arg0, %arg1 : i32, i32
  }
}

module attributes {stable_mosaic.version = 11 : i64} {
  func.func @_embed_onehot_kernel(%arg0: i32, %arg1: i32, %arg2: memref<16x1xi32, #tpu.memory_space<vmem>>, %arg3: memref<256x128xf32, #tpu.memory_space<vmem>>, %arg4: memref<16x128xf32, #tpu.memory_space<vmem>>, %arg5: memref<16x128xf32, #tpu.memory_space<vmem>>) attributes {dimension_semantics = [#tpu.dimension_semantics<parallel>, #tpu.dimension_semantics<arbitrary>], iteration_bounds = array<i64: 1, 1>, scalar_prefetch = 0 : i64, scratch_operands = 1 : i64, tpu.core_type = #tpu.core_type<tc>, window_params = [{transform_indices = @transform_0, window_bounds = array<i64: 16, 1>}, {transform_indices = @transform_1, window_bounds = array<i64: 256, 128>}, {transform_indices = @transform_2, window_bounds = array<i64: 16, 128>}]} {
    %c0_i32 = arith.constant 0 : i32
    %0 = arith.cmpi eq, %arg1, %c0_i32 : i32
    %1 = arith.extui %0 : i1 to i32
    %c0_i32_0 = arith.constant 0 : i32
    %2 = arith.cmpi ne, %1, %c0_i32_0 : i32
    scf.if %2 {
      %cst_10 = arith.constant 0.000000e+00 : f32
      %20 = vector.broadcast %cst_10 : f32 to vector<16x128xf32>
      %c0_11 = arith.constant 0 : index
      %c0_12 = arith.constant 0 : index
      %21 = vector.load %arg5[%c0_11, %c0_12] : memref<16x128xf32, #tpu.memory_space<vmem>>, vector<16x128xf32>
      tpu.vector_store %arg5[%c0_11, %c0_12], %20 {strides = array<i32>} : memref<16x128xf32, #tpu.memory_space<vmem>>, vector<16x128xf32>,
    } else {
    }
    %c0 = arith.constant 0 : index
    %c0_1 = arith.constant 0 : index
    %3 = vector.load %arg2[%c0, %c0_1] : memref<16x1xi32, #tpu.memory_space<vmem>>, vector<16x1xi32>
    %4 = tpu.iota {dimensions = array<i32: 1>} : vector<16x256xi32>
    %c256_i32 = arith.constant 256 : i32
    %5 = arith.muli %arg1, %c256_i32 : i32
    %6 = vector.broadcast %5 : i32 to vector<16x256xi32>
    %7 = arith.addi %4, %6 : vector<16x256xi32>
    %8 = vector.broadcast %3 : vector<16x1xi32> to vector<16x256xi32>
    %9 = arith.cmpi eq, %7, %8 : vector<16x256xi32>
    %10 = arith.extui %9 : vector<16x256xi1> to vector<16x256xi32>
    %11 = arith.sitofp %10 : vector<16x256xi32> to vector<16x256xf32>
    %c0_2 = arith.constant 0 : index
    %c0_3 = arith.constant 0 : index
    %12 = vector.load %arg5[%c0_2, %c0_3] : memref<16x128xf32, #tpu.memory_space<vmem>>, vector<16x128xf32>
    %c0_4 = arith.constant 0 : index
    %c0_5 = arith.constant 0 : index
    %13 = vector.load %arg3[%c0_4, %c0_5] : memref<256x128xf32, #tpu.memory_space<vmem>>, vector<256x128xf32>
    %cst = arith.constant dense<0.000000e+00> : vector<16x128xf32>
    %14 = tpu.matmul %11, %13, %cst {dimension_numbers = #tpu.dot_dimension_numbers<[1], [0], [0], [1], [0, 0, 1, 1], [], []>} : vector<16x256xf32>, vector<256x128xf32>, vector<16x128xf32> -> vector<16x128xf32>
    %15 = arith.addf %12, %14 : vector<16x128xf32>
    %c0_6 = arith.constant 0 : index
    %c0_7 = arith.constant 0 : index
    %16 = vector.load %arg5[%c0_6, %c0_7] : memref<16x128xf32, #tpu.memory_space<vmem>>, vector<16x128xf32>
    tpu.vector_store %arg5[%c0_6, %c0_7], %15 {strides = array<i32>} : memref<16x128xf32, #tpu.memory_space<vmem>>, vector<16x128xf32>,
    %c0_i32_8 = arith.constant 0 : i32
    %17 = arith.cmpi eq, %arg1, %c0_i32_8 : i32
    %18 = arith.extui %17 : i1 to i32
    %c0_i32_9 = arith.constant 0 : i32
    %19 = arith.cmpi ne, %18, %c0_i32_9 : i32
    scf.if %19 {
      %c0_10 = arith.constant 0 : index
      %c0_11 = arith.constant 0 : index
      %20 = vector.load %arg5[%c0_10, %c0_11] : memref<16x128xf32, #tpu.memory_space<vmem>>, vector<16x128xf32>
      %c0_12 = arith.constant 0 : index
      %c0_13 = arith.constant 0 : index
      %21 = vector.load %arg4[%c0_12, %c0_13] : memref<16x128xf32, #tpu.memory_space<vmem>>, vector<16x128xf32>
      tpu.vector_store %arg4[%c0_12, %c0_13], %20 {strides = array<i32>} : memref<16x128xf32, #tpu.memory_space<vmem>>, vector<16x128xf32>,
    } else {
    }
    return
  }
  func.func @transform_0(%arg0: i32, %arg1: i32) -> (i32, i32) {
    %c0_i32 = arith.constant 0 : i32
    %c0_i32_0 = arith.constant 0 : i32
    return %arg0, %c0_i32 : i32, i32
  }
  func.func @transform_1(%arg0: i32, %arg1: i32) -> (i32, i32) {
    %c0_i32 = arith.constant 0 : i32
    %c0_i32_0 = arith.constant 0 : i32
    return %arg1, %c0_i32 : i32, i32
  }
  func.func @transform_2(%arg0: i32, %arg1: i32) -> (i32, i32) {
    %c0_i32 = arith.constant 0 : i32
    %c0_i32_0 = arith.constant 0 : i32
    return %arg0, %c0_i32 : i32, i32
  }
}

module attributes {stable_mosaic.version = 11 : i64} {
  func.func @_attn_kernel(%arg0: i32, %arg1: memref<1x4x8x32xf32, #tpu.memory_space<vmem>>, %arg2: memref<1x4x8x32xf32, #tpu.memory_space<vmem>>, %arg3: memref<1x4x8x32xf32, #tpu.memory_space<vmem>>, %arg4: memref<1x4x8x8xf32, #tpu.memory_space<vmem>>, %arg5: memref<1x1x1x8xf32, #tpu.memory_space<vmem>>, %arg6: memref<1x4x8x32xf32, #tpu.memory_space<vmem>>, %arg7: memref<1x4x8x8xf32, #tpu.memory_space<vmem>>) attributes {dimension_semantics = [#tpu.dimension_semantics<parallel>], iteration_bounds = array<i64: 2>, scalar_prefetch = 0 : i64, scratch_operands = 0 : i64, tpu.core_type = #tpu.core_type<tc>, window_params = [{transform_indices = @transform_0, window_bounds = array<i64: 1, 4, 8, 32>}, {transform_indices = @transform_1, window_bounds = array<i64: 1, 4, 8, 32>}, {transform_indices = @transform_2, window_bounds = array<i64: 1, 4, 8, 32>}, {pipeline_mode = #tpu.pipeline_mode<synchronous>, transform_indices = @transform_3, window_bounds = array<i64: 1, 4, 8, 8>}, {transform_indices = @transform_4, window_bounds = array<i64: 1, 1, 1, 8>}, {transform_indices = @transform_5, window_bounds = array<i64: 1, 4, 8, 32>}, {transform_indices = @transform_6, window_bounds = array<i64: 1, 4, 8, 8>}]} {
    %c0 = arith.constant 0 : index
    %c0_0 = arith.constant 0 : index
    %c0_1 = arith.constant 0 : index
    %c0_2 = arith.constant 0 : index
    %0 = vector.load %arg1[%c0, %c0_0, %c0_1, %c0_2] : memref<1x4x8x32xf32, #tpu.memory_space<vmem>>, vector<1x4x8x32xf32>
    %1 = vector.shape_cast %0 : vector<1x4x8x32xf32> to vector<4x8x32xf32>
    %c0_3 = arith.constant 0 : index
    %c0_4 = arith.constant 0 : index
    %c0_5 = arith.constant 0 : index
    %c0_6 = arith.constant 0 : index
    %2 = vector.load %arg2[%c0_3, %c0_4, %c0_5, %c0_6] : memref<1x4x8x32xf32, #tpu.memory_space<vmem>>, vector<1x4x8x32xf32>
    %3 = vector.shape_cast %2 : vector<1x4x8x32xf32> to vector<4x8x32xf32>
    %c0_7 = arith.constant 0 : index
    %c0_8 = arith.constant 0 : index
    %c0_9 = arith.constant 0 : index
    %c0_10 = arith.constant 0 : index
    %4 = vector.load %arg3[%c0_7, %c0_8, %c0_9, %c0_10] : memref<1x4x8x32xf32, #tpu.memory_space<vmem>>, vector<1x4x8x32xf32>
    %5 = vector.shape_cast %4 : vector<1x4x8x32xf32> to vector<4x8x32xf32>
    "tpu.trace_start"() <{level = 10 : i32, message = "hqd,hkd->hqk"}> : () -> ()
    %cst = arith.constant dense<0.000000e+00> : vector<4x8x8xf32>
    %6 = tpu.matmul %1, %3, %cst {dimension_numbers = #tpu.dot_dimension_numbers<[2], [2], [1], [1], [0, 0, 0, 1, 1, 1], [0], [0]>} : vector<4x8x32xf32>, vector<4x8x32xf32>, vector<4x8x8xf32> -> vector<4x8x8xf32>
    "tpu.trace_stop"() : () -> ()
    %c0_11 = arith.constant 0 : index
    %c0_12 = arith.constant 0 : index
    %c0_13 = arith.constant 0 : index
    %c0_14 = arith.constant 0 : index
    %7 = vector.load %arg4[%c0_11, %c0_12, %c0_13, %c0_14] : memref<1x4x8x8xf32, #tpu.memory_space<vmem>>, vector<1x4x8x8xf32>
    %8 = vector.shape_cast %7 : vector<1x4x8x8xf32> to vector<4x8x8xf32>
    %9 = arith.addf %6, %8 : vector<4x8x8xf32>
    %c0_15 = arith.constant 0 : index
    %c0_16 = arith.constant 0 : index
    %c0_17 = arith.constant 0 : index
    %c0_18 = arith.constant 0 : index
    %10 = vector.load %arg5[%c0_15, %c0_16, %c0_17, %c0_18] : memref<1x1x1x8xf32, #tpu.memory_space<vmem>>, vector<1x1x1x8xf32>
    %11 = vector.shape_cast %10 : vector<1x1x1x8xf32> to vector<1x1x8xf32>
    %12 = vector.broadcast %11 : vector<1x1x8xf32> to vector<4x8x8xf32>
    %13 = arith.addf %9, %12 : vector<4x8x8xf32>
    %cst_19 = arith.constant dense<0xFF800000> : vector<4x8xf32>
    %14 = vector.multi_reduction <maximumf>, %13, %cst_19 [2] : vector<4x8x8xf32> to vector<4x8xf32>
    %15 = vector.shape_cast %14 : vector<4x8xf32> to vector<4x8x1xf32>
    %16 = vector.broadcast %15 : vector<4x8x1xf32> to vector<4x8x8xf32>
    %17 = arith.subf %13, %16 : vector<4x8x8xf32>
    %18 = math.exp %17 : vector<4x8x8xf32>
    %cst_20 = arith.constant dense<0.000000e+00> : vector<4x8xf32>
    %19 = vector.multi_reduction <add>, %18, %cst_20 [2] : vector<4x8x8xf32> to vector<4x8xf32>
    %20 = vector.shape_cast %19 : vector<4x8xf32> to vector<4x8x1xf32>
    %21 = tpu.reciprocal %20 {approx = true} : vector<4x8x1xf32> -> vector<4x8x1xf32>
    %22 = vector.broadcast %21 : vector<4x8x1xf32> to vector<4x8x8xf32>
    %23 = arith.mulf %18, %22 : vector<4x8x8xf32>
    %c0_21 = arith.constant 0 : index
    %c0_22 = arith.constant 0 : index
    %c0_23 = arith.constant 0 : index
    %c0_24 = arith.constant 0 : index
    %24 = vector.load %arg7[%c0_21, %c0_22, %c0_23, %c0_24] : memref<1x4x8x8xf32, #tpu.memory_space<vmem>>, vector<1x4x8x8xf32>
    %25 = vector.shape_cast %24 : vector<1x4x8x8xf32> to vector<4x8x8xf32>
    %26 = vector.shape_cast %23 : vector<4x8x8xf32> to vector<1x4x8x8xf32>
    tpu.vector_store %arg7[%c0_21, %c0_22, %c0_23, %c0_24], %26 {strides = array<i32>} : memref<1x4x8x8xf32, #tpu.memory_space<vmem>>, vector<1x4x8x8xf32>,
    "tpu.trace_start"() <{level = 10 : i32, message = "hqk,hkd->hqd"}> : () -> ()
    %cst_25 = arith.constant dense<0.000000e+00> : vector<4x8x32xf32>
    %27 = tpu.matmul %23, %5, %cst_25 {dimension_numbers = #tpu.dot_dimension_numbers<[2], [1], [1], [2], [0, 0, 0, 1, 1, 2], [0], [0]>} : vector<4x8x8xf32>, vector<4x8x32xf32>, vector<4x8x32xf32> -> vector<4x8x32xf32>
    "tpu.trace_stop"() : () -> ()
    %c0_26 = arith.constant 0 : index
    %c0_27 = arith.constant 0 : index
    %c0_28 = arith.constant 0 : index
    %c0_29 = arith.constant 0 : index
    %28 = vector.load %arg6[%c0_26, %c0_27, %c0_28, %c0_29] : memref<1x4x8x32xf32, #tpu.memory_space<vmem>>, vector<1x4x8x32xf32>
    %29 = vector.shape_cast %28 : vector<1x4x8x32xf32> to vector<4x8x32xf32>
    %30 = vector.shape_cast %27 : vector<4x8x32xf32> to vector<1x4x8x32xf32>
    tpu.vector_store %arg6[%c0_26, %c0_27, %c0_28, %c0_29], %30 {strides = array<i32>} : memref<1x4x8x32xf32, #tpu.memory_space<vmem>>, vector<1x4x8x32xf32>,
    return
  }
  func.func @transform_0(%arg0: i32) -> (i32, i32, i32, i32) {
    %c0_i32 = arith.constant 0 : i32
    %c0_i32_0 = arith.constant 0 : i32
    %c0_i32_1 = arith.constant 0 : i32
    %c0_i32_2 = arith.constant 0 : i32
    return %arg0, %c0_i32, %c0_i32_0, %c0_i32_1 : i32, i32, i32, i32
  }
  func.func @transform_1(%arg0: i32) -> (i32, i32, i32, i32) {
    %c0_i32 = arith.constant 0 : i32
    %c0_i32_0 = arith.constant 0 : i32
    %c0_i32_1 = arith.constant 0 : i32
    %c0_i32_2 = arith.constant 0 : i32
    return %arg0, %c0_i32, %c0_i32_0, %c0_i32_1 : i32, i32, i32, i32
  }
  func.func @transform_2(%arg0: i32) -> (i32, i32, i32, i32) {
    %c0_i32 = arith.constant 0 : i32
    %c0_i32_0 = arith.constant 0 : i32
    %c0_i32_1 = arith.constant 0 : i32
    %c0_i32_2 = arith.constant 0 : i32
    return %arg0, %c0_i32, %c0_i32_0, %c0_i32_1 : i32, i32, i32, i32
  }
  func.func @transform_3(%arg0: i32) -> (i32, i32, i32, i32) {
    %c0_i32 = arith.constant 0 : i32
    %c0_i32_0 = arith.constant 0 : i32
    %c0_i32_1 = arith.constant 0 : i32
    %c0_i32_2 = arith.constant 0 : i32
    %c0_i32_3 = arith.constant 0 : i32
    return %c0_i32, %c0_i32_0, %c0_i32_1, %c0_i32_2 : i32, i32, i32, i32
  }
  func.func @transform_4(%arg0: i32) -> (i32, i32, i32, i32) {
    %c0_i32 = arith.constant 0 : i32
    %c0_i32_0 = arith.constant 0 : i32
    %c0_i32_1 = arith.constant 0 : i32
    %c0_i32_2 = arith.constant 0 : i32
    return %arg0, %c0_i32, %c0_i32_0, %c0_i32_1 : i32, i32, i32, i32
  }
  func.func @transform_5(%arg0: i32) -> (i32, i32, i32, i32) {
    %c0_i32 = arith.constant 0 : i32
    %c0_i32_0 = arith.constant 0 : i32
    %c0_i32_1 = arith.constant 0 : i32
    %c0_i32_2 = arith.constant 0 : i32
    return %arg0, %c0_i32, %c0_i32_0, %c0_i32_1 : i32, i32, i32, i32
  }
  func.func @transform_6(%arg0: i32) -> (i32, i32, i32, i32) {
    %c0_i32 = arith.constant 0 : i32
    %c0_i32_0 = arith.constant 0 : i32
    %c0_i32_1 = arith.constant 0 : i32
    %c0_i32_2 = arith.constant 0 : i32
    return %arg0, %c0_i32, %c0_i32_0, %c0_i32_1 : i32, i32, i32, i32
  }
}

module attributes {stable_mosaic.version = 11 : i64} {
  func.func @_rmsnorm_kernel(%arg0: i32, %arg1: memref<16x128xf32, #tpu.memory_space<vmem>>, %arg2: memref<1x128xf32, #tpu.memory_space<vmem>>, %arg3: memref<16x128xf32, #tpu.memory_space<vmem>>) attributes {dimension_semantics = [#tpu.dimension_semantics<parallel>], iteration_bounds = array<i64: 1>, scalar_prefetch = 0 : i64, scratch_operands = 0 : i64, tpu.core_type = #tpu.core_type<tc>, window_params = [{transform_indices = @transform_0, window_bounds = array<i64: 16, 128>}, {pipeline_mode = #tpu.pipeline_mode<synchronous>, transform_indices = @transform_1, window_bounds = array<i64: 1, 128>}, {transform_indices = @transform_2, window_bounds = array<i64: 16, 128>}]} {
    %c0 = arith.constant 0 : index
    %c0_0 = arith.constant 0 : index
    %0 = vector.load %arg1[%c0, %c0_0] : memref<16x128xf32, #tpu.memory_space<vmem>>, vector<16x128xf32>
    %1 = arith.mulf %0, %0 : vector<16x128xf32>
    %cst = arith.constant dense<0.000000e+00> : vector<16xf32>
    %2 = vector.multi_reduction <add>, %1, %cst [1] : vector<16x128xf32> to vector<16xf32>
    %3 = vector.shape_cast %2 : vector<16xf32> to vector<16x1xf32>
    %cst_1 = arith.constant 1.280000e+02 : f32
    %4 = vector.broadcast %cst_1 : f32 to vector<16x1xf32>
    %5 = arith.divf %3, %4 : vector<16x1xf32>
    %c0_2 = arith.constant 0 : index
    %c0_3 = arith.constant 0 : index
    %6 = vector.load %arg2[%c0_2, %c0_3] : memref<1x128xf32, #tpu.memory_space<vmem>>, vector<1x128xf32>
    %cst_4 = arith.constant 9.99999997E-7 : f32
    %7 = vector.broadcast %cst_4 : f32 to vector<16x1xf32>
    %8 = arith.addf %5, %7 : vector<16x1xf32>
    %9 = math.rsqrt %8 : vector<16x1xf32>
    %10 = vector.broadcast %9 : vector<16x1xf32> to vector<16x128xf32>
    %11 = arith.mulf %0, %10 : vector<16x128xf32>
    %12 = vector.broadcast %6 : vector<1x128xf32> to vector<16x128xf32>
    %13 = arith.mulf %12, %11 : vector<16x128xf32>
    %c0_5 = arith.constant 0 : index
    %c0_6 = arith.constant 0 : index
    %14 = vector.load %arg3[%c0_5, %c0_6] : memref<16x128xf32, #tpu.memory_space<vmem>>, vector<16x128xf32>
    tpu.vector_store %arg3[%c0_5, %c0_6], %13 {strides = array<i32>} : memref<16x128xf32, #tpu.memory_space<vmem>>, vector<16x128xf32>,
    return
  }
  func.func @transform_0(%arg0: i32) -> (i32, i32) {
    %c0_i32 = arith.constant 0 : i32
    %c0_i32_0 = arith.constant 0 : i32
    return %arg0, %c0_i32 : i32, i32
  }
  func.func @transform_1(%arg0: i32) -> (i32, i32) {
    %c0_i32 = arith.constant 0 : i32
    %c0_i32_0 = arith.constant 0 : i32
    %c0_i32_1 = arith.constant 0 : i32
    return %c0_i32, %c0_i32_0 : i32, i32
  }
  func.func @transform_2(%arg0: i32) -> (i32, i32) {
    %c0_i32 = arith.constant 0 : i32
    %c0_i32_0 = arith.constant 0 : i32
    return %arg0, %c0_i32 : i32, i32
  }
}

module attributes {stable_mosaic.version = 11 : i64} {
  func.func @_ffn_kernel(%arg0: i32, %arg1: i32, %arg2: memref<16x128xf32, #tpu.memory_space<vmem>>, %arg3: memref<1x128xf32, #tpu.memory_space<vmem>>, %arg4: memref<128x256xf32, #tpu.memory_space<vmem>>, %arg5: memref<256x128xf32, #tpu.memory_space<vmem>>, %arg6: memref<16x128xf32, #tpu.memory_space<vmem>>, %arg7: memref<16x128xf32, #tpu.memory_space<vmem>>, %arg8: memref<16x128xf32, #tpu.memory_space<vmem>>) attributes {dimension_semantics = [#tpu.dimension_semantics<parallel>, #tpu.dimension_semantics<arbitrary>], iteration_bounds = array<i64: 1, 1>, scalar_prefetch = 0 : i64, scratch_operands = 2 : i64, tpu.core_type = #tpu.core_type<tc>, window_params = [{transform_indices = @transform_0, window_bounds = array<i64: 16, 128>}, {pipeline_mode = #tpu.pipeline_mode<synchronous>, transform_indices = @transform_1, window_bounds = array<i64: 1, 128>}, {transform_indices = @transform_2, window_bounds = array<i64: 128, 256>}, {transform_indices = @transform_3, window_bounds = array<i64: 256, 128>}, {transform_indices = @transform_4, window_bounds = array<i64: 16, 128>}]} {
    %c0_i32 = arith.constant 0 : i32
    %0 = arith.cmpi eq, %arg1, %c0_i32 : i32
    %1 = arith.extui %0 : i1 to i32
    %c0_i32_0 = arith.constant 0 : i32
    %2 = arith.cmpi ne, %1, %c0_i32_0 : i32
    scf.if %2 {
      %c0_14 = arith.constant 0 : index
      %c0_15 = arith.constant 0 : index
      %16 = vector.load %arg2[%c0_14, %c0_15] : memref<16x128xf32, #tpu.memory_space<vmem>>, vector<16x128xf32>
      %17 = arith.mulf %16, %16 : vector<16x128xf32>
      %cst_16 = arith.constant dense<0.000000e+00> : vector<16xf32>
      %18 = vector.multi_reduction <add>, %17, %cst_16 [1] : vector<16x128xf32> to vector<16xf32>
      %19 = vector.shape_cast %18 : vector<16xf32> to vector<16x1xf32>
      %cst_17 = arith.constant 1.280000e+02 : f32
      %20 = vector.broadcast %cst_17 : f32 to vector<16x1xf32>
      %21 = arith.divf %19, %20 : vector<16x1xf32>
      %c0_18 = arith.constant 0 : index
      %c0_19 = arith.constant 0 : index
      %22 = vector.load %arg3[%c0_18, %c0_19] : memref<1x128xf32, #tpu.memory_space<vmem>>, vector<1x128xf32>
      %cst_20 = arith.constant 9.99999997E-7 : f32
      %23 = vector.broadcast %cst_20 : f32 to vector<16x1xf32>
      %24 = arith.addf %21, %23 : vector<16x1xf32>
      %25 = math.rsqrt %24 : vector<16x1xf32>
      %26 = vector.broadcast %25 : vector<16x1xf32> to vector<16x128xf32>
      %27 = arith.mulf %16, %26 : vector<16x128xf32>
      %28 = vector.broadcast %22 : vector<1x128xf32> to vector<16x128xf32>
      %29 = arith.mulf %28, %27 : vector<16x128xf32>
      %c0_21 = arith.constant 0 : index
      %c0_22 = arith.constant 0 : index
      %30 = vector.load %arg7[%c0_21, %c0_22] : memref<16x128xf32, #tpu.memory_space<vmem>>, vector<16x128xf32>
      tpu.vector_store %arg7[%c0_21, %c0_22], %29 {strides = array<i32>} : memref<16x128xf32, #tpu.memory_space<vmem>>, vector<16x128xf32>,
      %cst_23 = arith.constant 0.000000e+00 : f32
      %31 = vector.broadcast %cst_23 : f32 to vector<16x128xf32>
      %c0_24 = arith.constant 0 : index
      %c0_25 = arith.constant 0 : index
      %32 = vector.load %arg8[%c0_24, %c0_25] : memref<16x128xf32, #tpu.memory_space<vmem>>, vector<16x128xf32>
      tpu.vector_store %arg8[%c0_24, %c0_25], %31 {strides = array<i32>} : memref<16x128xf32, #tpu.memory_space<vmem>>, vector<16x128xf32>,
    } else {
    }
    %c0 = arith.constant 0 : index
    %c0_1 = arith.constant 0 : index
    %3 = vector.load %arg7[%c0, %c0_1] : memref<16x128xf32, #tpu.memory_space<vmem>>, vector<16x128xf32>
    %c0_2 = arith.constant 0 : index
    %c0_3 = arith.constant 0 : index
    %4 = vector.load %arg4[%c0_2, %c0_3] : memref<128x256xf32, #tpu.memory_space<vmem>>, vector<128x256xf32>
    %cst = arith.constant dense<0.000000e+00> : vector<16x256xf32>
    %5 = tpu.matmul %3, %4, %cst {dimension_numbers = #tpu.dot_dimension_numbers<[1], [0], [0], [1], [0, 0, 1, 1], [], []>} : vector<16x128xf32>, vector<128x256xf32>, vector<16x256xf32> -> vector<16x256xf32>
    %cst_4 = arith.constant 0.000000e+00 : f32
    %6 = vector.broadcast %cst_4 : f32 to vector<16x256xf32>
    %7 = arith.maximumf %5, %6 : vector<16x256xf32>
    %c0_5 = arith.constant 0 : index
    %c0_6 = arith.constant 0 : index
    %8 = vector.load %arg8[%c0_5, %c0_6] : memref<16x128xf32, #tpu.memory_space<vmem>>, vector<16x128xf32>
    %c0_7 = arith.constant 0 : index
    %c0_8 = arith.constant 0 : index
    %9 = vector.load %arg5[%c0_7, %c0_8] : memref<256x128xf32, #tpu.memory_space<vmem>>, vector<256x128xf32>
    %cst_9 = arith.constant dense<0.000000e+00> : vector<16x128xf32>
    %10 = tpu.matmul %7, %9, %cst_9 {dimension_numbers = #tpu.dot_dimension_numbers<[1], [0], [0], [1], [0, 0, 1, 1], [], []>} : vector<16x256xf32>, vector<256x128xf32>, vector<16x128xf32> -> vector<16x128xf32>
    %11 = arith.addf %8, %10 : vector<16x128xf32>
    %c0_10 = arith.constant 0 : index
    %c0_11 = arith.constant 0 : index
    %12 = vector.load %arg8[%c0_10, %c0_11] : memref<16x128xf32, #tpu.memory_space<vmem>>, vector<16x128xf32>
    tpu.vector_store %arg8[%c0_10, %c0_11], %11 {strides = array<i32>} : memref<16x128xf32, #tpu.memory_space<vmem>>, vector<16x128xf32>,
    %c0_i32_12 = arith.constant 0 : i32
    %13 = arith.cmpi eq, %arg1, %c0_i32_12 : i32
    %14 = arith.extui %13 : i1 to i32
    %c0_i32_13 = arith.constant 0 : i32
    %15 = arith.cmpi ne, %14, %c0_i32_13 : i32
    scf.if %15 {
      %c0_14 = arith.constant 0 : index
      %c0_15 = arith.constant 0 : index
      %16 = vector.load %arg8[%c0_14, %c0_15] : memref<16x128xf32, #tpu.memory_space<vmem>>, vector<16x128xf32>
      %c0_16 = arith.constant 0 : index
      %c0_17 = arith.constant 0 : index
      %17 = vector.load %arg2[%c0_16, %c0_17] : memref<16x128xf32, #tpu.memory_space<vmem>>, vector<16x128xf32>
      %18 = arith.addf %16, %17 : vector<16x128xf32>
      %c0_18 = arith.constant 0 : index
      %c0_19 = arith.constant 0 : index
      %19 = vector.load %arg6[%c0_18, %c0_19] : memref<16x128xf32, #tpu.memory_space<vmem>>, vector<16x128xf32>
      tpu.vector_store %arg6[%c0_18, %c0_19], %18 {strides = array<i32>} : memref<16x128xf32, #tpu.memory_space<vmem>>, vector<16x128xf32>,
    } else {
    }
    return
  }
  func.func @transform_0(%arg0: i32, %arg1: i32) -> (i32, i32) {
    %c0_i32 = arith.constant 0 : i32
    %c0_i32_0 = arith.constant 0 : i32
    return %arg0, %c0_i32 : i32, i32
  }
  func.func @transform_1(%arg0: i32, %arg1: i32) -> (i32, i32) {
    %c0_i32 = arith.constant 0 : i32
    %c0_i32_0 = arith.constant 0 : i32
    %c0_i32_1 = arith.constant 0 : i32
    return %c0_i32, %c0_i32_0 : i32, i32
  }
  func.func @transform_2(%arg0: i32, %arg1: i32) -> (i32, i32) {
    %c0_i32 = arith.constant 0 : i32
    %c0_i32_0 = arith.constant 0 : i32
    return %c0_i32, %arg1 : i32, i32
  }
  func.func @transform_3(%arg0: i32, %arg1: i32) -> (i32, i32) {
    %c0_i32 = arith.constant 0 : i32
    %c0_i32_0 = arith.constant 0 : i32
    return %arg1, %c0_i32 : i32, i32
  }
  func.func @transform_4(%arg0: i32, %arg1: i32) -> (i32, i32) {
    %c0_i32 = arith.constant 0 : i32
    %c0_i32_0 = arith.constant 0 : i32
    return %arg0, %c0_i32 : i32, i32
  }
}

module attributes {stable_mosaic.version = 11 : i64} {
  func.func @_fused_linear_kernel(%arg0: i32, %arg1: i32, %arg2: memref<16x128xf32, #tpu.memory_space<vmem>>, %arg3: memref<128x128xf32, #tpu.memory_space<vmem>>, %arg4: memref<16x128xf32, #tpu.memory_space<vmem>>, %arg5: memref<16x128xf32, #tpu.memory_space<vmem>>) attributes {dimension_semantics = [#tpu.dimension_semantics<parallel>, #tpu.dimension_semantics<parallel>], iteration_bounds = array<i64: 1, 1>, scalar_prefetch = 0 : i64, scratch_operands = 0 : i64, tpu.core_type = #tpu.core_type<tc>, window_params = [{transform_indices = @transform_0, window_bounds = array<i64: 16, 128>}, {transform_indices = @transform_1, window_bounds = array<i64: 128, 128>}, {transform_indices = @transform_2, window_bounds = array<i64: 16, 128>}, {transform_indices = @transform_3, window_bounds = array<i64: 16, 128>}]} {
    %c0 = arith.constant 0 : index
    %c0_0 = arith.constant 0 : index
    %0 = vector.load %arg2[%c0, %c0_0] : memref<16x128xf32, #tpu.memory_space<vmem>>, vector<16x128xf32>
    %c0_1 = arith.constant 0 : index
    %c0_2 = arith.constant 0 : index
    %1 = vector.load %arg3[%c0_1, %c0_2] : memref<128x128xf32, #tpu.memory_space<vmem>>, vector<128x128xf32>
    %cst = arith.constant dense<0.000000e+00> : vector<16x128xf32>
    %2 = tpu.matmul %0, %1, %cst {dimension_numbers = #tpu.dot_dimension_numbers<[1], [0], [0], [1], [0, 0, 1, 1], [], []>} : vector<16x128xf32>, vector<128x128xf32>, vector<16x128xf32> -> vector<16x128xf32>
    %c0_3 = arith.constant 0 : index
    %c0_4 = arith.constant 0 : index
    %3 = vector.load %arg4[%c0_3, %c0_4] : memref<16x128xf32, #tpu.memory_space<vmem>>, vector<16x128xf32>
    %4 = arith.addf %2, %3 : vector<16x128xf32>
    %c0_5 = arith.constant 0 : index
    %c0_6 = arith.constant 0 : index
    %5 = vector.load %arg5[%c0_5, %c0_6] : memref<16x128xf32, #tpu.memory_space<vmem>>, vector<16x128xf32>
    tpu.vector_store %arg5[%c0_5, %c0_6], %4 {strides = array<i32>} : memref<16x128xf32, #tpu.memory_space<vmem>>, vector<16x128xf32>,
    return
  }
  func.func @transform_0(%arg0: i32, %arg1: i32) -> (i32, i32) {
    %c0_i32 = arith.constant 0 : i32
    %c0_i32_0 = arith.constant 0 : i32
    return %arg0, %c0_i32 : i32, i32
  }
  func.func @transform_1(%arg0: i32, %arg1: i32) -> (i32, i32) {
    %c0_i32 = arith.constant 0 : i32
    %c0_i32_0 = arith.constant 0 : i32
    return %c0_i32, %arg1 : i32, i32
  }
  func.func @transform_2(%arg0: i32, %arg1: i32) -> (i32, i32) {
    %c0_i32 = arith.constant 0 : i32
    return %arg0, %arg1 : i32, i32
  }
  func.func @transform_3(%arg0: i32, %arg1: i32) -> (i32, i32) {
    %c0_i32 = arith.constant 0 : i32
    return %arg0, %arg1 : i32, i32
  }
}

module attributes {stable_mosaic.version = 11 : i64} {
  func.func @_fused_linear_kernel(%arg0: i32, %arg1: i32, %arg2: memref<16x128xf32, #tpu.memory_space<vmem>>, %arg3: memref<128x256xf32, #tpu.memory_space<vmem>>, %arg4: memref<16x256xf32, #tpu.memory_space<vmem>>) attributes {dimension_semantics = [#tpu.dimension_semantics<parallel>, #tpu.dimension_semantics<parallel>], iteration_bounds = array<i64: 1, 1>, scalar_prefetch = 0 : i64, scratch_operands = 0 : i64, tpu.core_type = #tpu.core_type<tc>, window_params = [{transform_indices = @transform_0, window_bounds = array<i64: 16, 128>}, {transform_indices = @transform_1, window_bounds = array<i64: 128, 256>}, {transform_indices = @transform_2, window_bounds = array<i64: 16, 256>}]} {
    %c0 = arith.constant 0 : index
    %c0_0 = arith.constant 0 : index
    %0 = vector.load %arg2[%c0, %c0_0] : memref<16x128xf32, #tpu.memory_space<vmem>>, vector<16x128xf32>
    %c0_1 = arith.constant 0 : index
    %c0_2 = arith.constant 0 : index
    %1 = vector.load %arg3[%c0_1, %c0_2] : memref<128x256xf32, #tpu.memory_space<vmem>>, vector<128x256xf32>
    %cst = arith.constant dense<0.000000e+00> : vector<16x256xf32>
    %2 = tpu.matmul %0, %1, %cst {dimension_numbers = #tpu.dot_dimension_numbers<[1], [0], [0], [1], [0, 0, 1, 1], [], []>} : vector<16x128xf32>, vector<128x256xf32>, vector<16x256xf32> -> vector<16x256xf32>
    %c0_3 = arith.constant 0 : index
    %c0_4 = arith.constant 0 : index
    %3 = vector.load %arg4[%c0_3, %c0_4] : memref<16x256xf32, #tpu.memory_space<vmem>>, vector<16x256xf32>
    tpu.vector_store %arg4[%c0_3, %c0_4], %2 {strides = array<i32>} : memref<16x256xf32, #tpu.memory_space<vmem>>, vector<16x256xf32>,
    return
  }
  func.func @transform_0(%arg0: i32, %arg1: i32) -> (i32, i32) {
    %c0_i32 = arith.constant 0 : i32
    %c0_i32_0 = arith.constant 0 : i32
    return %arg0, %c0_i32 : i32, i32
  }
  func.func @transform_1(%arg0: i32, %arg1: i32) -> (i32, i32) {
    %c0_i32 = arith.constant 0 : i32
    %c0_i32_0 = arith.constant 0 : i32
    return %c0_i32, %arg1 : i32, i32
  }
  func.func @transform_2(%arg0: i32, %arg1: i32) -> (i32, i32) {
    %c0_i32 = arith.constant 0 : i32
    return %arg0, %arg1 : i32, i32
  }
}

module attributes {stable_mosaic.version = 11 : i64} {
  func.func @_embed_onehot_kernel(%arg0: i32, %arg1: i32, %arg2: memref<16x1xi32, #tpu.memory_space<vmem>>, %arg3: memref<256x128xf32, #tpu.memory_space<vmem>>, %arg4: memref<16x128xf32, #tpu.memory_space<vmem>>, %arg5: memref<16x128xf32, #tpu.memory_space<vmem>>) attributes {dimension_semantics = [#tpu.dimension_semantics<parallel>, #tpu.dimension_semantics<arbitrary>], iteration_bounds = array<i64: 1, 1>, scalar_prefetch = 0 : i64, scratch_operands = 1 : i64, tpu.core_type = #tpu.core_type<tc>, window_params = [{transform_indices = @transform_0, window_bounds = array<i64: 16, 1>}, {transform_indices = @transform_1, window_bounds = array<i64: 256, 128>}, {transform_indices = @transform_2, window_bounds = array<i64: 16, 128>}]} {
    %c0_i32 = arith.constant 0 : i32
    %0 = arith.cmpi eq, %arg1, %c0_i32 : i32
    %1 = arith.extui %0 : i1 to i32
    %c0_i32_0 = arith.constant 0 : i32
    %2 = arith.cmpi ne, %1, %c0_i32_0 : i32
    scf.if %2 {
      %cst_10 = arith.constant 0.000000e+00 : f32
      %20 = vector.broadcast %cst_10 : f32 to vector<16x128xf32>
      %c0_11 = arith.constant 0 : index
      %c0_12 = arith.constant 0 : index
      %21 = vector.load %arg5[%c0_11, %c0_12] : memref<16x128xf32, #tpu.memory_space<vmem>>, vector<16x128xf32>
      tpu.vector_store %arg5[%c0_11, %c0_12], %20 {strides = array<i32>} : memref<16x128xf32, #tpu.memory_space<vmem>>, vector<16x128xf32>,
    } else {
    }
    %c0 = arith.constant 0 : index
    %c0_1 = arith.constant 0 : index
    %3 = vector.load %arg2[%c0, %c0_1] : memref<16x1xi32, #tpu.memory_space<vmem>>, vector<16x1xi32>
    %4 = tpu.iota {dimensions = array<i32: 1>} : vector<16x256xi32>
    %c256_i32 = arith.constant 256 : i32
    %5 = arith.muli %arg1, %c256_i32 : i32
    %6 = vector.broadcast %5 : i32 to vector<16x256xi32>
    %7 = arith.addi %4, %6 : vector<16x256xi32>
    %8 = vector.broadcast %3 : vector<16x1xi32> to vector<16x256xi32>
    %9 = arith.cmpi eq, %7, %8 : vector<16x256xi32>
    %10 = arith.extui %9 : vector<16x256xi1> to vector<16x256xi32>
    %11 = arith.sitofp %10 : vector<16x256xi32> to vector<16x256xf32>
    %c0_2 = arith.constant 0 : index
    %c0_3 = arith.constant 0 : index
    %12 = vector.load %arg5[%c0_2, %c0_3] : memref<16x128xf32, #tpu.memory_space<vmem>>, vector<16x128xf32>
    %c0_4 = arith.constant 0 : index
    %c0_5 = arith.constant 0 : index
    %13 = vector.load %arg3[%c0_4, %c0_5] : memref<256x128xf32, #tpu.memory_space<vmem>>, vector<256x128xf32>
    %cst = arith.constant dense<0.000000e+00> : vector<16x128xf32>
    %14 = tpu.matmul %11, %13, %cst {dimension_numbers = #tpu.dot_dimension_numbers<[1], [0], [0], [1], [0, 0, 1, 1], [], []>} : vector<16x256xf32>, vector<256x128xf32>, vector<16x128xf32> -> vector<16x128xf32>
    %15 = arith.addf %12, %14 : vector<16x128xf32>
    %c0_6 = arith.constant 0 : index
    %c0_7 = arith.constant 0 : index
    %16 = vector.load %arg5[%c0_6, %c0_7] : memref<16x128xf32, #tpu.memory_space<vmem>>, vector<16x128xf32>
    tpu.vector_store %arg5[%c0_6, %c0_7], %15 {strides = array<i32>} : memref<16x128xf32, #tpu.memory_space<vmem>>, vector<16x128xf32>,
    %c0_i32_8 = arith.constant 0 : i32
    %17 = arith.cmpi eq, %arg1, %c0_i32_8 : i32
    %18 = arith.extui %17 : i1 to i32
    %c0_i32_9 = arith.constant 0 : i32
    %19 = arith.cmpi ne, %18, %c0_i32_9 : i32
    scf.if %19 {
      %c0_10 = arith.constant 0 : index
      %c0_11 = arith.constant 0 : index
      %20 = vector.load %arg5[%c0_10, %c0_11] : memref<16x128xf32, #tpu.memory_space<vmem>>, vector<16x128xf32>
      %c0_12 = arith.constant 0 : index
      %c0_13 = arith.constant 0 : index
      %21 = vector.load %arg4[%c0_12, %c0_13] : memref<16x128xf32, #tpu.memory_space<vmem>>, vector<16x128xf32>
      tpu.vector_store %arg4[%c0_12, %c0_13], %20 {strides = array<i32>} : memref<16x128xf32, #tpu.memory_space<vmem>>, vector<16x128xf32>,
    } else {
    }
    return
  }
  func.func @transform_0(%arg0: i32, %arg1: i32) -> (i32, i32) {
    %c0_i32 = arith.constant 0 : i32
    %c0_i32_0 = arith.constant 0 : i32
    return %arg0, %c0_i32 : i32, i32
  }
  func.func @transform_1(%arg0: i32, %arg1: i32) -> (i32, i32) {
    %c0_i32 = arith.constant 0 : i32
    %c0_i32_0 = arith.constant 0 : i32
    return %arg1, %c0_i32 : i32, i32
  }
  func.func @transform_2(%arg0: i32, %arg1: i32) -> (i32, i32) {
    %c0_i32 = arith.constant 0 : i32
    %c0_i32_0 = arith.constant 0 : i32
    return %arg0, %c0_i32 : i32, i32
  }
}

module attributes {stable_mosaic.version = 11 : i64} {
  func.func @_fused_linear_kernel(%arg0: i32, %arg1: i32, %arg2: memref<16x128xf32, #tpu.memory_space<vmem>>, %arg3: memref<1x128xf32, #tpu.memory_space<vmem>>, %arg4: memref<128x128xf32, #tpu.memory_space<vmem>>, %arg5: memref<16x128xf32, #tpu.memory_space<vmem>>) attributes {dimension_semantics = [#tpu.dimension_semantics<parallel>, #tpu.dimension_semantics<parallel>], iteration_bounds = array<i64: 1, 1>, scalar_prefetch = 0 : i64, scratch_operands = 0 : i64, tpu.core_type = #tpu.core_type<tc>, window_params = [{transform_indices = @transform_0, window_bounds = array<i64: 16, 128>}, {pipeline_mode = #tpu.pipeline_mode<synchronous>, transform_indices = @transform_1, window_bounds = array<i64: 1, 128>}, {transform_indices = @transform_2, window_bounds = array<i64: 128, 128>}, {transform_indices = @transform_3, window_bounds = array<i64: 16, 128>}]} {
    %c0 = arith.constant 0 : index
    %c0_0 = arith.constant 0 : index
    %0 = vector.load %arg2[%c0, %c0_0] : memref<16x128xf32, #tpu.memory_space<vmem>>, vector<16x128xf32>
    %1 = arith.mulf %0, %0 : vector<16x128xf32>
    %cst = arith.constant dense<0.000000e+00> : vector<16xf32>
    %2 = vector.multi_reduction <add>, %1, %cst [1] : vector<16x128xf32> to vector<16xf32>
    %3 = vector.shape_cast %2 : vector<16xf32> to vector<16x1xf32>
    %cst_1 = arith.constant 1.280000e+02 : f32
    %4 = vector.broadcast %cst_1 : f32 to vector<16x1xf32>
    %5 = arith.divf %3, %4 : vector<16x1xf32>
    %c0_2 = arith.constant 0 : index
    %c0_3 = arith.constant 0 : index
    %6 = vector.load %arg3[%c0_2, %c0_3] : memref<1x128xf32, #tpu.memory_space<vmem>>, vector<1x128xf32>
    %cst_4 = arith.constant 9.99999997E-7 : f32
    %7 = vector.broadcast %cst_4 : f32 to vector<16x1xf32>
    %8 = arith.addf %5, %7 : vector<16x1xf32>
    %9 = math.rsqrt %8 : vector<16x1xf32>
    %10 = vector.broadcast %9 : vector<16x1xf32> to vector<16x128xf32>
    %11 = arith.mulf %0, %10 : vector<16x128xf32>
    %12 = vector.broadcast %6 : vector<1x128xf32> to vector<16x128xf32>
    %13 = arith.mulf %12, %11 : vector<16x128xf32>
    %c0_5 = arith.constant 0 : index
    %c0_6 = arith.constant 0 : index
    %14 = vector.load %arg4[%c0_5, %c0_6] : memref<128x128xf32, #tpu.memory_space<vmem>>, vector<128x128xf32>
    %cst_7 = arith.constant dense<0.000000e+00> : vector<16x128xf32>
    %15 = tpu.matmul %13, %14, %cst_7 {dimension_numbers = #tpu.dot_dimension_numbers<[1], [0], [0], [1], [0, 0, 1, 1], [], []>} : vector<16x128xf32>, vector<128x128xf32>, vector<16x128xf32> -> vector<16x128xf32>
    %c0_8 = arith.constant 0 : index
    %c0_9 = arith.constant 0 : index
    %16 = vector.load %arg5[%c0_8, %c0_9] : memref<16x128xf32, #tpu.memory_space<vmem>>, vector<16x128xf32>
    tpu.vector_store %arg5[%c0_8, %c0_9], %15 {strides = array<i32>} : memref<16x128xf32, #tpu.memory_space<vmem>>, vector<16x128xf32>,
    return
  }
  func.func @transform_0(%arg0: i32, %arg1: i32) -> (i32, i32) {
    %c0_i32 = arith.constant 0 : i32
    %c0_i32_0 = arith.constant 0 : i32
    return %arg0, %c0_i32 : i32, i32
  }
  func.func @transform_1(%arg0: i32, %arg1: i32) -> (i32, i32) {
    %c0_i32 = arith.constant 0 : i32
    %c0_i32_0 = arith.constant 0 : i32
    %c0_i32_1 = arith.constant 0 : i32
    return %c0_i32, %c0_i32_0 : i32, i32
  }
  func.func @transform_2(%arg0: i32, %arg1: i32) -> (i32, i32) {
    %c0_i32 = arith.constant 0 : i32
    %c0_i32_0 = arith.constant 0 : i32
    return %c0_i32, %arg1 : i32, i32
  }
  func.func @transform_3(%arg0: i32, %arg1: i32) -> (i32, i32) {
    %c0_i32 = arith.constant 0 : i32
    return %arg0, %arg1 : i32, i32
  }
}

module attributes {stable_mosaic.version = 11 : i64} {
  func.func @_attn_kernel(%arg0: i32, %arg1: memref<1x4x8x32xf32, #tpu.memory_space<vmem>>, %arg2: memref<1x4x8x32xf32, #tpu.memory_space<vmem>>, %arg3: memref<1x4x8x32xf32, #tpu.memory_space<vmem>>, %arg4: memref<1x4x8x8xf32, #tpu.memory_space<vmem>>, %arg5: memref<1x1x8x8xf32, #tpu.memory_space<vmem>>, %arg6: memref<1x4x8x32xf32, #tpu.memory_space<vmem>>, %arg7: memref<1x4x8x8xf32, #tpu.memory_space<vmem>>) attributes {dimension_semantics = [#tpu.dimension_semantics<parallel>], iteration_bounds = array<i64: 2>, scalar_prefetch = 0 : i64, scratch_operands = 0 : i64, tpu.core_type = #tpu.core_type<tc>, window_params = [{transform_indices = @transform_0, window_bounds = array<i64: 1, 4, 8, 32>}, {transform_indices = @transform_1, window_bounds = array<i64: 1, 4, 8, 32>}, {transform_indices = @transform_2, window_bounds = array<i64: 1, 4, 8, 32>}, {pipeline_mode = #tpu.pipeline_mode<synchronous>, transform_indices = @transform_3, window_bounds = array<i64: 1, 4, 8, 8>}, {transform_indices = @transform_4, window_bounds = array<i64: 1, 1, 8, 8>}, {transform_indices = @transform_5, window_bounds = array<i64: 1, 4, 8, 32>}, {transform_indices = @transform_6, window_bounds = array<i64: 1, 4, 8, 8>}]} {
    %c0 = arith.constant 0 : index
    %c0_0 = arith.constant 0 : index
    %c0_1 = arith.constant 0 : index
    %c0_2 = arith.constant 0 : index
    %0 = vector.load %arg1[%c0, %c0_0, %c0_1, %c0_2] : memref<1x4x8x32xf32, #tpu.memory_space<vmem>>, vector<1x4x8x32xf32>
    %1 = vector.shape_cast %0 : vector<1x4x8x32xf32> to vector<4x8x32xf32>
    %c0_3 = arith.constant 0 : index
    %c0_4 = arith.constant 0 : index
    %c0_5 = arith.constant 0 : index
    %c0_6 = arith.constant 0 : index
    %2 = vector.load %arg2[%c0_3, %c0_4, %c0_5, %c0_6] : memref<1x4x8x32xf32, #tpu.memory_space<vmem>>, vector<1x4x8x32xf32>
    %3 = vector.shape_cast %2 : vector<1x4x8x32xf32> to vector<4x8x32xf32>
    %c0_7 = arith.constant 0 : index
    %c0_8 = arith.constant 0 : index
    %c0_9 = arith.constant 0 : index
    %c0_10 = arith.constant 0 : index
    %4 = vector.load %arg3[%c0_7, %c0_8, %c0_9, %c0_10] : memref<1x4x8x32xf32, #tpu.memory_space<vmem>>, vector<1x4x8x32xf32>
    %5 = vector.shape_cast %4 : vector<1x4x8x32xf32> to vector<4x8x32xf32>
    "tpu.trace_start"() <{level = 10 : i32, message = "hqd,hkd->hqk"}> : () -> ()
    %cst = arith.constant dense<0.000000e+00> : vector<4x8x8xf32>
    %6 = tpu.matmul %1, %3, %cst {dimension_numbers = #tpu.dot_dimension_numbers<[2], [2], [1], [1], [0, 0, 0, 1, 1, 1], [0], [0]>} : vector<4x8x32xf32>, vector<4x8x32xf32>, vector<4x8x8xf32> -> vector<4x8x8xf32>
    "tpu.trace_stop"() : () -> ()
    %c0_11 = arith.constant 0 : index
    %c0_12 = arith.constant 0 : index
    %c0_13 = arith.constant 0 : index
    %c0_14 = arith.constant 0 : index
    %7 = vector.load %arg4[%c0_11, %c0_12, %c0_13, %c0_14] : memref<1x4x8x8xf32, #tpu.memory_space<vmem>>, vector<1x4x8x8xf32>
    %8 = vector.shape_cast %7 : vector<1x4x8x8xf32> to vector<4x8x8xf32>
    %9 = arith.addf %6, %8 : vector<4x8x8xf32>
    %c0_15 = arith.constant 0 : index
    %c0_16 = arith.constant 0 : index
    %c0_17 = arith.constant 0 : index
    %c0_18 = arith.constant 0 : index
    %10 = vector.load %arg5[%c0_15, %c0_16, %c0_17, %c0_18] : memref<1x1x8x8xf32, #tpu.memory_space<vmem>>, vector<1x1x8x8xf32>
    %11 = vector.shape_cast %10 : vector<1x1x8x8xf32> to vector<1x8x8xf32>
    %12 = vector.broadcast %11 : vector<1x8x8xf32> to vector<4x8x8xf32>
    %13 = arith.addf %9, %12 : vector<4x8x8xf32>
    %cst_19 = arith.constant dense<0xFF800000> : vector<4x8xf32>
    %14 = vector.multi_reduction <maximumf>, %13, %cst_19 [2] : vector<4x8x8xf32> to vector<4x8xf32>
    %15 = vector.shape_cast %14 : vector<4x8xf32> to vector<4x8x1xf32>
    %16 = vector.broadcast %15 : vector<4x8x1xf32> to vector<4x8x8xf32>
    %17 = arith.subf %13, %16 : vector<4x8x8xf32>
    %18 = math.exp %17 : vector<4x8x8xf32>
    %cst_20 = arith.constant dense<0.000000e+00> : vector<4x8xf32>
    %19 = vector.multi_reduction <add>, %18, %cst_20 [2] : vector<4x8x8xf32> to vector<4x8xf32>
    %20 = vector.shape_cast %19 : vector<4x8xf32> to vector<4x8x1xf32>
    %21 = tpu.reciprocal %20 {approx = true} : vector<4x8x1xf32> -> vector<4x8x1xf32>
    %22 = vector.broadcast %21 : vector<4x8x1xf32> to vector<4x8x8xf32>
    %23 = arith.mulf %18, %22 : vector<4x8x8xf32>
    %c0_21 = arith.constant 0 : index
    %c0_22 = arith.constant 0 : index
    %c0_23 = arith.constant 0 : index
    %c0_24 = arith.constant 0 : index
    %24 = vector.load %arg7[%c0_21, %c0_22, %c0_23, %c0_24] : memref<1x4x8x8xf32, #tpu.memory_space<vmem>>, vector<1x4x8x8xf32>
    %25 = vector.shape_cast %24 : vector<1x4x8x8xf32> to vector<4x8x8xf32>
    %26 = vector.shape_cast %23 : vector<4x8x8xf32> to vector<1x4x8x8xf32>
    tpu.vector_store %arg7[%c0_21, %c0_22, %c0_23, %c0_24], %26 {strides = array<i32>} : memref<1x4x8x8xf32, #tpu.memory_space<vmem>>, vector<1x4x8x8xf32>,
    "tpu.trace_start"() <{level = 10 : i32, message = "hqk,hkd->hqd"}> : () -> ()
    %cst_25 = arith.constant dense<0.000000e+00> : vector<4x8x32xf32>
    %27 = tpu.matmul %23, %5, %cst_25 {dimension_numbers = #tpu.dot_dimension_numbers<[2], [1], [1], [2], [0, 0, 0, 1, 1, 2], [0], [0]>} : vector<4x8x8xf32>, vector<4x8x32xf32>, vector<4x8x32xf32> -> vector<4x8x32xf32>
    "tpu.trace_stop"() : () -> ()
    %c0_26 = arith.constant 0 : index
    %c0_27 = arith.constant 0 : index
    %c0_28 = arith.constant 0 : index
    %c0_29 = arith.constant 0 : index
    %28 = vector.load %arg6[%c0_26, %c0_27, %c0_28, %c0_29] : memref<1x4x8x32xf32, #tpu.memory_space<vmem>>, vector<1x4x8x32xf32>
    %29 = vector.shape_cast %28 : vector<1x4x8x32xf32> to vector<4x8x32xf32>
    %30 = vector.shape_cast %27 : vector<4x8x32xf32> to vector<1x4x8x32xf32>
    tpu.vector_store %arg6[%c0_26, %c0_27, %c0_28, %c0_29], %30 {strides = array<i32>} : memref<1x4x8x32xf32, #tpu.memory_space<vmem>>, vector<1x4x8x32xf32>,
    return
  }
  func.func @transform_0(%arg0: i32) -> (i32, i32, i32, i32) {
    %c0_i32 = arith.constant 0 : i32
    %c0_i32_0 = arith.constant 0 : i32
    %c0_i32_1 = arith.constant 0 : i32
    %c0_i32_2 = arith.constant 0 : i32
    return %arg0, %c0_i32, %c0_i32_0, %c0_i32_1 : i32, i32, i32, i32
  }
  func.func @transform_1(%arg0: i32) -> (i32, i32, i32, i32) {
    %c0_i32 = arith.constant 0 : i32
    %c0_i32_0 = arith.constant 0 : i32
    %c0_i32_1 = arith.constant 0 : i32
    %c0_i32_2 = arith.constant 0 : i32
    return %arg0, %c0_i32, %c0_i32_0, %c0_i32_1 : i32, i32, i32, i32
  }
  func.func @transform_2(%arg0: i32) -> (i32, i32, i32, i32) {
    %c0_i32 = arith.constant 0 : i32
    %c0_i32_0 = arith.constant 0 : i32
    %c0_i32_1 = arith.constant 0 : i32
    %c0_i32_2 = arith.constant 0 : i32
    return %arg0, %c0_i32, %c0_i32_0, %c0_i32_1 : i32, i32, i32, i32
  }
  func.func @transform_3(%arg0: i32) -> (i32, i32, i32, i32) {
    %c0_i32 = arith.constant 0 : i32
    %c0_i32_0 = arith.constant 0 : i32
    %c0_i32_1 = arith.constant 0 : i32
    %c0_i32_2 = arith.constant 0 : i32
    %c0_i32_3 = arith.constant 0 : i32
    return %c0_i32, %c0_i32_0, %c0_i32_1, %c0_i32_2 : i32, i32, i32, i32
  }
  func.func @transform_4(%arg0: i32) -> (i32, i32, i32, i32) {
    %c0_i32 = arith.constant 0 : i32
    %c0_i32_0 = arith.constant 0 : i32
    %c0_i32_1 = arith.constant 0 : i32
    %c0_i32_2 = arith.constant 0 : i32
    return %arg0, %c0_i32, %c0_i32_0, %c0_i32_1 : i32, i32, i32, i32
  }
  func.func @transform_5(%arg0: i32) -> (i32, i32, i32, i32) {
    %c0_i32 = arith.constant 0 : i32
    %c0_i32_0 = arith.constant 0 : i32
    %c0_i32_1 = arith.constant 0 : i32
    %c0_i32_2 = arith.constant 0 : i32
    return %arg0, %c0_i32, %c0_i32_0, %c0_i32_1 : i32, i32, i32, i32
  }
  func.func @transform_6(%arg0: i32) -> (i32, i32, i32, i32) {
    %c0_i32 = arith.constant 0 : i32
    %c0_i32_0 = arith.constant 0 : i32
    %c0_i32_1 = arith.constant 0 : i32
    %c0_i32_2 = arith.constant 0 : i32
    return %arg0, %c0_i32, %c0_i32_0, %c0_i32_1 : i32, i32, i32, i32
  }
}

module attributes {stable_mosaic.version = 11 : i64} {
  func.func @_ffn_kernel(%arg0: i32, %arg1: i32, %arg2: memref<16x128xf32, #tpu.memory_space<vmem>>, %arg3: memref<1x128xf32, #tpu.memory_space<vmem>>, %arg4: memref<128x256xf32, #tpu.memory_space<vmem>>, %arg5: memref<256x128xf32, #tpu.memory_space<vmem>>, %arg6: memref<16x128xf32, #tpu.memory_space<vmem>>, %arg7: memref<16x128xf32, #tpu.memory_space<vmem>>, %arg8: memref<16x128xf32, #tpu.memory_space<vmem>>) attributes {dimension_semantics = [#tpu.dimension_semantics<parallel>, #tpu.dimension_semantics<arbitrary>], iteration_bounds = array<i64: 1, 1>, scalar_prefetch = 0 : i64, scratch_operands = 2 : i64, tpu.core_type = #tpu.core_type<tc>, window_params = [{transform_indices = @transform_0, window_bounds = array<i64: 16, 128>}, {pipeline_mode = #tpu.pipeline_mode<synchronous>, transform_indices = @transform_1, window_bounds = array<i64: 1, 128>}, {transform_indices = @transform_2, window_bounds = array<i64: 128, 256>}, {transform_indices = @transform_3, window_bounds = array<i64: 256, 128>}, {transform_indices = @transform_4, window_bounds = array<i64: 16, 128>}]} {
    %c0_i32 = arith.constant 0 : i32
    %0 = arith.cmpi eq, %arg1, %c0_i32 : i32
    %1 = arith.extui %0 : i1 to i32
    %c0_i32_0 = arith.constant 0 : i32
    %2 = arith.cmpi ne, %1, %c0_i32_0 : i32
    scf.if %2 {
      %c0_14 = arith.constant 0 : index
      %c0_15 = arith.constant 0 : index
      %16 = vector.load %arg2[%c0_14, %c0_15] : memref<16x128xf32, #tpu.memory_space<vmem>>, vector<16x128xf32>
      %c0_16 = arith.constant 0 : index
      %c0_17 = arith.constant 0 : index
      %17 = vector.load %arg7[%c0_16, %c0_17] : memref<16x128xf32, #tpu.memory_space<vmem>>, vector<16x128xf32>
      tpu.vector_store %arg7[%c0_16, %c0_17], %16 {strides = array<i32>} : memref<16x128xf32, #tpu.memory_space<vmem>>, vector<16x128xf32>,
      %cst_18 = arith.constant 0.000000e+00 : f32
      %18 = vector.broadcast %cst_18 : f32 to vector<16x128xf32>
      %c0_19 = arith.constant 0 : index
      %c0_20 = arith.constant 0 : index
      %19 = vector.load %arg8[%c0_19, %c0_20] : memref<16x128xf32, #tpu.memory_space<vmem>>, vector<16x128xf32>
      tpu.vector_store %arg8[%c0_19, %c0_20], %18 {strides = array<i32>} : memref<16x128xf32, #tpu.memory_space<vmem>>, vector<16x128xf32>,
    } else {
    }
    %c0 = arith.constant 0 : index
    %c0_1 = arith.constant 0 : index
    %3 = vector.load %arg7[%c0, %c0_1] : memref<16x128xf32, #tpu.memory_space<vmem>>, vector<16x128xf32>
    %c0_2 = arith.constant 0 : index
    %c0_3 = arith.constant 0 : index
    %4 = vector.load %arg4[%c0_2, %c0_3] : memref<128x256xf32, #tpu.memory_space<vmem>>, vector<128x256xf32>
    %cst = arith.constant dense<0.000000e+00> : vector<16x256xf32>
    %5 = tpu.matmul %3, %4, %cst {dimension_numbers = #tpu.dot_dimension_numbers<[1], [0], [0], [1], [0, 0, 1, 1], [], []>} : vector<16x128xf32>, vector<128x256xf32>, vector<16x256xf32> -> vector<16x256xf32>
    %cst_4 = arith.constant 0.000000e+00 : f32
    %6 = vector.broadcast %cst_4 : f32 to vector<16x256xf32>
    %7 = arith.maximumf %5, %6 : vector<16x256xf32>
    %c0_5 = arith.constant 0 : index
    %c0_6 = arith.constant 0 : index
    %8 = vector.load %arg8[%c0_5, %c0_6] : memref<16x128xf32, #tpu.memory_space<vmem>>, vector<16x128xf32>
    %c0_7 = arith.constant 0 : index
    %c0_8 = arith.constant 0 : index
    %9 = vector.load %arg5[%c0_7, %c0_8] : memref<256x128xf32, #tpu.memory_space<vmem>>, vector<256x128xf32>
    %cst_9 = arith.constant dense<0.000000e+00> : vector<16x128xf32>
    %10 = tpu.matmul %7, %9, %cst_9 {dimension_numbers = #tpu.dot_dimension_numbers<[1], [0], [0], [1], [0, 0, 1, 1], [], []>} : vector<16x256xf32>, vector<256x128xf32>, vector<16x128xf32> -> vector<16x128xf32>
    %11 = arith.addf %8, %10 : vector<16x128xf32>
    %c0_10 = arith.constant 0 : index
    %c0_11 = arith.constant 0 : index
    %12 = vector.load %arg8[%c0_10, %c0_11] : memref<16x128xf32, #tpu.memory_space<vmem>>, vector<16x128xf32>
    tpu.vector_store %arg8[%c0_10, %c0_11], %11 {strides = array<i32>} : memref<16x128xf32, #tpu.memory_space<vmem>>, vector<16x128xf32>,
    %c0_i32_12 = arith.constant 0 : i32
    %13 = arith.cmpi eq, %arg1, %c0_i32_12 : i32
    %14 = arith.extui %13 : i1 to i32
    %c0_i32_13 = arith.constant 0 : i32
    %15 = arith.cmpi ne, %14, %c0_i32_13 : i32
    scf.if %15 {
      %c0_14 = arith.constant 0 : index
      %c0_15 = arith.constant 0 : index
      %16 = vector.load %arg8[%c0_14, %c0_15] : memref<16x128xf32, #tpu.memory_space<vmem>>, vector<16x128xf32>
      %c0_16 = arith.constant 0 : index
      %c0_17 = arith.constant 0 : index
      %17 = vector.load %arg2[%c0_16, %c0_17] : memref<16x128xf32, #tpu.memory_space<vmem>>, vector<16x128xf32>
      %18 = arith.addf %16, %17 : vector<16x128xf32>
      %c0_18 = arith.constant 0 : index
      %c0_19 = arith.constant 0 : index
      %19 = vector.load %arg6[%c0_18, %c0_19] : memref<16x128xf32, #tpu.memory_space<vmem>>, vector<16x128xf32>
      tpu.vector_store %arg6[%c0_18, %c0_19], %18 {strides = array<i32>} : memref<16x128xf32, #tpu.memory_space<vmem>>, vector<16x128xf32>,
    } else {
    }
    return
  }
  func.func @transform_0(%arg0: i32, %arg1: i32) -> (i32, i32) {
    %c0_i32 = arith.constant 0 : i32
    %c0_i32_0 = arith.constant 0 : i32
    return %arg0, %c0_i32 : i32, i32
  }
  func.func @transform_1(%arg0: i32, %arg1: i32) -> (i32, i32) {
    %c0_i32 = arith.constant 0 : i32
    %c0_i32_0 = arith.constant 0 : i32
    %c0_i32_1 = arith.constant 0 : i32
    return %c0_i32, %c0_i32_0 : i32, i32
  }
  func.func @transform_2(%arg0: i32, %arg1: i32) -> (i32, i32) {
    %c0_i32 = arith.constant 0 : i32
    %c0_i32_0 = arith.constant 0 : i32
    return %c0_i32, %arg1 : i32, i32
  }
  func.func @transform_3(%arg0: i32, %arg1: i32) -> (i32, i32) {
    %c0_i32 = arith.constant 0 : i32
    %c0_i32_0 = arith.constant 0 : i32
    return %arg1, %c0_i32 : i32, i32
  }
  func.func @transform_4(%arg0: i32, %arg1: i32) -> (i32, i32) {
    %c0_i32 = arith.constant 0 : i32
    %c0_i32_0 = arith.constant 0 : i32
    return %arg0, %c0_i32 : i32, i32
  }
}

module attributes {stable_mosaic.version = 11 : i64} {
  func.func @_fused_linear_kernel(%arg0: i32, %arg1: i32, %arg2: memref<16x128xf32, #tpu.memory_space<vmem>>, %arg3: memref<1x128xf32, #tpu.memory_space<vmem>>, %arg4: memref<128x256xf32, #tpu.memory_space<vmem>>, %arg5: memref<1x256xf32, #tpu.memory_space<vmem>>, %arg6: memref<16x256xf32, #tpu.memory_space<vmem>>) attributes {dimension_semantics = [#tpu.dimension_semantics<parallel>, #tpu.dimension_semantics<parallel>], iteration_bounds = array<i64: 1, 1>, scalar_prefetch = 0 : i64, scratch_operands = 0 : i64, tpu.core_type = #tpu.core_type<tc>, window_params = [{transform_indices = @transform_0, window_bounds = array<i64: 16, 128>}, {pipeline_mode = #tpu.pipeline_mode<synchronous>, transform_indices = @transform_1, window_bounds = array<i64: 1, 128>}, {transform_indices = @transform_2, window_bounds = array<i64: 128, 256>}, {transform_indices = @transform_3, window_bounds = array<i64: 1, 256>}, {transform_indices = @transform_4, window_bounds = array<i64: 16, 256>}]} {
    %c0 = arith.constant 0 : index
    %c0_0 = arith.constant 0 : index
    %0 = vector.load %arg2[%c0, %c0_0] : memref<16x128xf32, #tpu.memory_space<vmem>>, vector<16x128xf32>
    %1 = arith.mulf %0, %0 : vector<16x128xf32>
    %cst = arith.constant dense<0.000000e+00> : vector<16xf32>
    %2 = vector.multi_reduction <add>, %1, %cst [1] : vector<16x128xf32> to vector<16xf32>
    %3 = vector.shape_cast %2 : vector<16xf32> to vector<16x1xf32>
    %cst_1 = arith.constant 1.280000e+02 : f32
    %4 = vector.broadcast %cst_1 : f32 to vector<16x1xf32>
    %5 = arith.divf %3, %4 : vector<16x1xf32>
    %c0_2 = arith.constant 0 : index
    %c0_3 = arith.constant 0 : index
    %6 = vector.load %arg3[%c0_2, %c0_3] : memref<1x128xf32, #tpu.memory_space<vmem>>, vector<1x128xf32>
    %cst_4 = arith.constant 9.99999997E-7 : f32
    %7 = vector.broadcast %cst_4 : f32 to vector<16x1xf32>
    %8 = arith.addf %5, %7 : vector<16x1xf32>
    %9 = math.rsqrt %8 : vector<16x1xf32>
    %10 = vector.broadcast %9 : vector<16x1xf32> to vector<16x128xf32>
    %11 = arith.mulf %0, %10 : vector<16x128xf32>
    %12 = vector.broadcast %6 : vector<1x128xf32> to vector<16x128xf32>
    %13 = arith.mulf %12, %11 : vector<16x128xf32>
    %c0_5 = arith.constant 0 : index
    %c0_6 = arith.constant 0 : index
    %14 = vector.load %arg4[%c0_5, %c0_6] : memref<128x256xf32, #tpu.memory_space<vmem>>, vector<128x256xf32>
    %cst_7 = arith.constant dense<0.000000e+00> : vector<16x256xf32>
    %15 = tpu.matmul %13, %14, %cst_7 {dimension_numbers = #tpu.dot_dimension_numbers<[1], [0], [0], [1], [0, 0, 1, 1], [], []>} : vector<16x128xf32>, vector<128x256xf32>, vector<16x256xf32> -> vector<16x256xf32>
    %c0_8 = arith.constant 0 : index
    %c0_9 = arith.constant 0 : index
    %16 = vector.load %arg5[%c0_8, %c0_9] : memref<1x256xf32, #tpu.memory_space<vmem>>, vector<1x256xf32>
    %17 = vector.broadcast %16 : vector<1x256xf32> to vector<16x256xf32>
    %18 = arith.addf %15, %17 : vector<16x256xf32>
    %c0_10 = arith.constant 0 : index
    %c0_11 = arith.constant 0 : index
    %19 = vector.load %arg6[%c0_10, %c0_11] : memref<16x256xf32, #tpu.memory_space<vmem>>, vector<16x256xf32>
    tpu.vector_store %arg6[%c0_10, %c0_11], %18 {strides = array<i32>} : memref<16x256xf32, #tpu.memory_space<vmem>>, vector<16x256xf32>,
    return
  }
  func.func @transform_0(%arg0: i32, %arg1: i32) -> (i32, i32) {
    %c0_i32 = arith.constant 0 : i32
    %c0_i32_0 = arith.constant 0 : i32
    return %arg0, %c0_i32 : i32, i32
  }
  func.func @transform_1(%arg0: i32, %arg1: i32) -> (i32, i32) {
    %c0_i32 = arith.constant 0 : i32
    %c0_i32_0 = arith.constant 0 : i32
    %c0_i32_1 = arith.constant 0 : i32
    return %c0_i32, %c0_i32_0 : i32, i32
  }
  func.func @transform_2(%arg0: i32, %arg1: i32) -> (i32, i32) {
    %c0_i32 = arith.constant 0 : i32
    %c0_i32_0 = arith.constant 0 : i32
    return %c0_i32, %arg1 : i32, i32
  }
  func.func @transform_3(%arg0: i32, %arg1: i32) -> (i32, i32) {
    %c0_i32 = arith.constant 0 : i32
    %c0_i32_0 = arith.constant 0 : i32
    return %c0_i32, %arg1 : i32, i32
  }
  func.func @transform_4(%arg0: i32, %arg1: i32) -> (i32, i32) {
    %c0_i32 = arith.constant 0 : i32
    return %arg0, %arg1 : i32, i32
  }
}

</mosaic_0001>

<llo_original>
// kernel: _lambda_.28
$region0: #{_lambda_.28}
  #allocation0 [shape = 'u32[]', space=smem, size = 0x4, offset = 0x4, fixed_abs, tag = 'smem constant byte address 0x4 - core index']
  #allocation1 [shape = 'u32[144,128]{1,0:T(1,128)}', space=vmem, size = 0x12000, scoped, tag = 'internal scratch']
  #allocation2 [shape = 'f32[16,128]{1,0:T(8,128)}', space=vmem, size = 0x2000, scoped, tag = 'scratch operand']
  %s0 = inlined_call_operand.vmem [shape: s32[16,1], index: 0, kind: input, shape index: {}]
  %s1 = inlined_call_operand.hbm [shape: f32[256,128], index: 1, kind: input, shape index: {}]
  %s2 = inlined_call_operand.vmem [shape: f32[16,128], index: 2, kind: output, shape index: {}]
  %s3 = sld [smem:[#allocation0]]
  $region30: #{_lambda_.28} parent=0
    _
  %s5 = ssub.s32 1, %s3
  %s6 = scalar_select 0, %s5, %s3
  $region1: #{_lambda_.28} parent=0
    #allocation3 [shape = 'u8[131072]{0}', space=vmem, size = 0x20000, scoped, tag = 'input window, operand 1, single buffered']
    #allocation4 [shape = 's32[1]{0}', space=sflag, size = 0x4, scoped, tag = 'scoped memory for _lambda_.28']
    %7 = vsyncpa [#allocation4], 0
    // Predicated region
    $region2: #{_lambda_.28} parent=1 // pred_check
      _
    $region3: #{_lambda_.28} parent=1 // pred_check_branch
      %9 = sbr.rel (0) target = $region5
    $region4: #{_lambda_.28} parent=1 // pred_region
      _
    $region5: #{_lambda_.28} parent=1 // pred_fallthru
      _
    // Predicated region
    $region6: #{_lambda_.28} parent=1 // pred_check
      _
    $region7: #{_lambda_.28} parent=1 // pred_check_branch
      %11 = sbr.rel (0) target = $region9
    $region8: #{_lambda_.28} parent=1 // pred_region
      %s13 = ssub.s32 4096, 4096
      %14 = vsyncadd [#allocation4], %s13
      %s15 = sshll.u32 [#allocation3], 4
      %s16 = int_to_ptr.vmem [resolvable:$true] %s15
      %21 = dma.hbm_to_vmem [thread:$0]  %s1, 4096, %s16, [#allocation4], 128, 128, 8
    $region9: #{_lambda_.28} parent=1 // pred_fallthru
      _
    // Predicated region
    $region10: #{_lambda_.28} parent=1 // pred_check
      _
    $region11: #{_lambda_.28} parent=1 // pred_check_branch
      %23 = sbr.rel (0) target = $region13
    $region12: #{_lambda_.28} parent=1 // pred_region
      %24 = dma.done [#allocation4], 4096
    $region13: #{_lambda_.28} parent=1 // pred_fallthru
      _
    %p25 = scmp.eq.s32.totalorder 0, 0
    // Predicated region
    $region14: #{_lambda_.28} parent=1 // pred_check
      %p26 = pneg %p25
    $region15: #{_lambda_.28} parent=1 // pred_check_branch
      %28 = sbr.rel (%p26) target = $region17
    $region16: #{_lambda_.28} parent=1 // pred_region
      %29 = vst [vmem:[#allocation2] sm:$0xff] 0.0
      %30 = vst [vmem:[#allocation2 + $0x8] sm:$0xff] 0.0
    $region17: #{_lambda_.28} parent=1 // pred_fallthru
      _
    %v31 = vld [vmem:[%s0] sm:$0xff]
    %v32 = vld [vmem:[%s0 + $0x8] sm:$0xff]
    %v33 = vlaneseq
    %v34 = vand.u32 %v33, 127
    %v35 = vadd.s32 %v34, 128
    %s36 = smul.u32 0, 256
    %v37 = vstv %s36
    %v38 = vadd.s32 %v34, %v37
    %v39 = vadd.s32 %v35, %v37
    %40 = vset.pattern.permute.xlu0 0
    %41 = vperm.xlu0 %40, %v31
    %v42 = vpop.permute.xlu0 %41
    %43 = vset.pattern.permute.xlu0 0
    %44 = vperm.xlu0 %43, %v32
    %v45 = vpop.permute.xlu0 %44
    %vm46 = vcmp.eq.s32.totalorder %v38, %v42
    %vm47 = vcmp.eq.s32.totalorder %v39, %v42
    %vm48 = vcmp.eq.s32.totalorder %v38, %v45
    %vm49 = vcmp.eq.s32.totalorder %v39, %v45
    %v50 = vsel %vm46, 1, 0
    %v51 = vsel %vm47, 1, 0
    %v52 = vsel %vm48, 1, 0
    %v53 = vsel %vm49, 1, 0
    %v54 = vcvt.s32.f32 %v50
    %v55 = vcvt.s32.f32 %v51
    %v56 = vcvt.s32.f32 %v52
    %v57 = vcvt.s32.f32 %v53
    %v58 = vld [vmem:[#allocation2] sm:$0xff]
    %v59 = vld [vmem:[#allocation2 + $0x8] sm:$0xff]
    %v60 = vld [vmem:[#allocation3] sm:$0xff]
    %v61 = vld [vmem:[#allocation3 + $0x8] sm:$0xff]
    %v62 = vld [vmem:[#allocation3 + $0x10] sm:$0xff]
    %v63 = vld [vmem:[#allocation3 + $0x18] sm:$0xff]
    %v64 = vld [vmem:[#allocation3 + $0x20] sm:$0xff]
    %v65 = vld [vmem:[#allocation3 + $0x28] sm:$0xff]
    %v66 = vld [vmem:[#allocation3 + $0x30] sm:$0xff]
    %v67 = vld [vmem:[#allocation3 + $0x38] sm:$0xff]
    %v68 = vld [vmem:[#allocation3 + $0x40] sm:$0xff]
    %v69 = vld [vmem:[#allocation3 + $0x48] sm:$0xff]
    %v70 = vld [vmem:[#allocation3 + $0x50] sm:$0xff]
    %v71 = vld [vmem:[#allocation3 + $0x58] sm:$0xff]
    %v72 = vld [vmem:[#allocation3 + $0x60] sm:$0xff]
    %v73 = vld [vmem:[#allocation3 + $0x68] sm:$0xff]
    %v74 = vld [vmem:[#allocation3 + $0x70] sm:$0xff]
    %v75 = vld [vmem:[#allocation3 + $0x78] sm:$0xff]
    %v76 = vld [vmem:[#allocation3 + $0x80] sm:$0xff]
    %v77 = vld [vmem:[#allocation3 + $0x88] sm:$0xff]
    %v78 = vld [vmem:[#allocation3 + $0x90] sm:$0xff]
    %v79 = vld [vmem:[#allocation3 + $0x98] sm:$0xff]
    %v80 = vld [vmem:[#allocation3 + $0xa0] sm:$0xff]
    %v81 = vld [vmem:[#allocation3 + $0xa8] sm:$0xff]
    %v82 = vld [vmem:[#allocation3 + $0xb0] sm:$0xff]
    %v83 = vld [vmem:[#allocation3 + $0xb8] sm:$0xff]
    %v84 = vld [vmem:[#allocation3 + $0xc0] sm:$0xff]
    %v85 = vld [vmem:[#allocation3 + $0xc8] sm:$0xff]
    %v86 = vld [vmem:[#allocation3 + $0xd0] sm:$0xff]
    %v87 = vld [vmem:[#allocation3 + $0xd8] sm:$0xff]
    %v88 = vld [vmem:[#allocation3 + $0xe0] sm:$0xff]
    %v89 = vld [vmem:[#allocation3 + $0xe8] sm:$0xff]
    %v90 = vld [vmem:[#allocation3 + $0xf0] sm:$0xff]
    %v91 = vld [vmem:[#allocation3 + $0xf8] sm:$0xff]
    %92 = vmatprep.subr.mxu0 0.0
    %93 = vmatpush1.msra.mxu0 %v60
    %94 = vmatprep.subr.mxu0 0.0
    %95 = vmatpush1.msra.mxu0 %v61
    %96 = vmatprep.subr.mxu0 0.0
    %97 = vmatpush1.msra.mxu0 %v62
    %98 = vmatprep.subr.mxu0 0.0
    %99 = vmatpush1.msra.mxu0 %v63
    %100 = vmatprep.subr.mxu0 0.0
    %101 = vmatpush1.msra.mxu0 %v64
    %102 = vmatprep.subr.mxu0 0.0
    %103 = vmatpush1.msra.mxu0 %v65
    %104 = vmatprep.subr.mxu0 0.0
    %105 = vmatpush1.msra.mxu0 %v66
    %106 = vmatprep.subr.mxu0 0.0
    %107 = vmatpush1.msra.mxu0 %v67
    %108 = vmatprep.subr.mxu0 0.0
    %109 = vmatpush1.msra.mxu0 %v68
    %110 = vmatprep.subr.mxu0 0.0
    %111 = vmatpush1.msra.mxu0 %v69
    %112 = vmatprep.subr.mxu0 0.0
    %113 = vmatpush1.msra.mxu0 %v70
    %114 = vmatprep.subr.mxu0 0.0
    %115 = vmatpush1.msra.mxu0 %v71
    %116 = vmatprep.subr.mxu0 0.0
    %117 = vmatpush1.msra.mxu0 %v72
    %118 = vmatprep.subr.mxu0 0.0
    %119 = vmatpush1.msra.mxu0 %v73
    %120 = vmatprep.subr.mxu0 0.0
    %121 = vmatpush1.msra.mxu0 %v74
    %122 = vmatprep.subr.mxu0 0.0
    %123 = vmatpush1.msra.mxu0 %v75
    %124 = vmatprep.subr.mxu0 0.0
    %125 = vmatpush1.msra.mxu0 %v76
    %126 = vmatprep.subr.mxu0 0.0
    %127 = vmatpush1.msra.mxu0 %v77
    %128 = vmatprep.subr.mxu0 0.0
    %129 = vmatpush1.msra.mxu0 %v78
    %130 = vmatprep.subr.mxu0 0.0
    %131 = vmatpush1.msra.mxu0 %v79
    %132 = vmatprep.subr.mxu0 0.0
    %133 = vmatpush1.msra.mxu0 %v80
    %134 = vmatprep.subr.mxu0 0.0
    %135 = vmatpush1.msra.mxu0 %v81
    %136 = vmatprep.subr.mxu0 0.0
    %137 = vmatpush1.msra.mxu0 %v82
    %138 = vmatprep.subr.mxu0 0.0
    %139 = vmatpush1.msra.mxu0 %v83
    %140 = vmatprep.subr.mxu0 0.0
    %141 = vmatpush1.msra.mxu0 %v84
    %142 = vmatprep.subr.mxu0 0.0
    %143 = vmatpush1.msra.mxu0 %v85
    %144 = vmatprep.subr.mxu0 0.0
    %145 = vmatpush1.msra.mxu0 %v86
    %146 = vmatprep.subr.mxu0 0.0
    %147 = vmatpush1.msra.mxu0 %v87
    %148 = vmatprep.subr.mxu0 0.0
    %149 = vmatpush1.msra.mxu0 %v88
    %150 = vmatprep.subr.mxu0 0.0
    %151 = vmatpush1.msra.mxu0 %v89
    %152 = vmatprep.subr.mxu0 0.0
    %153 = vmatpush1.msra.mxu0 %v90
    %154 = vmatprep.subr.mxu0 0.0
    %155 = vmatpush1.msra.mxu0 %v91
    %156 = vmatprep.mubr.f32.mxu0 %v55
    %157 = vmatmul.mubr.f32.gmra.mrb[0].mxu0 %v54
    %v158 = vpop.f32.mrb[0].mxu0
    %v159 = vadd.f32 0.0, %v158
    %v160 = vpop.f32.mrb[0].mxu0
    %161 = vmatprep.mubr.f32.mxu0 %v57
    %162 = vmatmul.mubr.f32.gmra.mrb[0].mxu0 %v56
    %v163 = vpop.f32.mrb[0].mxu0
    %v164 = vadd.f32 0.0, %v163
    %v165 = vpop.f32.mrb[0].mxu0
    %166 = vdwg.mxu0
    %v167 = vadd.f32 %v58, %v159
    %v168 = vadd.f32 %v59, %v164
    %169 = vst [vmem:[#allocation2] sm:$0xff] %v167
    %170 = vst [vmem:[#allocation2 + $0x8] sm:$0xff] %v168
    // Predicated region
    $region18: #{_lambda_.28} parent=1 // pred_check
      %p171 = pneg %p25
    $region19: #{_lambda_.28} parent=1 // pred_check_branch
      %173 = sbr.rel (%p171) target = $region21
    $region20: #{_lambda_.28} parent=1 // pred_region
      %v174 = vld [vmem:[#allocation2] sm:$0xff]
      %v175 = vld [vmem:[#allocation2 + $0x8] sm:$0xff]
      %176 = vst [vmem:[%s2] sm:$0xff] %v174
      %177 = vst [vmem:[%s2 + $0x8] sm:$0xff] %v175
    $region21: #{_lambda_.28} parent=1 // pred_fallthru
      _
    // Predicated region
    $region22: #{_lambda_.28} parent=1 // pred_check
      _
    $region23: #{_lambda_.28} parent=1 // pred_check_branch
      %179 = sbr.rel (0) target = $region25
    $region24: #{_lambda_.28} parent=1 // pred_region
      _
    $region25: #{_lambda_.28} parent=1 // pred_fallthru
      _
    // Predicated region
    $region26: #{_lambda_.28} parent=1 // pred_check
      _
    $region27: #{_lambda_.28} parent=1 // pred_check_branch
      %181 = sbr.rel (0) target = $region29
    $region28: #{_lambda_.28} parent=1 // pred_region
      _
    $region29: #{_lambda_.28} parent=1 // pred_fallthru
      _
    %182 = vsyncpa [#allocation4], 1

// kernel: _lambda_.29
$region0: #{_lambda_.29}
  #allocation0 [shape = 'u32[]', space=smem, size = 0x4, offset = 0x4, fixed_abs, tag = 'smem constant byte address 0x4 - core index']
  #allocation1 [shape = 'u32[144,128]{1,0:T(1,128)}', space=vmem, size = 0x12000, scoped, tag = 'internal scratch']
  %s0 = inlined_call_operand.vmem [shape: f32[16,128], index: 0, kind: input, shape index: {}]
  %s1 = inlined_call_operand.vmem [shape: f32[1,128], index: 1, kind: input, shape index: {}]
  %s2 = inlined_call_operand.vmem [shape: f32[128,384], index: 2, kind: input, shape index: {}]
  %s3 = inlined_call_operand.vmem [shape: f32[16,384], index: 3, kind: output, shape index: {}]
  %s4 = sld [smem:[#allocation0]]
  $region22: #{_lambda_.29} parent=0
    _
  %s6 = ssub.s32 1, %s4
  %s7 = scalar_select 0, %s6, %s4
  // Predicated region
  $region2: #{_lambda_.29} parent=0 // pred_check
    _
  $region3: #{_lambda_.29} parent=0 // pred_check_branch
    %9 = sbr.rel (0) target = $region5
  $region4: #{_lambda_.29} parent=0 // pred_region
    _
  $region5: #{_lambda_.29} parent=0 // pred_fallthru
    _
  // Predicated region
  $region6: #{_lambda_.29} parent=0 // pred_check
    _
  $region7: #{_lambda_.29} parent=0 // pred_check_branch
    %11 = sbr.rel (0) target = $region9
  $region8: #{_lambda_.29} parent=0 // pred_region
    _
  $region9: #{_lambda_.29} parent=0 // pred_fallthru
    _
  // Predicated region
  $region10: #{_lambda_.29} parent=0 // pred_check
    _
  $region11: #{_lambda_.29} parent=0 // pred_check_branch
    %13 = sbr.rel (0) target = $region13
  $region12: #{_lambda_.29} parent=0 // pred_region
    _
  $region13: #{_lambda_.29} parent=0 // pred_fallthru
    _
  %v14 = vld [vmem:[%s0] sm:$0xff]
  %v15 = vld [vmem:[%s0 + $0x8] sm:$0xff]
  %v16 = vmul.f32 %v14, %v14
  %v17 = vmul.f32 %v15, %v15
  %18 = vadd.xlane.f32.xlu0 %v16
  %v19 = vpop.xlane.xlu0 %18
  %20 = vadd.xlane.f32.xlu0 %v17
  %v21 = vpop.xlane.xlu0 %20
  %v22 = vrcp.pop 128.0
  %v23 = vmul.f32 %v19, %v22
  %v24 = vmul.f32 %v21, %v22
  %v25 = vld [vmem:[%s1] sm:$0x1]
  %v26 = vadd.f32 %v23, 1e-06
  %v27 = vadd.f32 %v24, 1e-06
  %v28 = vrsqrt.pop %v26
  %v29 = vrsqrt.pop %v27
  %v30 = vmul.f32 %v14, %v28
  %v31 = vmul.f32 %v15, %v29
  %v33 = vlaneseq
  %v34 = vshrl.u32 %v33, 7
  %v35 = vsub.s32 0, %v34
  %v36 = vrot.slane %v25, %v35
  %v38 = vmul.f32 %v36, %v30
  %v39 = vmul.f32 %v36, %v31
  %v40 = vld [vmem:[%s2] sm:$0xff]
  %v41 = vld [vmem:[%s2 + $0x8] sm:$0xff]
  %v42 = vld [vmem:[%s2 + $0x10] sm:$0xff]
  %v43 = vld [vmem:[%s2 + $0x18] sm:$0xff]
  %v44 = vld [vmem:[%s2 + $0x20] sm:$0xff]
  %v45 = vld [vmem:[%s2 + $0x28] sm:$0xff]
  %v46 = vld [vmem:[%s2 + $0x30] sm:$0xff]
  %v47 = vld [vmem:[%s2 + $0x38] sm:$0xff]
  %v48 = vld [vmem:[%s2 + $0x40] sm:$0xff]
  %v49 = vld [vmem:[%s2 + $0x48] sm:$0xff]
  %v50 = vld [vmem:[%s2 + $0x50] sm:$0xff]
  %v51 = vld [vmem:[%s2 + $0x58] sm:$0xff]
  %v52 = vld [vmem:[%s2 + $0x60] sm:$0xff]
  %v53 = vld [vmem:[%s2 + $0x68] sm:$0xff]
  %v54 = vld [vmem:[%s2 + $0x70] sm:$0xff]
  %v55 = vld [vmem:[%s2 + $0x78] sm:$0xff]
  %v56 = vld [vmem:[%s2 + $0x80] sm:$0xff]
  %v57 = vld [vmem:[%s2 + $0x88] sm:$0xff]
  %v58 = vld [vmem:[%s2 + $0x90] sm:$0xff]
  %v59 = vld [vmem:[%s2 + $0x98] sm:$0xff]
  %v60 = vld [vmem:[%s2 + $0xa0] sm:$0xff]
  %v61 = vld [vmem:[%s2 + $0xa8] sm:$0xff]
  %v62 = vld [vmem:[%s2 + $0xb0] sm:$0xff]
  %v63 = vld [vmem:[%s2 + $0xb8] sm:$0xff]
  %v64 = vld [vmem:[%s2 + $0xc0] sm:$0xff]
  %v65 = vld [vmem:[%s2 + $0xc8] sm:$0xff]
  %v66 = vld [vmem:[%s2 + $0xd0] sm:$0xff]
  %v67 = vld [vmem:[%s2 + $0xd8] sm:$0xff]
  %v68 = vld [vmem:[%s2 + $0xe0] sm:$0xff]
  %v69 = vld [vmem:[%s2 + $0xe8] sm:$0xff]
  %v70 = vld [vmem:[%s2 + $0xf0] sm:$0xff]
  %v71 = vld [vmem:[%s2 + $0xf8] sm:$0xff]
  %v72 = vld [vmem:[%s2 + $0x100] sm:$0xff]
  %v73 = vld [vmem:[%s2 + $0x108] sm:$0xff]
  %v74 = vld [vmem:[%s2 + $0x110] sm:$0xff]
  %v75 = vld [vmem:[%s2 + $0x118] sm:$0xff]
  %v76 = vld [vmem:[%s2 + $0x120] sm:$0xff]
  %v77 = vld [vmem:[%s2 + $0x128] sm:$0xff]
  %v78 = vld [vmem:[%s2 + $0x130] sm:$0xff]
  %v79 = vld [vmem:[%s2 + $0x138] sm:$0xff]
  %v80 = vld [vmem:[%s2 + $0x140] sm:$0xff]
  %v81 = vld [vmem:[%s2 + $0x148] sm:$0xff]
  %v82 = vld [vmem:[%s2 + $0x150] sm:$0xff]
  %v83 = vld [vmem:[%s2 + $0x158] sm:$0xff]
  %v84 = vld [vmem:[%s2 + $0x160] sm:$0xff]
  %v85 = vld [vmem:[%s2 + $0x168] sm:$0xff]
  %v86 = vld [vmem:[%s2 + $0x170] sm:$0xff]
  %v87 = vld [vmem:[%s2 + $0x178] sm:$0xff]
  %88 = vmatprep.subr.mxu0 %v41
  %89 = vmatpush1.msra.mxu0 %v40
  %90 = vmatprep.subr.mxu0 %v44
  %91 = vmatpush1.msra.mxu0 %v43
  %92 = vmatprep.subr.mxu0 %v47
  %93 = vmatpush1.msra.mxu0 %v46
  %94 = vmatprep.subr.mxu0 %v50
  %95 = vmatpush1.msra.mxu0 %v49
  %96 = vmatprep.subr.mxu0 %v53
  %97 = vmatpush1.msra.mxu0 %v52
  %98 = vmatprep.subr.mxu0 %v56
  %99 = vmatpush1.msra.mxu0 %v55
  %100 = vmatprep.subr.mxu0 %v59
  %101 = vmatpush1.msra.mxu0 %v58
  %102 = vmatprep.subr.mxu0 %v62
  %103 = vmatpush1.msra.mxu0 %v61
  %104 = vmatprep.subr.mxu0 %v65
  %105 = vmatpush1.msra.mxu0 %v64
  %106 = vmatprep.subr.mxu0 %v68
  %107 = vmatpush1.msra.mxu0 %v67
  %108 = vmatprep.subr.mxu0 %v71
  %109 = vmatpush1.msra.mxu0 %v70
  %110 = vmatprep.subr.mxu0 %v74
  %111 = vmatpush1.msra.mxu0 %v73
  %112 = vmatprep.subr.mxu0 %v77
  %113 = vmatpush1.msra.mxu0 %v76
  %114 = vmatprep.subr.mxu0 %v80
  %115 = vmatpush1.msra.mxu0 %v79
  %116 = vmatprep.subr.mxu0 %v83
  %117 = vmatpush1.msra.mxu0 %v82
  %118 = vmatprep.subr.mxu0 %v86
  %119 = vmatpush1.msra.mxu0 %v85
  %120 = vmatprep.subr.mxu0 0.0
  %121 = vmatpush1.msra.mxu0 0.0
  %122 = vmatprep.subr.mxu0 0.0
  %123 = vmatpush1.msra.mxu0 0.0
  %124 = vmatprep.subr.mxu0 0.0
  %125 = vmatpush1.msra.mxu0 0.0
  %126 = vmatprep.subr.mxu0 0.0
  %127 = vmatpush1.msra.mxu0 0.0
  %128 = vmatprep.subr.mxu0 0.0
  %129 = vmatpush1.msra.mxu0 0.0
  %130 = vmatprep.subr.mxu0 0.0
  %131 = vmatpush1.msra.mxu0 0.0
  %132 = vmatprep.subr.mxu0 0.0
  %133 = vmatpush1.msra.mxu0 0.0
  %134 = vmatprep.subr.mxu0 0.0
  %135 = vmatpush1.msra.mxu0 0.0
  %136 = vmatprep.subr.mxu0 0.0
  %137 = vmatpush1.msra.mxu0 0.0
  %138 = vmatprep.subr.mxu0 0.0
  %139 = vmatpush1.msra.mxu0 0.0
  %140 = vmatprep.subr.mxu0 0.0
  %141 = vmatpush1.msra.mxu0 0.0
  %142 = vmatprep.subr.mxu0 0.0
  %143 = vmatpush1.msra.mxu0 0.0
  %144 = vmatprep.subr.mxu0 0.0
  %145 = vmatpush1.msra.mxu0 0.0
  %146 = vmatprep.subr.mxu0 0.0
  %147 = vmatpush1.msra.mxu0 0.0
  %148 = vmatprep.subr.mxu0 0.0
  %149 = vmatpush1.msra.mxu0 0.0
  %150 = vmatprep.subr.mxu0 0.0
  %151 = vmatpush1.msra.mxu0 0.0
  %152 = vmatprep.mubr.f32.mxu0 0.0
  %153 = vmatmul.mubr.f32.gmra.mrb[0].mxu0 %v38
  %v154 = vpop.f32.mrb[0].mxu0
  %v155 = vadd.f32 0.0, %v154
  %v156 = vpop.f32.mrb[0].mxu0
  %v157 = vadd.f32 0.0, %v156
  %158 = vmatprep.mubr.f32.mxu0 0.0
  %159 = vmatmul.mubr.f32.gmra.mrb[0].mxu0 %v39
  %v160 = vpop.f32.mrb[0].mxu0
  %v161 = vadd.f32 0.0, %v160
  %v162 = vpop.f32.mrb[0].mxu0
  %v163 = vadd.f32 0.0, %v162
  %164 = vdwg.mxu0
  %165 = vmatprep.subr.mxu0 0.0
  %166 = vmatpush1.msra.mxu0 %v42
  %167 = vmatprep.subr.mxu0 0.0
  %168 = vmatpush1.msra.mxu0 %v45
  %169 = vmatprep.subr.mxu0 0.0
  %170 = vmatpush1.msra.mxu0 %v48
  %171 = vmatprep.subr.mxu0 0.0
  %172 = vmatpush1.msra.mxu0 %v51
  %173 = vmatprep.subr.mxu0 0.0
  %174 = vmatpush1.msra.mxu0 %v54
  %175 = vmatprep.subr.mxu0 0.0
  %176 = vmatpush1.msra.mxu0 %v57
  %177 = vmatprep.subr.mxu0 0.0
  %178 = vmatpush1.msra.mxu0 %v60
  %179 = vmatprep.subr.mxu0 0.0
  %180 = vmatpush1.msra.mxu0 %v63
  %181 = vmatprep.subr.mxu0 0.0
  %182 = vmatpush1.msra.mxu0 %v66
  %183 = vmatprep.subr.mxu0 0.0
  %184 = vmatpush1.msra.mxu0 %v69
  %185 = vmatprep.subr.mxu0 0.0
  %186 = vmatpush1.msra.mxu0 %v72
  %187 = vmatprep.subr.mxu0 0.0
  %188 = vmatpush1.msra.mxu0 %v75
  %189 = vmatprep.subr.mxu0 0.0
  %190 = vmatpush1.msra.mxu0 %v78
  %191 = vmatprep.subr.mxu0 0.0
  %192 = vmatpush1.msra.mxu0 %v81
  %193 = vmatprep.subr.mxu0 0.0
  %194 = vmatpush1.msra.mxu0 %v84
  %195 = vmatprep.subr.mxu0 0.0
  %196 = vmatpush1.msra.mxu0 %v87
  %197 = vmatprep.subr.mxu0 0.0
  %198 = vmatpush1.msra.mxu0 0.0
  %199 = vmatprep.subr.mxu0 0.0
  %200 = vmatpush1.msra.mxu0 0.0
  %201 = vmatprep.subr.mxu0 0.0
  %202 = vmatpush1.msra.mxu0 0.0
  %203 = vmatprep.subr.mxu0 0.0
  %204 = vmatpush1.msra.mxu0 0.0
  %205 = vmatprep.subr.mxu0 0.0
  %206 = vmatpush1.msra.mxu0 0.0
  %207 = vmatprep.subr.mxu0 0.0
  %208 = vmatpush1.msra.mxu0 0.0
  %209 = vmatprep.subr.mxu0 0.0
  %210 = vmatpush1.msra.mxu0 0.0
  %211 = vmatprep.subr.mxu0 0.0
  %212 = vmatpush1.msra.mxu0 0.0
  %213 = vmatprep.subr.mxu0 0.0
  %214 = vmatpush1.msra.mxu0 0.0
  %215 = vmatprep.subr.mxu0 0.0
  %216 = vmatpush1.msra.mxu0 0.0
  %217 = vmatprep.subr.mxu0 0.0
  %218 = vmatpush1.msra.mxu0 0.0
  %219 = vmatprep.subr.mxu0 0.0
  %220 = vmatpush1.msra.mxu0 0.0
  %221 = vmatprep.subr.mxu0 0.0
  %222 = vmatpush1.msra.mxu0 0.0
  %223 = vmatprep.subr.mxu0 0.0
  %224 = vmatpush1.msra.mxu0 0.0
  %225 = vmatprep.subr.mxu0 0.0
  %226 = vmatpush1.msra.mxu0 0.0
  %227 = vmatprep.subr.mxu0 0.0
  %228 = vmatpush1.msra.mxu0 0.0
  %229 = vmatprep.mubr.f32.mxu0 0.0
  %230 = vmatmul.mubr.f32.gmra.mrb[0].mxu0 %v38
  %v231 = vpop.f32.mrb[0].mxu0
  %v232 = vadd.f32 0.0, %v231
  %v233 = vpop.f32.mrb[0].mxu0
  %234 = vmatprep.mubr.f32.mxu0 0.0
  %235 = vmatmul.mubr.f32.gmra.mrb[0].mxu0 %v39
  %v236 = vpop.f32.mrb[0].mxu0
  %v237 = vadd.f32 0.0, %v236
  %v238 = vpop.f32.mrb[0].mxu0
  %239 = vdwg.mxu0
  %240 = vst [vmem:[%s3] sm:$0xff] %v155
  %241 = vst [vmem:[%s3 + $0x8] sm:$0xff] %v157
  %242 = vst [vmem:[%s3 + $0x10] sm:$0xff] %v232
  %243 = vst [vmem:[%s3 + $0x18] sm:$0xff] %v161
  %244 = vst [vmem:[%s3 + $0x20] sm:$0xff] %v163
  %245 = vst [vmem:[%s3 + $0x28] sm:$0xff] %v237
  // Predicated region
  $region14: #{_lambda_.29} parent=0 // pred_check
    _
  $region15: #{_lambda_.29} parent=0 // pred_check_branch
    %247 = sbr.rel (0) target = $region17
  $region16: #{_lambda_.29} parent=0 // pred_region
    _
  $region17: #{_lambda_.29} parent=0 // pred_fallthru
    _
  // Predicated region
  $region18: #{_lambda_.29} parent=0 // pred_check
    _
  $region19: #{_lambda_.29} parent=0 // pred_check_branch
    %249 = sbr.rel (0) target = $region21
  $region20: #{_lambda_.29} parent=0 // pred_region
    _
  $region21: #{_lambda_.29} parent=0 // pred_fallthru
    _

// kernel: _lambda_.37
$region0: #{_lambda_.37}
  #allocation0 [shape = 'u32[]', space=smem, size = 0x4, offset = 0x4, fixed_abs, tag = 'smem constant byte address 0x4 - core index']
  #allocation1 [shape = 'u32[144,128]{1,0:T(1,128)}', space=vmem, size = 0x12000, scoped, tag = 'internal scratch']
  %s0 = inlined_call_operand.vmem [shape: f32[16,128], index: 0, kind: input, shape index: {}]
  %s1 = inlined_call_operand.vmem [shape: f32[1,128], index: 1, kind: input, shape index: {}]
  %s2 = inlined_call_operand.vmem [shape: f32[16,128], index: 2, kind: output, shape index: {}]
  %s3 = sld [smem:[#allocation0]]
  $region18: #{_lambda_.37} parent=0
    _
  %s5 = ssub.s32 1, %s3
  %s6 = scalar_select 0, %s5, %s3
  // Predicated region
  $region2: #{_lambda_.37} parent=0 // pred_check
    _
  $region3: #{_lambda_.37} parent=0 // pred_check_branch
    %8 = sbr.rel (0) target = $region5
  $region4: #{_lambda_.37} parent=0 // pred_region
    _
  $region5: #{_lambda_.37} parent=0 // pred_fallthru
    _
  // Predicated region
  $region6: #{_lambda_.37} parent=0 // pred_check
    _
  $region7: #{_lambda_.37} parent=0 // pred_check_branch
    %10 = sbr.rel (0) target = $region9
  $region8: #{_lambda_.37} parent=0 // pred_region
    _
  $region9: #{_lambda_.37} parent=0 // pred_fallthru
    _
  %v11 = vld [vmem:[%s0] sm:$0xff]
  %v12 = vld [vmem:[%s0 + $0x8] sm:$0xff]
  %v13 = vmul.f32 %v11, %v11
  %v14 = vmul.f32 %v12, %v12
  %15 = vadd.xlane.f32.xlu0 %v13
  %v16 = vpop.xlane.xlu0 %15
  %17 = vadd.xlane.f32.xlu0 %v14
  %v18 = vpop.xlane.xlu0 %17
  %v19 = vrcp.pop 128.0
  %v20 = vmul.f32 %v16, %v19
  %v21 = vmul.f32 %v18, %v19
  %v22 = vld [vmem:[%s1] sm:$0x1]
  %v23 = vadd.f32 %v20, 1e-06
  %v24 = vadd.f32 %v21, 1e-06
  %v25 = vrsqrt.pop %v23
  %v26 = vrsqrt.pop %v24
  %v27 = vmul.f32 %v11, %v25
  %v28 = vmul.f32 %v12, %v26
  %v30 = vlaneseq
  %v31 = vshrl.u32 %v30, 7
  %v32 = vsub.s32 0, %v31
  %v33 = vrot.slane %v22, %v32
  %v35 = vmul.f32 %v33, %v27
  %v36 = vmul.f32 %v33, %v28
  %37 = vst [vmem:[%s2] sm:$0xff] %v35
  %38 = vst [vmem:[%s2 + $0x8] sm:$0xff] %v36
  // Predicated region
  $region10: #{_lambda_.37} parent=0 // pred_check
    _
  $region11: #{_lambda_.37} parent=0 // pred_check_branch
    %40 = sbr.rel (0) target = $region13
  $region12: #{_lambda_.37} parent=0 // pred_region
    _
  $region13: #{_lambda_.37} parent=0 // pred_fallthru
    _
  // Predicated region
  $region14: #{_lambda_.37} parent=0 // pred_check
    _
  $region15: #{_lambda_.37} parent=0 // pred_check_branch
    %42 = sbr.rel (0) target = $region17
  $region16: #{_lambda_.37} parent=0 // pred_region
    _
  $region17: #{_lambda_.37} parent=0 // pred_fallthru
    _

// kernel: _lambda_.30
$region0: #{_lambda_.30}
  #allocation0 [shape = 'u32[]', space=smem, size = 0x4, offset = 0x4, fixed_abs, tag = 'smem constant byte address 0x4 - core index']
  #allocation1 [shape = 'u32[144,128]{1,0:T(1,128)}', space=vmem, size = 0x12000, scoped, tag = 'internal scratch']
  %s0 = inlined_call_operand.vmem [shape: f32[2,4,8,32], index: 0, kind: input, shape index: {}]
  %s1 = inlined_call_operand.vmem [shape: f32[2,4,8,32], index: 1, kind: input, shape index: {}]
  %s2 = inlined_call_operand.vmem [shape: f32[2,4,8,32], index: 2, kind: input, shape index: {}]
  %s3 = inlined_call_operand.vmem [shape: f32[1,4,8,8], index: 3, kind: input, shape index: {}]
  %s4 = inlined_call_operand.vmem [shape: f32[2,1,1,8], index: 4, kind: input, shape index: {}]
  %s5 = inlined_call_operand.vmem [shape: f32[2,4,8,32], index: 5, kind: output, shape index: {0}]
  %s6 = inlined_call_operand.hbm [shape: f32[2,4,8,8], index: 6, kind: output, shape index: {1}]
  %7 = xla_tuple %s5, %s6
  %s8 = sld [smem:[#allocation0]]
  $region61: #{_lambda_.30} parent=0
    _
  %s10 = ssub.s32 1, %s8
  %s11 = scalar_select 0, %s10, %s8
  $region1: #{_lambda_.30} parent=0
    #allocation2 [shape = 'u8[32768]{0}', space=vmem, size = 0x8000, scoped, tag = 'output window, operand 1']
    #allocation3 [shape = 's32[2]{0}', space=sflag, size = 0x8, scoped, tag = 'scoped memory for _lambda_.30']
    %12 = vsyncpa [#allocation3], 0
    %s13 = scalar_lea.sflag [#allocation3], 1
    %14 = vsyncpa %s13, 0
    loop: start=0, step=1, limit=4
    $region2: #{_lambda_.30} parent=1 // loop_pre_header
      _
    $region3: #{_lambda_.30} parent=1 // loop_header
      %s16 = sphi 0, %s20
      %p17 = scmp.ge.s32.totalorder %s16, 4
      %s26 = sphi 0, %s28
      %s29 = sphi 0, %s26
      %s30 = sphi 0, %s29
      %s46 = sphi 0, %s30
      %s52 = sphi 0, %s54
      %s55 = sphi 0, %s52
      %s56 = sphi 0, %s55
      %s72 = sphi 0, %s56
      %s78 = sphi 0, %s80
      %s81 = sphi 0, %s78
      %s82 = sphi 0, %s81
      %s98 = sphi 0, %s82
      %s102 = sphi 0, %s102
      %s104 = sphi 0, %s102
      %s105 = sphi 0, %s104
      %s119 = sphi 0, %s105
      %s125 = sphi 0, %s127
      %s128 = sphi 0, %s125
      %s129 = sphi 0, %s128
      %s145 = sphi 0, %s129
      %s151 = sphi 0, %s153
      %s154 = sphi 0, %s151
      %s155 = sphi 0, %s154
      %s171 = sphi 0, %s155
      %s177 = sphi 0, %s179
      %s180 = sphi 0, %s177
      %s181 = sphi 0, %s180
      %s197 = sphi 0, %s181
    $region4: #{_lambda_.30} parent=1 // loop_header_branch
      %19 = sbr.rel (%p17) target = $region8
    $region5: #{_lambda_.30} parent=1 // loop_body
      %s21 = ssub.s32 %s16, 1
      %s22 = ssub.s32 %s16, 2
      %s23 = sadd.s32 %s16, 1
      %s24 = ssub.s32 %s16, %s23
      %p25 = scmp.eq.s32.totalorder %s24, 0
      %s27 = sadd.s32 %s26, 1
      %s28 = scalar_select %p25, %s26, %s27
      %p31 = pneg %p25
      %p32 = scmp.eq.s32.totalorder %s16, 1
      %p33 = por %p31, %p32
      %p34 = scmp.ne.s32.totalorder %s26, %s29
      %p35 = scmp.eq.s32.totalorder %s16, 0
      %p36 = por %p34, %p35
      %p37 = scmp.ne.s32.totalorder %s26, %s29
      %p38 = scmp.eq.s32.totalorder %s21, 1
      %p39 = por %p37, %p38
      %p40 = scmp.ne.s32.totalorder %s29, %s30
      %p41 = scmp.eq.s32.totalorder %s21, 0
      %p42 = por %p40, %p41
      %p43 = scmp.ne.s32.totalorder %s29, %s30
      %p44 = scmp.eq.s32.totalorder %s22, 1
      %p45 = por %p43, %p44
      %p47 = scmp.ne.s32.totalorder %s30, %s46
      %p48 = scmp.eq.s32.totalorder %s22, 0
      %p49 = por %p47, %p48
      %s50 = ssub.s32 %s16, %s23
      %p51 = scmp.eq.s32.totalorder %s50, 0
      %s53 = sadd.s32 %s52, 1
      %s54 = scalar_select %p51, %s52, %s53
      %p57 = pneg %p51
      %p58 = scmp.eq.s32.totalorder %s16, 1
      %p59 = por %p57, %p58
      %p60 = scmp.ne.s32.totalorder %s52, %s55
      %p61 = scmp.eq.s32.totalorder %s16, 0
      %p62 = por %p60, %p61
      %p63 = scmp.ne.s32.totalorder %s52, %s55
      %p64 = scmp.eq.s32.totalorder %s21, 1
      %p65 = por %p63, %p64
      %p66 = scmp.ne.s32.totalorder %s55, %s56
      %p67 = scmp.eq.s32.totalorder %s21, 0
      %p68 = por %p66, %p67
      %p69 = scmp.ne.s32.totalorder %s55, %s56
      %p70 = scmp.eq.s32.totalorder %s22, 1
      %p71 = por %p69, %p70
      %p73 = scmp.ne.s32.totalorder %s56, %s72
      %p74 = scmp.eq.s32.totalorder %s22, 0
      %p75 = por %p73, %p74
      %s76 = ssub.s32 %s16, %s23
      %p77 = scmp.eq.s32.totalorder %s76, 0
      %s79 = sadd.s32 %s78, 1
      %s80 = scalar_select %p77, %s78, %s79
      %p83 = pneg %p77
      %p84 = scmp.eq.s32.totalorder %s16, 1
      %p85 = por %p83, %p84
      %p86 = scmp.ne.s32.totalorder %s78, %s81
      %p87 = scmp.eq.s32.totalorder %s16, 0
      %p88 = por %p86, %p87
      %p89 = scmp.ne.s32.totalorder %s78, %s81
      %p90 = scmp.eq.s32.totalorder %s21, 1
      %p91 = por %p89, %p90
      %p92 = scmp.ne.s32.totalorder %s81, %s82
      %p93 = scmp.eq.s32.totalorder %s21, 0
      %p94 = por %p92, %p93
      %p95 = scmp.ne.s32.totalorder %s81, %s82
      %p96 = scmp.eq.s32.totalorder %s22, 1
      %p97 = por %p95, %p96
      %p99 = scmp.ne.s32.totalorder %s82, %s98
      %p100 = scmp.eq.s32.totalorder %s22, 0
      %p101 = por %p99, %p100
      %s103 = sadd.s32 %s102, 1
      %p106 = scmp.eq.s32.totalorder %s16, 1
      %p107 = scmp.ne.s32.totalorder %s102, %s104
      %p108 = scmp.eq.s32.totalorder %s16, 0
      %p109 = por %p107, %p108
      %p110 = scmp.ne.s32.totalorder %s102, %s104
      %p111 = scmp.eq.s32.totalorder %s21, 1
      %p112 = por %p110, %p111
      %p113 = scmp.ne.s32.totalorder %s104, %s105
      %p114 = scmp.eq.s32.totalorder %s21, 0
      %p115 = por %p113, %p114
      %p116 = scmp.ne.s32.totalorder %s104, %s105
      %p117 = scmp.eq.s32.totalorder %s22, 1
      %p118 = por %p116, %p117
      %p120 = scmp.ne.s32.totalorder %s105, %s119
      %p121 = scmp.eq.s32.totalorder %s22, 0
      %p122 = por %p120, %p121
      %s123 = ssub.s32 %s16, %s23
      %p124 = scmp.eq.s32.totalorder %s123, 0
      %s126 = sadd.s32 %s125, 1
      %s127 = scalar_select %p124, %s125, %s126
      %p130 = pneg %p124
      %p131 = scmp.eq.s32.totalorder %s16, 1
      %p132 = por %p130, %p131
      %p133 = scmp.ne.s32.totalorder %s125, %s128
      %p134 = scmp.eq.s32.totalorder %s16, 0
      %p135 = por %p133, %p134
      %p136 = scmp.ne.s32.totalorder %s125, %s128
      %p137 = scmp.eq.s32.totalorder %s21, 1
      %p138 = por %p136, %p137
      %p139 = scmp.ne.s32.totalorder %s128, %s129
      %p140 = scmp.eq.s32.totalorder %s21, 0
      %p141 = por %p139, %p140
      %p142 = scmp.ne.s32.totalorder %s128, %s129
      %p143 = scmp.eq.s32.totalorder %s22, 1
      %p144 = por %p142, %p143
      %p146 = scmp.ne.s32.totalorder %s129, %s145
      %p147 = scmp.eq.s32.totalorder %s22, 0
      %p148 = por %p146, %p147
      %s149 = ssub.s32 %s16, %s23
      %p150 = scmp.eq.s32.totalorder %s149, 0
      %s152 = sadd.s32 %s151, 1
      %s153 = scalar_select %p150, %s151, %s152
      %p156 = pneg %p150
      %p157 = scmp.eq.s32.totalorder %s16, 1
      %p158 = por %p156, %p157
      %p159 = scmp.ne.s32.totalorder %s151, %s154
      %p160 = scmp.eq.s32.totalorder %s16, 0
      %p161 = por %p159, %p160
      %p162 = scmp.ne.s32.totalorder %s151, %s154
      %p163 = scmp.eq.s32.totalorder %s21, 1
      %p164 = por %p162, %p163
      %p165 = scmp.ne.s32.totalorder %s154, %s155
      %p166 = scmp.eq.s32.totalorder %s21, 0
      %p167 = por %p165, %p166
      %p168 = scmp.ne.s32.totalorder %s154, %s155
      %p169 = scmp.eq.s32.totalorder %s22, 1
      %p170 = por %p168, %p169
      %p172 = scmp.ne.s32.totalorder %s155, %s171
      %p173 = scmp.eq.s32.totalorder %s22, 0
      %p174 = por %p172, %p173
      %s175 = ssub.s32 %s16, %s23
      %p176 = scmp.eq.s32.totalorder %s175, 0
      %s178 = sadd.s32 %s177, 1
      %s179 = scalar_select %p176, %s177, %s178
      %p182 = pneg %p176
      %p183 = scmp.eq.s32.totalorder %s16, 1
      %p184 = por %p182, %p183
      %p185 = scmp.ne.s32.totalorder %s177, %s180
      %p186 = scmp.eq.s32.totalorder %s16, 0
      %p187 = por %p185, %p186
      %p188 = scmp.ne.s32.totalorder %s177, %s180
      %p189 = scmp.eq.s32.totalorder %s21, 1
      %p190 = por %p188, %p189
      %p191 = scmp.ne.s32.totalorder %s180, %s181
      %p192 = scmp.eq.s32.totalorder %s21, 0
      %p193 = por %p191, %p192
      %p194 = scmp.ne.s32.totalorder %s180, %s181
      %p195 = scmp.eq.s32.totalorder %s22, 1
      %p196 = por %p194, %p195
      %p198 = scmp.ne.s32.totalorder %s181, %s197
      %p199 = scmp.eq.s32.totalorder %s22, 0
      %p200 = por %p198, %p199
      %p201 = scmp.le.s32.totalorder 1, %s16
      %p202 = scmp.lt.s32.totalorder %s16, 3
      %p203 = pnand %p201, %p202
      %p204 = pneg %p203
      // Predicated region
      $region9: #{_lambda_.30} parent=5 // pred_check
        _
      $region10: #{_lambda_.30} parent=5 // pred_check_branch
        %206 = sbr.rel (%p203) target = $region12
      $region11: #{_lambda_.30} parent=5 // pred_region
        %s207 = ssub.s32 %s16, 1
        // Predicated region
        $region13: #{_lambda_.30} parent=11 // pred_check
          %p208 = pneg %p115
        $region14: #{_lambda_.30} parent=11 // pred_check_branch
          %210 = sbr.rel (%p208) target = $region16
        $region15: #{_lambda_.30} parent=11 // pred_region
          _
        $region16: #{_lambda_.30} parent=11 // pred_fallthru
          _
      $region12: #{_lambda_.30} parent=5 // pred_fallthru
        _
      %p211 = scmp.lt.s32.totalorder %s16, 2
      // Predicated region
      $region17: #{_lambda_.30} parent=5 // pred_check
        %p212 = pneg %p211
      $region18: #{_lambda_.30} parent=5 // pred_check_branch
        %214 = sbr.rel (%p212) target = $region20
      $region19: #{_lambda_.30} parent=5 // pred_region
        // Predicated region
        $region21: #{_lambda_.30} parent=19 // pred_check
          %p215 = pneg %p36
        $region22: #{_lambda_.30} parent=19 // pred_check_branch
          %217 = sbr.rel (%p215) target = $region24
        $region23: #{_lambda_.30} parent=19 // pred_region
          %p218 = scmp.lt.s32.totalorder %s16, 1
          %s219 = scalar_select %p218, %s16, 1
          %s220 = smul.addr %s219, 4
          %s221 = smul.addr %s220, 8
          %s222 = scalar_lea.vmem %s0, %s221
        $region24: #{_lambda_.30} parent=19 // pred_fallthru
          _
        // Predicated region
        $region25: #{_lambda_.30} parent=19 // pred_check
          %p223 = pneg %p62
        $region26: #{_lambda_.30} parent=19 // pred_check_branch
          %225 = sbr.rel (%p223) target = $region28
        $region27: #{_lambda_.30} parent=19 // pred_region
          %p226 = scmp.lt.s32.totalorder %s16, 1
          %s227 = scalar_select %p226, %s16, 1
          %s228 = smul.addr %s227, 4
          %s229 = smul.addr %s228, 8
          %s230 = scalar_lea.vmem %s1, %s229
        $region28: #{_lambda_.30} parent=19 // pred_fallthru
          _
        // Predicated region
        $region29: #{_lambda_.30} parent=19 // pred_check
          %p231 = pneg %p88
        $region30: #{_lambda_.30} parent=19 // pred_check_branch
          %233 = sbr.rel (%p231) target = $region32
        $region31: #{_lambda_.30} parent=19 // pred_region
          %p234 = scmp.lt.s32.totalorder %s16, 1
          %s235 = scalar_select %p234, %s16, 1
          %s236 = smul.addr %s235, 4
          %s237 = smul.addr %s236, 8
          %s238 = scalar_lea.vmem %s2, %s237
        $region32: #{_lambda_.30} parent=19 // pred_fallthru
          _
        // Predicated region
        $region33: #{_lambda_.30} parent=19 // pred_check
          %p239 = pneg %p135
        $region34: #{_lambda_.30} parent=19 // pred_check_branch
          %241 = sbr.rel (%p239) target = $region36
        $region35: #{_lambda_.30} parent=19 // pred_region
          %p242 = scmp.lt.s32.totalorder %s16, 1
          %s243 = scalar_select %p242, %s16, 1
          %s244 = scalar_lea.vmem %s4, %s243
        $region36: #{_lambda_.30} parent=19 // pred_fallthru
          _
      $region20: #{_lambda_.30} parent=5 // pred_fallthru
        _
      %p245 = scmp.le.s32.totalorder 1, %s16
      %p246 = scmp.lt.s32.totalorder %s16, 3
      %p247 = pnand %p245, %p246
      %p248 = pneg %p247
      // Predicated region
      $region37: #{_lambda_.30} parent=5 // pred_check
        _
      $region38: #{_lambda_.30} parent=5 // pred_check_branch
        %250 = sbr.rel (%p247) target = $region40
      $region39: #{_lambda_.30} parent=5 // pred_region
        %s251 = ssub.s32 %s16, 1
        %p252 = scmp.lt.s32.totalorder %s21, 1
        %s253 = scalar_select %p252, %s21, 1
        %s254 = smul.addr %s253, 4
        %s255 = smul.addr %s254, 8
        %s256 = scalar_lea.vmem %s0, %s255
        %p257 = pneg %p42
        %p258 = pneg %p39
        %p259 = scmp.lt.s32.totalorder %s21, 1
        %s260 = scalar_select %p259, %s21, 1
        %s261 = smul.addr %s260, 4
        %s262 = smul.addr %s261, 8
        %s263 = scalar_lea.vmem %s1, %s262
        %p264 = pneg %p68
        %p265 = pneg %p65
        %p266 = scmp.lt.s32.totalorder %s21, 1
        %s267 = scalar_select %p266, %s21, 1
        %s268 = smul.addr %s267, 4
        %s269 = smul.addr %s268, 8
        %s270 = scalar_lea.vmem %s2, %s269
        %p271 = pneg %p94
        %p272 = pneg %p91
        %p273 = pneg %p115
        %p274 = pneg %p112
        %p275 = scmp.lt.s32.totalorder %s21, 1
        %s276 = scalar_select %p275, %s21, 1
        %s277 = scalar_lea.vmem %s4, %s276
        %p278 = pneg %p141
        %p279 = pneg %p138
        %p280 = pneg %p167
        %p281 = pneg %p164
        %p282 = scmp.lt.s32.totalorder %s21, 1
        %s283 = scalar_select %p282, %s21, 1
        %s284 = smul.addr %s283, 4
        %s285 = smul.addr %s284, 8
        %s286 = scalar_lea.vmem %s5, %s285
        %p287 = pneg %p193
        %p288 = pneg %p190
        %s289 = sand.u32 %s180, 1
        %s290 = scalar_lea.sflag [#allocation3], %s289
        %s291 = sand.u32 %s180, 1
        %s292 = smul.addr %s291, 32
        %s293 = scalar_lea.vmem [#allocation2], %s292
        %p294 = scmp.lt.s32.totalorder %s21, 1
        %s295 = scalar_select %p294, %s21, 1
        %s296 = smul.addr %s295, 4
        %s297 = smul.addr %s296, 8
        %s298 = scalar_lea.vmem %s0, %s297
        %p299 = scmp.lt.s32.totalorder %s21, 1
        %s300 = scalar_select %p299, %s21, 1
        %s301 = smul.addr %s300, 4
        %s302 = smul.addr %s301, 8
        %s303 = scalar_lea.vmem %s1, %s302
        %p304 = scmp.lt.s32.totalorder %s21, 1
        %s305 = scalar_select %p304, %s21, 1
        %s306 = smul.addr %s305, 4
        %s307 = smul.addr %s306, 8
        %s308 = scalar_lea.vmem %s2, %s307
        %p309 = scmp.lt.s32.totalorder %s21, 1
        %s310 = scalar_select %p309, %s21, 1
        %s311 = scalar_lea.vmem %s4, %s310
        %p312 = scmp.lt.s32.totalorder %s21, 1
        %s313 = scalar_select %p312, %s21, 1
        %s314 = smul.addr %s313, 4
        %s315 = smul.addr %s314, 8
        %s316 = scalar_lea.vmem %s5, %s315
        %v317 = vld [vmem:[%s298] sm:$0xff]
        %v318 = vld [vmem:[%s298 + $0x8] sm:$0xff]
        %v319 = vld [vmem:[%s298 + $0x10] sm:$0xff]
        %v320 = vld [vmem:[%s298 + $0x18] sm:$0xff]
        %v321 = vld [vmem:[%s303] sm:$0xff]
        %v322 = vld [vmem:[%s303 + $0x8] sm:$0xff]
        %v323 = vld [vmem:[%s303 + $0x10] sm:$0xff]
        %v324 = vld [vmem:[%s303 + $0x18] sm:$0xff]
        %v325 = vld [vmem:[%s308] sm:$0xff]
        %v326 = vld [vmem:[%s308 + $0x8] sm:$0xff]
        %v327 = vld [vmem:[%s308 + $0x10] sm:$0xff]
        %v328 = vld [vmem:[%s308 + $0x18] sm:$0xff]
        %v329 = vld [vmem:[%s3] sm:$0xff]
        %v330 = vld [vmem:[%s3 + $0x8] sm:$0xff]
        %v331 = vld [vmem:[%s3 + $0x10] sm:$0xff]
        %v332 = vld [vmem:[%s3 + $0x18] sm:$0xff]
        %vm333 = vcmask 261120
        %v335 = vsel %vm333, %v317, 0
        %v338 = vsel %vm333, %v321, 0
        %340 = vmatprep.subr.mxu0 0.0
        %341 = vmatpush1.xpose.msra.mxu0 %v338
        %342 = vmatprep.subr.mxu0 0.0
        %343 = vmatpush1.xpose.msra.mxu0 0.0
        %344 = vmatprep.subr.mxu0 0.0
        %345 = vmatpush1.xpose.msra.mxu0 0.0
        %346 = vmatprep.subr.mxu0 0.0
        %347 = vmatpush1.xpose.msra.mxu0 0.0
        %348 = vmatprep.subr.mxu0 0.0
        %349 = vmatpush1.xpose.msra.mxu0 0.0
        %350 = vmatprep.subr.mxu0 0.0
        %351 = vmatpush1.xpose.msra.mxu0 0.0
        %352 = vmatprep.subr.mxu0 0.0
        %353 = vmatpush1.xpose.msra.mxu0 0.0
        %354 = vmatprep.subr.mxu0 0.0
        %355 = vmatpush1.xpose.msra.mxu0 0.0
        %356 = vmatprep.subr.mxu0 0.0
        %357 = vmatpush1.xpose.msra.mxu0 0.0
        %358 = vmatprep.subr.mxu0 0.0
        %359 = vmatpush1.xpose.msra.mxu0 0.0
        %360 = vmatprep.subr.mxu0 0.0
        %361 = vmatpush1.xpose.msra.mxu0 0.0
        %362 = vmatprep.subr.mxu0 0.0
        %363 = vmatpush1.xpose.msra.mxu0 0.0
        %364 = vmatprep.subr.mxu0 0.0
        %365 = vmatpush1.xpose.msra.mxu0 0.0
        %366 = vmatprep.subr.mxu0 0.0
        %367 = vmatpush1.xpose.msra.mxu0 0.0
        %368 = vmatprep.subr.mxu0 0.0
        %369 = vmatpush1.xpose.msra.mxu0 0.0
        %370 = vmatprep.subr.mxu0 0.0
        %371 = vmatpush1.xpose.msra.mxu0 0.0
        %372 = vmatprep.subr.mxu0 0.0
        %373 = vmatpush1.xpose.msra.mxu0 0.0
        %374 = vmatprep.subr.mxu0 0.0
        %375 = vmatpush1.xpose.msra.mxu0 0.0
        %376 = vmatprep.subr.mxu0 0.0
        %377 = vmatpush1.xpose.msra.mxu0 0.0
        %378 = vmatprep.subr.mxu0 0.0
        %379 = vmatpush1.xpose.msra.mxu0 0.0
        %380 = vmatprep.subr.mxu0 0.0
        %381 = vmatpush1.xpose.msra.mxu0 0.0
        %382 = vmatprep.subr.mxu0 0.0
        %383 = vmatpush1.xpose.msra.mxu0 0.0
        %384 = vmatprep.subr.mxu0 0.0
        %385 = vmatpush1.xpose.msra.mxu0 0.0
        %386 = vmatprep.subr.mxu0 0.0
        %387 = vmatpush1.xpose.msra.mxu0 0.0
        %388 = vmatprep.subr.mxu0 0.0
        %389 = vmatpush1.xpose.msra.mxu0 0.0
        %390 = vmatprep.subr.mxu0 0.0
        %391 = vmatpush1.xpose.msra.mxu0 0.0
        %392 = vmatprep.subr.mxu0 0.0
        %393 = vmatpush1.xpose.msra.mxu0 0.0
        %394 = vmatprep.subr.mxu0 0.0
        %395 = vmatpush1.xpose.msra.mxu0 0.0
        %396 = vmatprep.subr.mxu0 0.0
        %397 = vmatpush1.xpose.msra.mxu0 0.0
        %398 = vmatprep.subr.mxu0 0.0
        %399 = vmatpush1.xpose.msra.mxu0 0.0
        %400 = vmatprep.subr.mxu0 0.0
        %401 = vmatpush1.xpose.msra.mxu0 0.0
        %402 = vmatprep.subr.mxu0 0.0
        %403 = vmatpush1.xpose.msra.mxu0 0.0
        %404 = vmatprep.mubr.f32.mxu0 0.0
        %405 = vmatmul.mubr.f32.gmra.mrb[0].mxu0 %v335
        %v406 = vpop.f32.mrb[0].mxu0
        %v407 = vadd.f32 %v329, %v406
        %v408 = vpop.f32.mrb[0].mxu0
        %409 = vdwg.mxu0
        %v411 = vsel %vm333, %v318, 0
        %v414 = vsel %vm333, %v322, 0
        %416 = vmatprep.subr.mxu0 0.0
        %417 = vmatpush1.xpose.msra.mxu0 %v414
        %418 = vmatprep.subr.mxu0 0.0
        %419 = vmatpush1.xpose.msra.mxu0 0.0
        %420 = vmatprep.subr.mxu0 0.0
        %421 = vmatpush1.xpose.msra.mxu0 0.0
        %422 = vmatprep.subr.mxu0 0.0
        %423 = vmatpush1.xpose.msra.mxu0 0.0
        %424 = vmatprep.subr.mxu0 0.0
        %425 = vmatpush1.xpose.msra.mxu0 0.0
        %426 = vmatprep.subr.mxu0 0.0
        %427 = vmatpush1.xpose.msra.mxu0 0.0
        %428 = vmatprep.subr.mxu0 0.0
        %429 = vmatpush1.xpose.msra.mxu0 0.0
        %430 = vmatprep.subr.mxu0 0.0
        %431 = vmatpush1.xpose.msra.mxu0 0.0
        %432 = vmatprep.subr.mxu0 0.0
        %433 = vmatpush1.xpose.msra.mxu0 0.0
        %434 = vmatprep.subr.mxu0 0.0
        %435 = vmatpush1.xpose.msra.mxu0 0.0
        %436 = vmatprep.subr.mxu0 0.0
        %437 = vmatpush1.xpose.msra.mxu0 0.0
        %438 = vmatprep.subr.mxu0 0.0
        %439 = vmatpush1.xpose.msra.mxu0 0.0
        %440 = vmatprep.subr.mxu0 0.0
        %441 = vmatpush1.xpose.msra.mxu0 0.0
        %442 = vmatprep.subr.mxu0 0.0
        %443 = vmatpush1.xpose.msra.mxu0 0.0
        %444 = vmatprep.subr.mxu0 0.0
        %445 = vmatpush1.xpose.msra.mxu0 0.0
        %446 = vmatprep.subr.mxu0 0.0
        %447 = vmatpush1.xpose.msra.mxu0 0.0
        %448 = vmatprep.subr.mxu0 0.0
        %449 = vmatpush1.xpose.msra.mxu0 0.0
        %450 = vmatprep.subr.mxu0 0.0
        %451 = vmatpush1.xpose.msra.mxu0 0.0
        %452 = vmatprep.subr.mxu0 0.0
        %453 = vmatpush1.xpose.msra.mxu0 0.0
        %454 = vmatprep.subr.mxu0 0.0
        %455 = vmatpush1.xpose.msra.mxu0 0.0
        %456 = vmatprep.subr.mxu0 0.0
        %457 = vmatpush1.xpose.msra.mxu0 0.0
        %458 = vmatprep.subr.mxu0 0.0
        %459 = vmatpush1.xpose.msra.mxu0 0.0
        %460 = vmatprep.subr.mxu0 0.0
        %461 = vmatpush1.xpose.msra.mxu0 0.0
        %462 = vmatprep.subr.mxu0 0.0
        %463 = vmatpush1.xpose.msra.mxu0 0.0
        %464 = vmatprep.subr.mxu0 0.0
        %465 = vmatpush1.xpose.msra.mxu0 0.0
        %466 = vmatprep.subr.mxu0 0.0
        %467 = vmatpush1.xpose.msra.mxu0 0.0
        %468 = vmatprep.subr.mxu0 0.0
        %469 = vmatpush1.xpose.msra.mxu0 0.0
        %470 = vmatprep.subr.mxu0 0.0
        %471 = vmatpush1.xpose.msra.mxu0 0.0
        %472 = vmatprep.subr.mxu0 0.0
        %473 = vmatpush1.xpose.msra.mxu0 0.0
        %474 = vmatprep.subr.mxu0 0.0
        %475 = vmatpush1.xpose.msra.mxu0 0.0
        %476 = vmatprep.subr.mxu0 0.0
        %477 = vmatpush1.xpose.msra.mxu0 0.0
        %478 = vmatprep.subr.mxu0 0.0
        %479 = vmatpush1.xpose.msra.mxu0 0.0
        %480 = vmatprep.mubr.f32.mxu0 0.0
        %481 = vmatmul.mubr.f32.gmra.mrb[0].mxu0 %v411
        %v482 = vpop.f32.mrb[0].mxu0
        %v483 = vadd.f32 %v330, %v482
        %v484 = vpop.f32.mrb[0].mxu0
        %485 = vdwg.mxu0
        %v487 = vsel %vm333, %v319, 0
        %v490 = vsel %vm333, %v323, 0
        %492 = vmatprep.subr.mxu0 0.0
        %493 = vmatpush1.xpose.msra.mxu0 %v490
        %494 = vmatprep.subr.mxu0 0.0
        %495 = vmatpush1.xpose.msra.mxu0 0.0
        %496 = vmatprep.subr.mxu0 0.0
        %497 = vmatpush1.xpose.msra.mxu0 0.0
        %498 = vmatprep.subr.mxu0 0.0
        %499 = vmatpush1.xpose.msra.mxu0 0.0
        %500 = vmatprep.subr.mxu0 0.0
        %501 = vmatpush1.xpose.msra.mxu0 0.0
        %502 = vmatprep.subr.mxu0 0.0
        %503 = vmatpush1.xpose.msra.mxu0 0.0
        %504 = vmatprep.subr.mxu0 0.0
        %505 = vmatpush1.xpose.msra.mxu0 0.0
        %506 = vmatprep.subr.mxu0 0.0
        %507 = vmatpush1.xpose.msra.mxu0 0.0
        %508 = vmatprep.subr.mxu0 0.0
        %509 = vmatpush1.xpose.msra.mxu0 0.0
        %510 = vmatprep.subr.mxu0 0.0
        %511 = vmatpush1.xpose.msra.mxu0 0.0
        %512 = vmatprep.subr.mxu0 0.0
        %513 = vmatpush1.xpose.msra.mxu0 0.0
        %514 = vmatprep.subr.mxu0 0.0
        %515 = vmatpush1.xpose.msra.mxu0 0.0
        %516 = vmatprep.subr.mxu0 0.0
        %517 = vmatpush1.xpose.msra.mxu0 0.0
        %518 = vmatprep.subr.mxu0 0.0
        %519 = vmatpush1.xpose.msra.mxu0 0.0
        %520 = vmatprep.subr.mxu0 0.0
        %521 = vmatpush1.xpose.msra.mxu0 0.0
        %522 = vmatprep.subr.mxu0 0.0
        %523 = vmatpush1.xpose.msra.mxu0 0.0
        %524 = vmatprep.subr.mxu0 0.0
        %525 = vmatpush1.xpose.msra.mxu0 0.0
        %526 = vmatprep.subr.mxu0 0.0
        %527 = vmatpush1.xpose.msra.mxu0 0.0
        %528 = vmatprep.subr.mxu0 0.0
        %529 = vmatpush1.xpose.msra.mxu0 0.0
        %530 = vmatprep.subr.mxu0 0.0
        %531 = vmatpush1.xpose.msra.mxu0 0.0
        %532 = vmatprep.subr.mxu0 0.0
        %533 = vmatpush1.xpose.msra.mxu0 0.0
        %534 = vmatprep.subr.mxu0 0.0
        %535 = vmatpush1.xpose.msra.mxu0 0.0
        %536 = vmatprep.subr.mxu0 0.0
        %537 = vmatpush1.xpose.msra.mxu0 0.0
        %538 = vmatprep.subr.mxu0 0.0
        %539 = vmatpush1.xpose.msra.mxu0 0.0
        %540 = vmatprep.subr.mxu0 0.0
        %541 = vmatpush1.xpose.msra.mxu0 0.0
        %542 = vmatprep.subr.mxu0 0.0
        %543 = vmatpush1.xpose.msra.mxu0 0.0
        %544 = vmatprep.subr.mxu0 0.0
        %545 = vmatpush1.xpose.msra.mxu0 0.0
        %546 = vmatprep.subr.mxu0 0.0
        %547 = vmatpush1.xpose.msra.mxu0 0.0
        %548 = vmatprep.subr.mxu0 0.0
        %549 = vmatpush1.xpose.msra.mxu0 0.0
        %550 = vmatprep.subr.mxu0 0.0
        %551 = vmatpush1.xpose.msra.mxu0 0.0
        %552 = vmatprep.subr.mxu0 0.0
        %553 = vmatpush1.xpose.msra.mxu0 0.0
        %554 = vmatprep.subr.mxu0 0.0
        %555 = vmatpush1.xpose.msra.mxu0 0.0
        %556 = vmatprep.mubr.f32.mxu0 0.0
        %557 = vmatmul.mubr.f32.gmra.mrb[0].mxu0 %v487
        %v558 = vpop.f32.mrb[0].mxu0
        %v559 = vadd.f32 %v331, %v558
        %v560 = vpop.f32.mrb[0].mxu0
        %561 = vdwg.mxu0
        %v563 = vsel %vm333, %v320, 0
        %v566 = vsel %vm333, %v324, 0
        %568 = vmatprep.subr.mxu0 0.0
        %569 = vmatpush1.xpose.msra.mxu0 %v566
        %570 = vmatprep.subr.mxu0 0.0
        %571 = vmatpush1.xpose.msra.mxu0 0.0
        %572 = vmatprep.subr.mxu0 0.0
        %573 = vmatpush1.xpose.msra.mxu0 0.0
        %574 = vmatprep.subr.mxu0 0.0
        %575 = vmatpush1.xpose.msra.mxu0 0.0
        %576 = vmatprep.subr.mxu0 0.0
        %577 = vmatpush1.xpose.msra.mxu0 0.0
        %578 = vmatprep.subr.mxu0 0.0
        %579 = vmatpush1.xpose.msra.mxu0 0.0
        %580 = vmatprep.subr.mxu0 0.0
        %581 = vmatpush1.xpose.msra.mxu0 0.0
        %582 = vmatprep.subr.mxu0 0.0
        %583 = vmatpush1.xpose.msra.mxu0 0.0
        %584 = vmatprep.subr.mxu0 0.0
        %585 = vmatpush1.xpose.msra.mxu0 0.0
        %586 = vmatprep.subr.mxu0 0.0
        %587 = vmatpush1.xpose.msra.mxu0 0.0
        %588 = vmatprep.subr.mxu0 0.0
        %589 = vmatpush1.xpose.msra.mxu0 0.0
        %590 = vmatprep.subr.mxu0 0.0
        %591 = vmatpush1.xpose.msra.mxu0 0.0
        %592 = vmatprep.subr.mxu0 0.0
        %593 = vmatpush1.xpose.msra.mxu0 0.0
        %594 = vmatprep.subr.mxu0 0.0
        %595 = vmatpush1.xpose.msra.mxu0 0.0
        %596 = vmatprep.subr.mxu0 0.0
        %597 = vmatpush1.xpose.msra.mxu0 0.0
        %598 = vmatprep.subr.mxu0 0.0
        %599 = vmatpush1.xpose.msra.mxu0 0.0
        %600 = vmatprep.subr.mxu0 0.0
        %601 = vmatpush1.xpose.msra.mxu0 0.0
        %602 = vmatprep.subr.mxu0 0.0
        %603 = vmatpush1.xpose.msra.mxu0 0.0
        %604 = vmatprep.subr.mxu0 0.0
        %605 = vmatpush1.xpose.msra.mxu0 0.0
        %606 = vmatprep.subr.mxu0 0.0
        %607 = vmatpush1.xpose.msra.mxu0 0.0
        %608 = vmatprep.subr.mxu0 0.0
        %609 = vmatpush1.xpose.msra.mxu0 0.0
        %610 = vmatprep.subr.mxu0 0.0
        %611 = vmatpush1.xpose.msra.mxu0 0.0
        %612 = vmatprep.subr.mxu0 0.0
        %613 = vmatpush1.xpose.msra.mxu0 0.0
        %614 = vmatprep.subr.mxu0 0.0
        %615 = vmatpush1.xpose.msra.mxu0 0.0
        %616 = vmatprep.subr.mxu0 0.0
        %617 = vmatpush1.xpose.msra.mxu0 0.0
        %618 = vmatprep.subr.mxu0 0.0
        %619 = vmatpush1.xpose.msra.mxu0 0.0
        %620 = vmatprep.subr.mxu0 0.0
        %621 = vmatpush1.xpose.msra.mxu0 0.0
        %622 = vmatprep.subr.mxu0 0.0
        %623 = vmatpush1.xpose.msra.mxu0 0.0
        %624 = vmatprep.subr.mxu0 0.0
        %625 = vmatpush1.xpose.msra.mxu0 0.0
        %626 = vmatprep.subr.mxu0 0.0
        %627 = vmatpush1.xpose.msra.mxu0 0.0
        %628 = vmatprep.subr.mxu0 0.0
        %629 = vmatpush1.xpose.msra.mxu0 0.0
        %630 = vmatprep.subr.mxu0 0.0
        %631 = vmatpush1.xpose.msra.mxu0 0.0
        %632 = vmatprep.mubr.f32.mxu0 0.0
        %633 = vmatmul.mubr.f32.gmra.mrb[0].mxu0 %v563
        %v634 = vpop.f32.mrb[0].mxu0
        %v635 = vadd.f32 %v332, %v634
        %v636 = vpop.f32.mrb[0].mxu0
        %637 = vdwg.mxu0
        %v638 = vld [vmem:[%s311] sm:$0x1]
        %v640 = vlaneseq
        %v641 = vshrl.u32 %v640, 7
        %v642 = vsub.s32 0, %v641
        %v643 = vrot.slane %v638, %v642
        %v645 = vadd.f32 %v407, %v643
        %v646 = vadd.f32 %v483, %v643
        %v647 = vadd.f32 %v559, %v643
        %v648 = vadd.f32 %v635, %v643
        %vm649 = vcmask 64512
        %v650 = vsel %vm649, %v645, -inf
        %651 = vmax.xlane.f32.xlu0 %v650
        %v652 = vpop.xlane.xlu0 %651
        %v653 = vsel %vm649, %v646, -inf
        %654 = vmax.xlane.f32.xlu0 %v653
        %v655 = vpop.xlane.xlu0 %654
        %v656 = vsel %vm649, %v647, -inf
        %657 = vmax.xlane.f32.xlu0 %v656
        %v658 = vpop.xlane.xlu0 %657
        %v659 = vsel %vm649, %v648, -inf
        %660 = vmax.xlane.f32.xlu0 %v659
        %v661 = vpop.xlane.xlu0 %660
        %v662 = vsub.f32 %v645, %v652
        %v663 = vsub.f32 %v646, %v655
        %v664 = vsub.f32 %v647, %v658
        %v665 = vsub.f32 %v648, %v661
        %v666 = vmul.f32 %v662, 1.442695
        %v667 = vpow.pop %v666
        %v668 = vmul.f32 %v663, 1.442695
        %v669 = vpow.pop %v668
        %v670 = vmul.f32 %v664, 1.442695
        %v671 = vpow.pop %v670
        %v672 = vmul.f32 %v665, 1.442695
        %v673 = vpow.pop %v672
        %v674 = vsel %vm649, %v667, 0.0
        %675 = vadd.xlane.f32.xlu0 %v674
        %v676 = vpop.xlane.xlu0 %675
        %v677 = vsel %vm649, %v669, 0.0
        %678 = vadd.xlane.f32.xlu0 %v677
        %v679 = vpop.xlane.xlu0 %678
        %v680 = vsel %vm649, %v671, 0.0
        %681 = vadd.xlane.f32.xlu0 %v680
        %v682 = vpop.xlane.xlu0 %681
        %v683 = vsel %vm649, %v673, 0.0
        %684 = vadd.xlane.f32.xlu0 %v683
        %v685 = vpop.xlane.xlu0 %684
        %v686 = vrcp.pop %v676
        %v687 = vrcp.pop %v679
        %v688 = vrcp.pop %v682
        %v689 = vrcp.pop %v685
        %v690 = vmul.f32 %v667, %v686
        %v691 = vmul.f32 %v669, %v687
        %v692 = vmul.f32 %v671, %v688
        %v693 = vmul.f32 %v673, %v689
        %694 = vst.msk [vmem:[%s293] sm:$0xff] %vm649, %v690
        %695 = vst.msk [vmem:[%s293 + $0x8] sm:$0xff] %vm649, %v691
        %696 = vst.msk [vmem:[%s293 + $0x10] sm:$0xff] %vm649, %v692
        %697 = vst.msk [vmem:[%s293 + $0x18] sm:$0xff] %vm649, %v693
        %v699 = vsel %vm649, %v690, 0
        %701 = vmatprep.subr.mxu0 0.0
        %702 = vmatpush1.msra.mxu0 %v325
        %703 = vmatprep.subr.mxu0 0.0
        %704 = vmatpush1.msra.mxu0 0.0
        %705 = vmatprep.subr.mxu0 0.0
        %706 = vmatpush1.msra.mxu0 0.0
        %707 = vmatprep.subr.mxu0 0.0
        %708 = vmatpush1.msra.mxu0 0.0
        %709 = vmatprep.subr.mxu0 0.0
        %710 = vmatpush1.msra.mxu0 0.0
        %711 = vmatprep.subr.mxu0 0.0
        %712 = vmatpush1.msra.mxu0 0.0
        %713 = vmatprep.subr.mxu0 0.0
        %714 = vmatpush1.msra.mxu0 0.0
        %715 = vmatprep.subr.mxu0 0.0
        %716 = vmatpush1.msra.mxu0 0.0
        %717 = vmatprep.subr.mxu0 0.0
        %718 = vmatpush1.msra.mxu0 0.0
        %719 = vmatprep.subr.mxu0 0.0
        %720 = vmatpush1.msra.mxu0 0.0
        %721 = vmatprep.subr.mxu0 0.0
        %722 = vmatpush1.msra.mxu0 0.0
        %723 = vmatprep.subr.mxu0 0.0
        %724 = vmatpush1.msra.mxu0 0.0
        %725 = vmatprep.subr.mxu0 0.0
        %726 = vmatpush1.msra.mxu0 0.0
        %727 = vmatprep.subr.mxu0 0.0
        %728 = vmatpush1.msra.mxu0 0.0
        %729 = vmatprep.subr.mxu0 0.0
        %730 = vmatpush1.msra.mxu0 0.0
        %731 = vmatprep.subr.mxu0 0.0
        %732 = vmatpush1.msra.mxu0 0.0
        %733 = vmatprep.subr.mxu0 0.0
        %734 = vmatpush1.msra.mxu0 0.0
        %735 = vmatprep.subr.mxu0 0.0
        %736 = vmatpush1.msra.mxu0 0.0
        %737 = vmatprep.subr.mxu0 0.0
        %738 = vmatpush1.msra.mxu0 0.0
        %739 = vmatprep.subr.mxu0 0.0
        %740 = vmatpush1.msra.mxu0 0.0
        %741 = vmatprep.subr.mxu0 0.0
        %742 = vmatpush1.msra.mxu0 0.0
        %743 = vmatprep.subr.mxu0 0.0
        %744 = vmatpush1.msra.mxu0 0.0
        %745 = vmatprep.subr.mxu0 0.0
        %746 = vmatpush1.msra.mxu0 0.0
        %747 = vmatprep.subr.mxu0 0.0
        %748 = vmatpush1.msra.mxu0 0.0
        %749 = vmatprep.subr.mxu0 0.0
        %750 = vmatpush1.msra.mxu0 0.0
        %751 = vmatprep.subr.mxu0 0.0
        %752 = vmatpush1.msra.mxu0 0.0
        %753 = vmatprep.subr.mxu0 0.0
        %754 = vmatpush1.msra.mxu0 0.0
        %755 = vmatprep.subr.mxu0 0.0
        %756 = vmatpush1.msra.mxu0 0.0
        %757 = vmatprep.subr.mxu0 0.0
        %758 = vmatpush1.msra.mxu0 0.0
        %759 = vmatprep.subr.mxu0 0.0
        %760 = vmatpush1.msra.mxu0 0.0
        %761 = vmatprep.subr.mxu0 0.0
        %762 = vmatpush1.msra.mxu0 0.0
        %763 = vmatprep.subr.mxu0 0.0
        %764 = vmatpush1.msra.mxu0 0.0
        %765 = vmatprep.mubr.f32.mxu0 0.0
        %766 = vmatmul.mubr.f32.gmra.mrb[0].mxu0 %v699
        %v767 = vpop.f32.mrb[0].mxu0
        %v768 = vadd.f32 0.0, %v767
        %v769 = vpop.f32.mrb[0].mxu0
        %770 = vdwg.mxu0
        %v772 = vsel %vm649, %v691, 0
        %774 = vmatprep.subr.mxu0 0.0
        %775 = vmatpush1.msra.mxu0 %v326
        %776 = vmatprep.subr.mxu0 0.0
        %777 = vmatpush1.msra.mxu0 0.0
        %778 = vmatprep.subr.mxu0 0.0
        %779 = vmatpush1.msra.mxu0 0.0
        %780 = vmatprep.subr.mxu0 0.0
        %781 = vmatpush1.msra.mxu0 0.0
        %782 = vmatprep.subr.mxu0 0.0
        %783 = vmatpush1.msra.mxu0 0.0
        %784 = vmatprep.subr.mxu0 0.0
        %785 = vmatpush1.msra.mxu0 0.0
        %786 = vmatprep.subr.mxu0 0.0
        %787 = vmatpush1.msra.mxu0 0.0
        %788 = vmatprep.subr.mxu0 0.0
        %789 = vmatpush1.msra.mxu0 0.0
        %790 = vmatprep.subr.mxu0 0.0
        %791 = vmatpush1.msra.mxu0 0.0
        %792 = vmatprep.subr.mxu0 0.0
        %793 = vmatpush1.msra.mxu0 0.0
        %794 = vmatprep.subr.mxu0 0.0
        %795 = vmatpush1.msra.mxu0 0.0
        %796 = vmatprep.subr.mxu0 0.0
        %797 = vmatpush1.msra.mxu0 0.0
        %798 = vmatprep.subr.mxu0 0.0
        %799 = vmatpush1.msra.mxu0 0.0
        %800 = vmatprep.subr.mxu0 0.0
        %801 = vmatpush1.msra.mxu0 0.0
        %802 = vmatprep.subr.mxu0 0.0
        %803 = vmatpush1.msra.mxu0 0.0
        %804 = vmatprep.subr.mxu0 0.0
        %805 = vmatpush1.msra.mxu0 0.0
        %806 = vmatprep.subr.mxu0 0.0
        %807 = vmatpush1.msra.mxu0 0.0
        %808 = vmatprep.subr.mxu0 0.0
        %809 = vmatpush1.msra.mxu0 0.0
        %810 = vmatprep.subr.mxu0 0.0
        %811 = vmatpush1.msra.mxu0 0.0
        %812 = vmatprep.subr.mxu0 0.0
        %813 = vmatpush1.msra.mxu0 0.0
        %814 = vmatprep.subr.mxu0 0.0
        %815 = vmatpush1.msra.mxu0 0.0
        %816 = vmatprep.subr.mxu0 0.0
        %817 = vmatpush1.msra.mxu0 0.0
        %818 = vmatprep.subr.mxu0 0.0
        %819 = vmatpush1.msra.mxu0 0.0
        %820 = vmatprep.subr.mxu0 0.0
        %821 = vmatpush1.msra.mxu0 0.0
        %822 = vmatprep.subr.mxu0 0.0
        %823 = vmatpush1.msra.mxu0 0.0
        %824 = vmatprep.subr.mxu0 0.0
        %825 = vmatpush1.msra.mxu0 0.0
        %826 = vmatprep.subr.mxu0 0.0
        %827 = vmatpush1.msra.mxu0 0.0
        %828 = vmatprep.subr.mxu0 0.0
        %829 = vmatpush1.msra.mxu0 0.0
        %830 = vmatprep.subr.mxu0 0.0
        %831 = vmatpush1.msra.mxu0 0.0
        %832 = vmatprep.subr.mxu0 0.0
        %833 = vmatpush1.msra.mxu0 0.0
        %834 = vmatprep.subr.mxu0 0.0
        %835 = vmatpush1.msra.mxu0 0.0
        %836 = vmatprep.subr.mxu0 0.0
        %837 = vmatpush1.msra.mxu0 0.0
        %838 = vmatprep.mubr.f32.mxu0 0.0
        %839 = vmatmul.mubr.f32.gmra.mrb[0].mxu0 %v772
        %v840 = vpop.f32.mrb[0].mxu0
        %v841 = vadd.f32 0.0, %v840
        %v842 = vpop.f32.mrb[0].mxu0
        %843 = vdwg.mxu0
        %v845 = vsel %vm649, %v692, 0
        %847 = vmatprep.subr.mxu0 0.0
        %848 = vmatpush1.msra.mxu0 %v327
        %849 = vmatprep.subr.mxu0 0.0
        %850 = vmatpush1.msra.mxu0 0.0
        %851 = vmatprep.subr.mxu0 0.0
        %852 = vmatpush1.msra.mxu0 0.0
        %853 = vmatprep.subr.mxu0 0.0
        %854 = vmatpush1.msra.mxu0 0.0
        %855 = vmatprep.subr.mxu0 0.0
        %856 = vmatpush1.msra.mxu0 0.0
        %857 = vmatprep.subr.mxu0 0.0
        %858 = vmatpush1.msra.mxu0 0.0
        %859 = vmatprep.subr.mxu0 0.0
        %860 = vmatpush1.msra.mxu0 0.0
        %861 = vmatprep.subr.mxu0 0.0
        %862 = vmatpush1.msra.mxu0 0.0
        %863 = vmatprep.subr.mxu0 0.0
        %864 = vmatpush1.msra.mxu0 0.0
        %865 = vmatprep.subr.mxu0 0.0
        %866 = vmatpush1.msra.mxu0 0.0
        %867 = vmatprep.subr.mxu0 0.0
        %868 = vmatpush1.msra.mxu0 0.0
        %869 = vmatprep.subr.mxu0 0.0
        %870 = vmatpush1.msra.mxu0 0.0
        %871 = vmatprep.subr.mxu0 0.0
        %872 = vmatpush1.msra.mxu0 0.0
        %873 = vmatprep.subr.mxu0 0.0
        %874 = vmatpush1.msra.mxu0 0.0
        %875 = vmatprep.subr.mxu0 0.0
        %876 = vmatpush1.msra.mxu0 0.0
        %877 = vmatprep.subr.mxu0 0.0
        %878 = vmatpush1.msra.mxu0 0.0
        %879 = vmatprep.subr.mxu0 0.0
        %880 = vmatpush1.msra.mxu0 0.0
        %881 = vmatprep.subr.mxu0 0.0
        %882 = vmatpush1.msra.mxu0 0.0
        %883 = vmatprep.subr.mxu0 0.0
        %884 = vmatpush1.msra.mxu0 0.0
        %885 = vmatprep.subr.mxu0 0.0
        %886 = vmatpush1.msra.mxu0 0.0
        %887 = vmatprep.subr.mxu0 0.0
        %888 = vmatpush1.msra.mxu0 0.0
        %889 = vmatprep.subr.mxu0 0.0
        %890 = vmatpush1.msra.mxu0 0.0
        %891 = vmatprep.subr.mxu0 0.0
        %892 = vmatpush1.msra.mxu0 0.0
        %893 = vmatprep.subr.mxu0 0.0
        %894 = vmatpush1.msra.mxu0 0.0
        %895 = vmatprep.subr.mxu0 0.0
        %896 = vmatpush1.msra.mxu0 0.0
        %897 = vmatprep.subr.mxu0 0.0
        %898 = vmatpush1.msra.mxu0 0.0
        %899 = vmatprep.subr.mxu0 0.0
        %900 = vmatpush1.msra.mxu0 0.0
        %901 = vmatprep.subr.mxu0 0.0
        %902 = vmatpush1.msra.mxu0 0.0
        %903 = vmatprep.subr.mxu0 0.0
        %904 = vmatpush1.msra.mxu0 0.0
        %905 = vmatprep.subr.mxu0 0.0
        %906 = vmatpush1.msra.mxu0 0.0
        %907 = vmatprep.subr.mxu0 0.0
        %908 = vmatpush1.msra.mxu0 0.0
        %909 = vmatprep.subr.mxu0 0.0
        %910 = vmatpush1.msra.mxu0 0.0
        %911 = vmatprep.mubr.f32.mxu0 0.0
        %912 = vmatmul.mubr.f32.gmra.mrb[0].mxu0 %v845
        %v913 = vpop.f32.mrb[0].mxu0
        %v914 = vadd.f32 0.0, %v913
        %v915 = vpop.f32.mrb[0].mxu0
        %916 = vdwg.mxu0
        %v918 = vsel %vm649, %v693, 0
        %920 = vmatprep.subr.mxu0 0.0
        %921 = vmatpush1.msra.mxu0 %v328
        %922 = vmatprep.subr.mxu0 0.0
        %923 = vmatpush1.msra.mxu0 0.0
        %924 = vmatprep.subr.mxu0 0.0
        %925 = vmatpush1.msra.mxu0 0.0
        %926 = vmatprep.subr.mxu0 0.0
        %927 = vmatpush1.msra.mxu0 0.0
        %928 = vmatprep.subr.mxu0 0.0
        %929 = vmatpush1.msra.mxu0 0.0
        %930 = vmatprep.subr.mxu0 0.0
        %931 = vmatpush1.msra.mxu0 0.0
        %932 = vmatprep.subr.mxu0 0.0
        %933 = vmatpush1.msra.mxu0 0.0
        %934 = vmatprep.subr.mxu0 0.0
        %935 = vmatpush1.msra.mxu0 0.0
        %936 = vmatprep.subr.mxu0 0.0
        %937 = vmatpush1.msra.mxu0 0.0
        %938 = vmatprep.subr.mxu0 0.0
        %939 = vmatpush1.msra.mxu0 0.0
        %940 = vmatprep.subr.mxu0 0.0
        %941 = vmatpush1.msra.mxu0 0.0
        %942 = vmatprep.subr.mxu0 0.0
        %943 = vmatpush1.msra.mxu0 0.0
        %944 = vmatprep.subr.mxu0 0.0
        %945 = vmatpush1.msra.mxu0 0.0
        %946 = vmatprep.subr.mxu0 0.0
        %947 = vmatpush1.msra.mxu0 0.0
        %948 = vmatprep.subr.mxu0 0.0
        %949 = vmatpush1.msra.mxu0 0.0
        %950 = vmatprep.subr.mxu0 0.0
        %951 = vmatpush1.msra.mxu0 0.0
        %952 = vmatprep.subr.mxu0 0.0
        %953 = vmatpush1.msra.mxu0 0.0
        %954 = vmatprep.subr.mxu0 0.0
        %955 = vmatpush1.msra.mxu0 0.0
        %956 = vmatprep.subr.mxu0 0.0
        %957 = vmatpush1.msra.mxu0 0.0
        %958 = vmatprep.subr.mxu0 0.0
        %959 = vmatpush1.msra.mxu0 0.0
        %960 = vmatprep.subr.mxu0 0.0
        %961 = vmatpush1.msra.mxu0 0.0
        %962 = vmatprep.subr.mxu0 0.0
        %963 = vmatpush1.msra.mxu0 0.0
        %964 = vmatprep.subr.mxu0 0.0
        %965 = vmatpush1.msra.mxu0 0.0
        %966 = vmatprep.subr.mxu0 0.0
        %967 = vmatpush1.msra.mxu0 0.0
        %968 = vmatprep.subr.mxu0 0.0
        %969 = vmatpush1.msra.mxu0 0.0
        %970 = vmatprep.subr.mxu0 0.0
        %971 = vmatpush1.msra.mxu0 0.0
        %972 = vmatprep.subr.mxu0 0.0
        %973 = vmatpush1.msra.mxu0 0.0
        %974 = vmatprep.subr.mxu0 0.0
        %975 = vmatpush1.msra.mxu0 0.0
        %976 = vmatprep.subr.mxu0 0.0
        %977 = vmatpush1.msra.mxu0 0.0
        %978 = vmatprep.subr.mxu0 0.0
        %979 = vmatpush1.msra.mxu0 0.0
        %980 = vmatprep.subr.mxu0 0.0
        %981 = vmatpush1.msra.mxu0 0.0
        %982 = vmatprep.subr.mxu0 0.0
        %983 = vmatpush1.msra.mxu0 0.0
        %984 = vmatprep.mubr.f32.mxu0 0.0
        %985 = vmatmul.mubr.f32.gmra.mrb[0].mxu0 %v918
        %v986 = vpop.f32.mrb[0].mxu0
        %v987 = vadd.f32 0.0, %v986
        %v988 = vpop.f32.mrb[0].mxu0
        %989 = vdwg.mxu0
        %990 = vst.msk [vmem:[%s316] sm:$0xff] %vm333, %v768
        %991 = vst.msk [vmem:[%s316 + $0x8] sm:$0xff] %vm333, %v841
        %992 = vst.msk [vmem:[%s316 + $0x10] sm:$0xff] %vm333, %v914
        %993 = vst.msk [vmem:[%s316 + $0x18] sm:$0xff] %vm333, %v987
        %p994 = scmp.lt.s32.totalorder %s21, 1
        %s995 = scalar_select %p994, %s21, 1
        %s996 = smul.addr %s995, 4
        %s997 = smul.addr %s996, 8
        %s998 = scalar_lea.vmem %s5, %s997
        %s999 = sand.u32 %s180, 1
        %s1000 = scalar_lea.sflag [#allocation3], %s999
        %s1001 = sand.u32 %s180, 1
        %s1002 = smul.addr %s1001, 32
        %s1003 = scalar_lea.vmem [#allocation2], %s1002
        // Predicated region
        $region41: #{_lambda_.30} parent=39 // pred_check
          %p1004 = pneg %p164
        $region42: #{_lambda_.30} parent=39 // pred_check_branch
          %1006 = sbr.rel (%p1004) target = $region44
        $region43: #{_lambda_.30} parent=39 // pred_region
          _
        $region44: #{_lambda_.30} parent=39 // pred_fallthru
          _
        // Predicated region
        $region45: #{_lambda_.30} parent=39 // pred_check
          %p1007 = pneg %p190
        $region46: #{_lambda_.30} parent=39 // pred_check_branch
          %1009 = sbr.rel (%p1007) target = $region48
        $region47: #{_lambda_.30} parent=39 // pred_region
          %s1011 = ssub.s32 512, 512
          %1012 = vsyncadd %s1000, %s1011
          %s1013 = smul.addr %s21, 4
          %s1014 = smul.addr %s1013, 128
          %s1015 = scalar_lea.hbm %s6, %s1014
          %s1016 = sshll.u32 %s1003, 4
          %s1017 = int_to_ptr.vmem [resolvable:$true] %s1016
          %1022 = dma.vmem_to_hbm [thread:$0]  %s1017, 512, %s1015, %s1000, 128, 128, 8
        $region48: #{_lambda_.30} parent=39 // pred_fallthru
          _
      $region40: #{_lambda_.30} parent=5 // pred_fallthru
        _
      %p1023 = scmp.le.s32.totalorder 2, %s16
      // Predicated region
      $region49: #{_lambda_.30} parent=5 // pred_check
        %p1024 = pneg %p1023
      $region50: #{_lambda_.30} parent=5 // pred_check_branch
        %1026 = sbr.rel (%p1024) target = $region52
      $region51: #{_lambda_.30} parent=5 // pred_region
        %s1027 = ssub.s32 %s16, 2
        // Predicated region
        $region53: #{_lambda_.30} parent=51 // pred_check
          %p1028 = pneg %p170
        $region54: #{_lambda_.30} parent=51 // pred_check_branch
          %1030 = sbr.rel (%p1028) target = $region56
        $region55: #{_lambda_.30} parent=51 // pred_region
          %p1031 = scmp.lt.s32.totalorder %s22, 1
          %s1032 = scalar_select %p1031, %s22, 1
          %s1033 = smul.addr %s1032, 4
          %s1034 = smul.addr %s1033, 8
          %s1035 = scalar_lea.vmem %s5, %s1034
        $region56: #{_lambda_.30} parent=51 // pred_fallthru
          _
        // Predicated region
        $region57: #{_lambda_.30} parent=51 // pred_check
          %p1036 = pneg %p196
        $region58: #{_lambda_.30} parent=51 // pred_check_branch
          %1038 = sbr.rel (%p1036) target = $region60
        $region59: #{_lambda_.30} parent=51 // pred_region
          %s1039 = sand.u32 %s181, 1
          %s1040 = scalar_lea.sflag [#allocation3], %s1039
          %s1041 = sand.u32 %s181, 1
          %s1042 = smul.addr %s1041, 32
          %s1043 = scalar_lea.vmem [#allocation2], %s1042
          %1044 = dma.done %s1040, 512
        $region60: #{_lambda_.30} parent=51 // pred_fallthru
          _
      $region52: #{_lambda_.30} parent=5 // pred_fallthru
        _
    $region6: #{_lambda_.30} parent=1 // loop_footer
      %s20 = sadd.s32 1, %s16
    $region7: #{_lambda_.30} parent=1 // loop_footer_branch
      %15 = sbr.rel target = $region3
    $region8: #{_lambda_.30} parent=1 // loop_exit
      _
    %1045 = vsyncpa [#allocation3], 1
    %s1046 = scalar_lea.sflag [#allocation3], 1
    %1047 = vsyncpa %s1046, 1

// kernel: _lambda_.32
$region0: #{_lambda_.32}
  #allocation0 [shape = 'u32[]', space=smem, size = 0x4, offset = 0x4, fixed_abs, tag = 'smem constant byte address 0x4 - core index']
  #allocation1 [shape = 'u32[144,128]{1,0:T(1,128)}', space=vmem, size = 0x12000, scoped, tag = 'internal scratch']
  #allocation2 [shape = 'f32[16,128]{1,0:T(8,128)}', space=vmem, size = 0x2000, scoped, tag = 'scratch operand']
  #allocation3 [shape = 'f32[16,128]{1,0:T(8,128)}', space=vmem, size = 0x2000, scoped, tag = 'scratch operand']
  %s0 = inlined_call_operand.vmem [shape: f32[16,128], index: 0, kind: input, shape index: {}]
  %s1 = inlined_call_operand.vmem [shape: f32[1,128], index: 1, kind: input, shape index: {}]
  %s2 = inlined_call_operand.vmem [shape: f32[128,256], index: 2, kind: input, shape index: {}]
  %s3 = inlined_call_operand.vmem [shape: f32[256,128], index: 3, kind: input, shape index: {}]
  %s4 = inlined_call_operand.vmem [shape: f32[16,128], index: 4, kind: output, shape index: {}]
  %s5 = sld [smem:[#allocation0]]
  $region34: #{_lambda_.32} parent=0
    _
  %s7 = ssub.s32 1, %s5
  %s8 = scalar_select 0, %s7, %s5
  // Predicated region
  $region2: #{_lambda_.32} parent=0 // pred_check
    _
  $region3: #{_lambda_.32} parent=0 // pred_check_branch
    %10 = sbr.rel (0) target = $region5
  $region4: #{_lambda_.32} parent=0 // pred_region
    _
  $region5: #{_lambda_.32} parent=0 // pred_fallthru
    _
  // Predicated region
  $region6: #{_lambda_.32} parent=0 // pred_check
    _
  $region7: #{_lambda_.32} parent=0 // pred_check_branch
    %12 = sbr.rel (0) target = $region9
  $region8: #{_lambda_.32} parent=0 // pred_region
    _
  $region9: #{_lambda_.32} parent=0 // pred_fallthru
    _
  // Predicated region
  $region10: #{_lambda_.32} parent=0 // pred_check
    _
  $region11: #{_lambda_.32} parent=0 // pred_check_branch
    %14 = sbr.rel (0) target = $region13
  $region12: #{_lambda_.32} parent=0 // pred_region
    _
  $region13: #{_lambda_.32} parent=0 // pred_fallthru
    _
  // Predicated region
  $region14: #{_lambda_.32} parent=0 // pred_check
    _
  $region15: #{_lambda_.32} parent=0 // pred_check_branch
    %16 = sbr.rel (0) target = $region17
  $region16: #{_lambda_.32} parent=0 // pred_region
    _
  $region17: #{_lambda_.32} parent=0 // pred_fallthru
    _
  %p17 = scmp.eq.s32.totalorder 0, 0
  // Predicated region
  $region18: #{_lambda_.32} parent=0 // pred_check
    %p18 = pneg %p17
  $region19: #{_lambda_.32} parent=0 // pred_check_branch
    %20 = sbr.rel (%p18) target = $region21
  $region20: #{_lambda_.32} parent=0 // pred_region
    %v21 = vld [vmem:[%s0] sm:$0xff]
    %v22 = vld [vmem:[%s0 + $0x8] sm:$0xff]
    %v23 = vmul.f32 %v21, %v21
    %v24 = vmul.f32 %v22, %v22
    %25 = vadd.xlane.f32.xlu0 %v23
    %v26 = vpop.xlane.xlu0 %25
    %27 = vadd.xlane.f32.xlu0 %v24
    %v28 = vpop.xlane.xlu0 %27
    %v29 = vrcp.pop 128.0
    %v30 = vmul.f32 %v26, %v29
    %v31 = vmul.f32 %v28, %v29
    %v32 = vld [vmem:[%s1] sm:$0x1]
    %v33 = vadd.f32 %v30, 1e-06
    %v34 = vadd.f32 %v31, 1e-06
    %v35 = vrsqrt.pop %v33
    %v36 = vrsqrt.pop %v34
    %v37 = vmul.f32 %v21, %v35
    %v38 = vmul.f32 %v22, %v36
    %v40 = vlaneseq
    %v41 = vshrl.u32 %v40, 7
    %v42 = vsub.s32 0, %v41
    %v43 = vrot.slane %v32, %v42
    %v45 = vmul.f32 %v43, %v37
    %v46 = vmul.f32 %v43, %v38
    %47 = vst [vmem:[#allocation2] sm:$0xff] %v45
    %48 = vst [vmem:[#allocation2 + $0x8] sm:$0xff] %v46
    %49 = vst [vmem:[#allocation3] sm:$0xff] 0.0
    %50 = vst [vmem:[#allocation3 + $0x8] sm:$0xff] 0.0
  $region21: #{_lambda_.32} parent=0 // pred_fallthru
    _
  %v51 = vld [vmem:[#allocation2] sm:$0xff]
  %v52 = vld [vmem:[#allocation2 + $0x8] sm:$0xff]
  %v53 = vld [vmem:[%s2] sm:$0xff]
  %v54 = vld [vmem:[%s2 + $0x8] sm:$0xff]
  %v55 = vld [vmem:[%s2 + $0x10] sm:$0xff]
  %v56 = vld [vmem:[%s2 + $0x18] sm:$0xff]
  %v57 = vld [vmem:[%s2 + $0x20] sm:$0xff]
  %v58 = vld [vmem:[%s2 + $0x28] sm:$0xff]
  %v59 = vld [vmem:[%s2 + $0x30] sm:$0xff]
  %v60 = vld [vmem:[%s2 + $0x38] sm:$0xff]
  %v61 = vld [vmem:[%s2 + $0x40] sm:$0xff]
  %v62 = vld [vmem:[%s2 + $0x48] sm:$0xff]
  %v63 = vld [vmem:[%s2 + $0x50] sm:$0xff]
  %v64 = vld [vmem:[%s2 + $0x58] sm:$0xff]
  %v65 = vld [vmem:[%s2 + $0x60] sm:$0xff]
  %v66 = vld [vmem:[%s2 + $0x68] sm:$0xff]
  %v67 = vld [vmem:[%s2 + $0x70] sm:$0xff]
  %v68 = vld [vmem:[%s2 + $0x78] sm:$0xff]
  %v69 = vld [vmem:[%s2 + $0x80] sm:$0xff]
  %v70 = vld [vmem:[%s2 + $0x88] sm:$0xff]
  %v71 = vld [vmem:[%s2 + $0x90] sm:$0xff]
  %v72 = vld [vmem:[%s2 + $0x98] sm:$0xff]
  %v73 = vld [vmem:[%s2 + $0xa0] sm:$0xff]
  %v74 = vld [vmem:[%s2 + $0xa8] sm:$0xff]
  %v75 = vld [vmem:[%s2 + $0xb0] sm:$0xff]
  %v76 = vld [vmem:[%s2 + $0xb8] sm:$0xff]
  %v77 = vld [vmem:[%s2 + $0xc0] sm:$0xff]
  %v78 = vld [vmem:[%s2 + $0xc8] sm:$0xff]
  %v79 = vld [vmem:[%s2 + $0xd0] sm:$0xff]
  %v80 = vld [vmem:[%s2 + $0xd8] sm:$0xff]
  %v81 = vld [vmem:[%s2 + $0xe0] sm:$0xff]
  %v82 = vld [vmem:[%s2 + $0xe8] sm:$0xff]
  %v83 = vld [vmem:[%s2 + $0xf0] sm:$0xff]
  %v84 = vld [vmem:[%s2 + $0xf8] sm:$0xff]
  %85 = vmatprep.subr.mxu0 %v54
  %86 = vmatpush1.msra.mxu0 %v53
  %87 = vmatprep.subr.mxu0 %v56
  %88 = vmatpush1.msra.mxu0 %v55
  %89 = vmatprep.subr.mxu0 %v58
  %90 = vmatpush1.msra.mxu0 %v57
  %91 = vmatprep.subr.mxu0 %v60
  %92 = vmatpush1.msra.mxu0 %v59
  %93 = vmatprep.subr.mxu0 %v62
  %94 = vmatpush1.msra.mxu0 %v61
  %95 = vmatprep.subr.mxu0 %v64
  %96 = vmatpush1.msra.mxu0 %v63
  %97 = vmatprep.subr.mxu0 %v66
  %98 = vmatpush1.msra.mxu0 %v65
  %99 = vmatprep.subr.mxu0 %v68
  %100 = vmatpush1.msra.mxu0 %v67
  %101 = vmatprep.subr.mxu0 %v70
  %102 = vmatpush1.msra.mxu0 %v69
  %103 = vmatprep.subr.mxu0 %v72
  %104 = vmatpush1.msra.mxu0 %v71
  %105 = vmatprep.subr.mxu0 %v74
  %106 = vmatpush1.msra.mxu0 %v73
  %107 = vmatprep.subr.mxu0 %v76
  %108 = vmatpush1.msra.mxu0 %v75
  %109 = vmatprep.subr.mxu0 %v78
  %110 = vmatpush1.msra.mxu0 %v77
  %111 = vmatprep.subr.mxu0 %v80
  %112 = vmatpush1.msra.mxu0 %v79
  %113 = vmatprep.subr.mxu0 %v82
  %114 = vmatpush1.msra.mxu0 %v81
  %115 = vmatprep.subr.mxu0 %v84
  %116 = vmatpush1.msra.mxu0 %v83
  %117 = vmatprep.subr.mxu0 0.0
  %118 = vmatpush1.msra.mxu0 0.0
  %119 = vmatprep.subr.mxu0 0.0
  %120 = vmatpush1.msra.mxu0 0.0
  %121 = vmatprep.subr.mxu0 0.0
  %122 = vmatpush1.msra.mxu0 0.0
  %123 = vmatprep.subr.mxu0 0.0
  %124 = vmatpush1.msra.mxu0 0.0
  %125 = vmatprep.subr.mxu0 0.0
  %126 = vmatpush1.msra.mxu0 0.0
  %127 = vmatprep.subr.mxu0 0.0
  %128 = vmatpush1.msra.mxu0 0.0
  %129 = vmatprep.subr.mxu0 0.0
  %130 = vmatpush1.msra.mxu0 0.0
  %131 = vmatprep.subr.mxu0 0.0
  %132 = vmatpush1.msra.mxu0 0.0
  %133 = vmatprep.subr.mxu0 0.0
  %134 = vmatpush1.msra.mxu0 0.0
  %135 = vmatprep.subr.mxu0 0.0
  %136 = vmatpush1.msra.mxu0 0.0
  %137 = vmatprep.subr.mxu0 0.0
  %138 = vmatpush1.msra.mxu0 0.0
  %139 = vmatprep.subr.mxu0 0.0
  %140 = vmatpush1.msra.mxu0 0.0
  %141 = vmatprep.subr.mxu0 0.0
  %142 = vmatpush1.msra.mxu0 0.0
  %143 = vmatprep.subr.mxu0 0.0
  %144 = vmatpush1.msra.mxu0 0.0
  %145 = vmatprep.subr.mxu0 0.0
  %146 = vmatpush1.msra.mxu0 0.0
  %147 = vmatprep.subr.mxu0 0.0
  %148 = vmatpush1.msra.mxu0 0.0
  %149 = vmatprep.mubr.f32.mxu0 0.0
  %150 = vmatmul.mubr.f32.gmra.mrb[0].mxu0 %v51
  %v151 = vpop.f32.mrb[0].mxu0
  %v152 = vadd.f32 0.0, %v151
  %v153 = vpop.f32.mrb[0].mxu0
  %v154 = vadd.f32 0.0, %v153
  %155 = vmatprep.mubr.f32.mxu0 0.0
  %156 = vmatmul.mubr.f32.gmra.mrb[0].mxu0 %v52
  %v157 = vpop.f32.mrb[0].mxu0
  %v158 = vadd.f32 0.0, %v157
  %v159 = vpop.f32.mrb[0].mxu0
  %v160 = vadd.f32 0.0, %v159
  %161 = vdwg.mxu0
  %v162 = vmax.f32 %v152, 0.0
  %v163 = vmax.f32 %v154, 0.0
  %v164 = vmax.f32 %v158, 0.0
  %v165 = vmax.f32 %v160, 0.0
  %v166 = vld [vmem:[#allocation3] sm:$0xff]
  %v167 = vld [vmem:[#allocation3 + $0x8] sm:$0xff]
  %v168 = vld [vmem:[%s3] sm:$0xff]
  %v169 = vld [vmem:[%s3 + $0x8] sm:$0xff]
  %v170 = vld [vmem:[%s3 + $0x10] sm:$0xff]
  %v171 = vld [vmem:[%s3 + $0x18] sm:$0xff]
  %v172 = vld [vmem:[%s3 + $0x20] sm:$0xff]
  %v173 = vld [vmem:[%s3 + $0x28] sm:$0xff]
  %v174 = vld [vmem:[%s3 + $0x30] sm:$0xff]
  %v175 = vld [vmem:[%s3 + $0x38] sm:$0xff]
  %v176 = vld [vmem:[%s3 + $0x40] sm:$0xff]
  %v177 = vld [vmem:[%s3 + $0x48] sm:$0xff]
  %v178 = vld [vmem:[%s3 + $0x50] sm:$0xff]
  %v179 = vld [vmem:[%s3 + $0x58] sm:$0xff]
  %v180 = vld [vmem:[%s3 + $0x60] sm:$0xff]
  %v181 = vld [vmem:[%s3 + $0x68] sm:$0xff]
  %v182 = vld [vmem:[%s3 + $0x70] sm:$0xff]
  %v183 = vld [vmem:[%s3 + $0x78] sm:$0xff]
  %v184 = vld [vmem:[%s3 + $0x80] sm:$0xff]
  %v185 = vld [vmem:[%s3 + $0x88] sm:$0xff]
  %v186 = vld [vmem:[%s3 + $0x90] sm:$0xff]
  %v187 = vld [vmem:[%s3 + $0x98] sm:$0xff]
  %v188 = vld [vmem:[%s3 + $0xa0] sm:$0xff]
  %v189 = vld [vmem:[%s3 + $0xa8] sm:$0xff]
  %v190 = vld [vmem:[%s3 + $0xb0] sm:$0xff]
  %v191 = vld [vmem:[%s3 + $0xb8] sm:$0xff]
  %v192 = vld [vmem:[%s3 + $0xc0] sm:$0xff]
  %v193 = vld [vmem:[%s3 + $0xc8] sm:$0xff]
  %v194 = vld [vmem:[%s3 + $0xd0] sm:$0xff]
  %v195 = vld [vmem:[%s3 + $0xd8] sm:$0xff]
  %v196 = vld [vmem:[%s3 + $0xe0] sm:$0xff]
  %v197 = vld [vmem:[%s3 + $0xe8] sm:$0xff]
  %v198 = vld [vmem:[%s3 + $0xf0] sm:$0xff]
  %v199 = vld [vmem:[%s3 + $0xf8] sm:$0xff]
  %200 = vmatprep.subr.mxu0 0.0
  %201 = vmatpush1.msra.mxu0 %v168
  %202 = vmatprep.subr.mxu0 0.0
  %203 = vmatpush1.msra.mxu0 %v169
  %204 = vmatprep.subr.mxu0 0.0
  %205 = vmatpush1.msra.mxu0 %v170
  %206 = vmatprep.subr.mxu0 0.0
  %207 = vmatpush1.msra.mxu0 %v171
  %208 = vmatprep.subr.mxu0 0.0
  %209 = vmatpush1.msra.mxu0 %v172
  %210 = vmatprep.subr.mxu0 0.0
  %211 = vmatpush1.msra.mxu0 %v173
  %212 = vmatprep.subr.mxu0 0.0
  %213 = vmatpush1.msra.mxu0 %v174
  %214 = vmatprep.subr.mxu0 0.0
  %215 = vmatpush1.msra.mxu0 %v175
  %216 = vmatprep.subr.mxu0 0.0
  %217 = vmatpush1.msra.mxu0 %v176
  %218 = vmatprep.subr.mxu0 0.0
  %219 = vmatpush1.msra.mxu0 %v177
  %220 = vmatprep.subr.mxu0 0.0
  %221 = vmatpush1.msra.mxu0 %v178
  %222 = vmatprep.subr.mxu0 0.0
  %223 = vmatpush1.msra.mxu0 %v179
  %224 = vmatprep.subr.mxu0 0.0
  %225 = vmatpush1.msra.mxu0 %v180
  %226 = vmatprep.subr.mxu0 0.0
  %227 = vmatpush1.msra.mxu0 %v181
  %228 = vmatprep.subr.mxu0 0.0
  %229 = vmatpush1.msra.mxu0 %v182
  %230 = vmatprep.subr.mxu0 0.0
  %231 = vmatpush1.msra.mxu0 %v183
  %232 = vmatprep.subr.mxu0 0.0
  %233 = vmatpush1.msra.mxu0 %v184
  %234 = vmatprep.subr.mxu0 0.0
  %235 = vmatpush1.msra.mxu0 %v185
  %236 = vmatprep.subr.mxu0 0.0
  %237 = vmatpush1.msra.mxu0 %v186
  %238 = vmatprep.subr.mxu0 0.0
  %239 = vmatpush1.msra.mxu0 %v187
  %240 = vmatprep.subr.mxu0 0.0
  %241 = vmatpush1.msra.mxu0 %v188
  %242 = vmatprep.subr.mxu0 0.0
  %243 = vmatpush1.msra.mxu0 %v189
  %244 = vmatprep.subr.mxu0 0.0
  %245 = vmatpush1.msra.mxu0 %v190
  %246 = vmatprep.subr.mxu0 0.0
  %247 = vmatpush1.msra.mxu0 %v191
  %248 = vmatprep.subr.mxu0 0.0
  %249 = vmatpush1.msra.mxu0 %v192
  %250 = vmatprep.subr.mxu0 0.0
  %251 = vmatpush1.msra.mxu0 %v193
  %252 = vmatprep.subr.mxu0 0.0
  %253 = vmatpush1.msra.mxu0 %v194
  %254 = vmatprep.subr.mxu0 0.0
  %255 = vmatpush1.msra.mxu0 %v195
  %256 = vmatprep.subr.mxu0 0.0
  %257 = vmatpush1.msra.mxu0 %v196
  %258 = vmatprep.subr.mxu0 0.0
  %259 = vmatpush1.msra.mxu0 %v197
  %260 = vmatprep.subr.mxu0 0.0
  %261 = vmatpush1.msra.mxu0 %v198
  %262 = vmatprep.subr.mxu0 0.0
  %263 = vmatpush1.msra.mxu0 %v199
  %264 = vmatprep.mubr.f32.mxu0 %v163
  %265 = vmatmul.mubr.f32.gmra.mrb[0].mxu0 %v162
  %v266 = vpop.f32.mrb[0].mxu0
  %v267 = vadd.f32 0.0, %v266
  %v268 = vpop.f32.mrb[0].mxu0
  %269 = vmatprep.mubr.f32.mxu0 %v165
  %270 = vmatmul.mubr.f32.gmra.mrb[0].mxu0 %v164
  %v271 = vpop.f32.mrb[0].mxu0
  %v272 = vadd.f32 0.0, %v271
  %v273 = vpop.f32.mrb[0].mxu0
  %274 = vdwg.mxu0
  %v275 = vadd.f32 %v166, %v267
  %v276 = vadd.f32 %v167, %v272
  %277 = vst [vmem:[#allocation3] sm:$0xff] %v275
  %278 = vst [vmem:[#allocation3 + $0x8] sm:$0xff] %v276
  // Predicated region
  $region22: #{_lambda_.32} parent=0 // pred_check
    %p279 = pneg %p17
  $region23: #{_lambda_.32} parent=0 // pred_check_branch
    %281 = sbr.rel (%p279) target = $region25
  $region24: #{_lambda_.32} parent=0 // pred_region
    %v282 = vld [vmem:[#allocation3] sm:$0xff]
    %v283 = vld [vmem:[#allocation3 + $0x8] sm:$0xff]
    %v284 = vld [vmem:[%s0] sm:$0xff]
    %v285 = vld [vmem:[%s0 + $0x8] sm:$0xff]
    %v286 = vadd.f32 %v282, %v284
    %v287 = vadd.f32 %v283, %v285
    %288 = vst [vmem:[%s4] sm:$0xff] %v286
    %289 = vst [vmem:[%s4 + $0x8] sm:$0xff] %v287
  $region25: #{_lambda_.32} parent=0 // pred_fallthru
    _
  // Predicated region
  $region26: #{_lambda_.32} parent=0 // pred_check
    _
  $region27: #{_lambda_.32} parent=0 // pred_check_branch
    %291 = sbr.rel (0) target = $region29
  $region28: #{_lambda_.32} parent=0 // pred_region
    _
  $region29: #{_lambda_.32} parent=0 // pred_fallthru
    _
  // Predicated region
  $region30: #{_lambda_.32} parent=0 // pred_check
    _
  $region31: #{_lambda_.32} parent=0 // pred_check_branch
    %293 = sbr.rel (0) target = $region33
  $region32: #{_lambda_.32} parent=0 // pred_region
    _
  $region33: #{_lambda_.32} parent=0 // pred_fallthru
    _

// kernel: _lambda_.31
$region0: #{_lambda_.31}
  #allocation0 [shape = 'u32[]', space=smem, size = 0x4, offset = 0x4, fixed_abs, tag = 'smem constant byte address 0x4 - core index']
  #allocation1 [shape = 'u32[144,128]{1,0:T(1,128)}', space=vmem, size = 0x12000, scoped, tag = 'internal scratch']
  %s0 = inlined_call_operand.vmem [shape: f32[16,128], index: 0, kind: input, shape index: {}]
  %s1 = inlined_call_operand.vmem [shape: f32[128,128], index: 1, kind: input, shape index: {}]
  %s2 = inlined_call_operand.vmem [shape: f32[16,128], index: 2, kind: input, shape index: {}]
  %s3 = inlined_call_operand.vmem [shape: f32[16,128], index: 3, kind: output, shape index: {}]
  %s4 = sld [smem:[#allocation0]]
  $region22: #{_lambda_.31} parent=0
    _
  %s6 = ssub.s32 1, %s4
  %s7 = scalar_select 0, %s6, %s4
  // Predicated region
  $region2: #{_lambda_.31} parent=0 // pred_check
    _
  $region3: #{_lambda_.31} parent=0 // pred_check_branch
    %9 = sbr.rel (0) target = $region5
  $region4: #{_lambda_.31} parent=0 // pred_region
    _
  $region5: #{_lambda_.31} parent=0 // pred_fallthru
    _
  // Predicated region
  $region6: #{_lambda_.31} parent=0 // pred_check
    _
  $region7: #{_lambda_.31} parent=0 // pred_check_branch
    %11 = sbr.rel (0) target = $region9
  $region8: #{_lambda_.31} parent=0 // pred_region
    _
  $region9: #{_lambda_.31} parent=0 // pred_fallthru
    _
  // Predicated region
  $region10: #{_lambda_.31} parent=0 // pred_check
    _
  $region11: #{_lambda_.31} parent=0 // pred_check_branch
    %13 = sbr.rel (0) target = $region13
  $region12: #{_lambda_.31} parent=0 // pred_region
    _
  $region13: #{_lambda_.31} parent=0 // pred_fallthru
    _
  %v14 = vld [vmem:[%s0] sm:$0xff]
  %v15 = vld [vmem:[%s0 + $0x8] sm:$0xff]
  %v16 = vld [vmem:[%s1] sm:$0xff]
  %v17 = vld [vmem:[%s1 + $0x8] sm:$0xff]
  %v18 = vld [vmem:[%s1 + $0x10] sm:$0xff]
  %v19 = vld [vmem:[%s1 + $0x18] sm:$0xff]
  %v20 = vld [vmem:[%s1 + $0x20] sm:$0xff]
  %v21 = vld [vmem:[%s1 + $0x28] sm:$0xff]
  %v22 = vld [vmem:[%s1 + $0x30] sm:$0xff]
  %v23 = vld [vmem:[%s1 + $0x38] sm:$0xff]
  %v24 = vld [vmem:[%s1 + $0x40] sm:$0xff]
  %v25 = vld [vmem:[%s1 + $0x48] sm:$0xff]
  %v26 = vld [vmem:[%s1 + $0x50] sm:$0xff]
  %v27 = vld [vmem:[%s1 + $0x58] sm:$0xff]
  %v28 = vld [vmem:[%s1 + $0x60] sm:$0xff]
  %v29 = vld [vmem:[%s1 + $0x68] sm:$0xff]
  %v30 = vld [vmem:[%s1 + $0x70] sm:$0xff]
  %v31 = vld [vmem:[%s1 + $0x78] sm:$0xff]
  %v32 = vld [vmem:[%s2] sm:$0xff]
  %v33 = vld [vmem:[%s2 + $0x8] sm:$0xff]
  %34 = vmatprep.subr.mxu0 0.0
  %35 = vmatpush1.msra.mxu0 %v16
  %36 = vmatprep.subr.mxu0 0.0
  %37 = vmatpush1.msra.mxu0 %v17
  %38 = vmatprep.subr.mxu0 0.0
  %39 = vmatpush1.msra.mxu0 %v18
  %40 = vmatprep.subr.mxu0 0.0
  %41 = vmatpush1.msra.mxu0 %v19
  %42 = vmatprep.subr.mxu0 0.0
  %43 = vmatpush1.msra.mxu0 %v20
  %44 = vmatprep.subr.mxu0 0.0
  %45 = vmatpush1.msra.mxu0 %v21
  %46 = vmatprep.subr.mxu0 0.0
  %47 = vmatpush1.msra.mxu0 %v22
  %48 = vmatprep.subr.mxu0 0.0
  %49 = vmatpush1.msra.mxu0 %v23
  %50 = vmatprep.subr.mxu0 0.0
  %51 = vmatpush1.msra.mxu0 %v24
  %52 = vmatprep.subr.mxu0 0.0
  %53 = vmatpush1.msra.mxu0 %v25
  %54 = vmatprep.subr.mxu0 0.0
  %55 = vmatpush1.msra.mxu0 %v26
  %56 = vmatprep.subr.mxu0 0.0
  %57 = vmatpush1.msra.mxu0 %v27
  %58 = vmatprep.subr.mxu0 0.0
  %59 = vmatpush1.msra.mxu0 %v28
  %60 = vmatprep.subr.mxu0 0.0
  %61 = vmatpush1.msra.mxu0 %v29
  %62 = vmatprep.subr.mxu0 0.0
  %63 = vmatpush1.msra.mxu0 %v30
  %64 = vmatprep.subr.mxu0 0.0
  %65 = vmatpush1.msra.mxu0 %v31
  %66 = vmatprep.subr.mxu0 0.0
  %67 = vmatpush1.msra.mxu0 0.0
  %68 = vmatprep.subr.mxu0 0.0
  %69 = vmatpush1.msra.mxu0 0.0
  %70 = vmatprep.subr.mxu0 0.0
  %71 = vmatpush1.msra.mxu0 0.0
  %72 = vmatprep.subr.mxu0 0.0
  %73 = vmatpush1.msra.mxu0 0.0
  %74 = vmatprep.subr.mxu0 0.0
  %75 = vmatpush1.msra.mxu0 0.0
  %76 = vmatprep.subr.mxu0 0.0
  %77 = vmatpush1.msra.mxu0 0.0
  %78 = vmatprep.subr.mxu0 0.0
  %79 = vmatpush1.msra.mxu0 0.0
  %80 = vmatprep.subr.mxu0 0.0
  %81 = vmatpush1.msra.mxu0 0.0
  %82 = vmatprep.subr.mxu0 0.0
  %83 = vmatpush1.msra.mxu0 0.0
  %84 = vmatprep.subr.mxu0 0.0
  %85 = vmatpush1.msra.mxu0 0.0
  %86 = vmatprep.subr.mxu0 0.0
  %87 = vmatpush1.msra.mxu0 0.0
  %88 = vmatprep.subr.mxu0 0.0
  %89 = vmatpush1.msra.mxu0 0.0
  %90 = vmatprep.subr.mxu0 0.0
  %91 = vmatpush1.msra.mxu0 0.0
  %92 = vmatprep.subr.mxu0 0.0
  %93 = vmatpush1.msra.mxu0 0.0
  %94 = vmatprep.subr.mxu0 0.0
  %95 = vmatpush1.msra.mxu0 0.0
  %96 = vmatprep.subr.mxu0 0.0
  %97 = vmatpush1.msra.mxu0 0.0
  %98 = vmatprep.mubr.f32.mxu0 0.0
  %99 = vmatmul.mubr.f32.gmra.mrb[0].mxu0 %v14
  %v100 = vpop.f32.mrb[0].mxu0
  %v101 = vadd.f32 %v32, %v100
  %v102 = vpop.f32.mrb[0].mxu0
  %103 = vmatprep.mubr.f32.mxu0 0.0
  %104 = vmatmul.mubr.f32.gmra.mrb[0].mxu0 %v15
  %v105 = vpop.f32.mrb[0].mxu0
  %v106 = vadd.f32 %v33, %v105
  %v107 = vpop.f32.mrb[0].mxu0
  %108 = vdwg.mxu0
  %109 = vst [vmem:[%s3] sm:$0xff] %v101
  %110 = vst [vmem:[%s3 + $0x8] sm:$0xff] %v106
  // Predicated region
  $region14: #{_lambda_.31} parent=0 // pred_check
    _
  $region15: #{_lambda_.31} parent=0 // pred_check_branch
    %112 = sbr.rel (0) target = $region17
  $region16: #{_lambda_.31} parent=0 // pred_region
    _
  $region17: #{_lambda_.31} parent=0 // pred_fallthru
    _
  // Predicated region
  $region18: #{_lambda_.31} parent=0 // pred_check
    _
  $region19: #{_lambda_.31} parent=0 // pred_check_branch
    %114 = sbr.rel (0) target = $region21
  $region20: #{_lambda_.31} parent=0 // pred_region
    _
  $region21: #{_lambda_.31} parent=0 // pred_fallthru
    _

// kernel: _lambda_.43
$region0: #{_lambda_.43}
  #allocation0 [shape = 'u32[]', space=smem, size = 0x4, offset = 0x4, fixed_abs, tag = 'smem constant byte address 0x4 - core index']
  #allocation1 [shape = 'u32[144,128]{1,0:T(1,128)}', space=vmem, size = 0x12000, scoped, tag = 'internal scratch']
  %s0 = inlined_call_operand.vmem [shape: f32[16,128], index: 0, kind: input, shape index: {}]
  %s1 = inlined_call_operand.vmem [shape: f32[128,256], index: 1, kind: input, shape index: {}]
  %s2 = inlined_call_operand.vmem [shape: f32[16,256], index: 2, kind: output, shape index: {}]
  %s3 = sld [smem:[#allocation0]]
  $region18: #{_lambda_.43} parent=0
    _
  %s5 = ssub.s32 1, %s3
  %s6 = scalar_select 0, %s5, %s3
  // Predicated region
  $region2: #{_lambda_.43} parent=0 // pred_check
    _
  $region3: #{_lambda_.43} parent=0 // pred_check_branch
    %8 = sbr.rel (0) target = $region5
  $region4: #{_lambda_.43} parent=0 // pred_region
    _
  $region5: #{_lambda_.43} parent=0 // pred_fallthru
    _
  // Predicated region
  $region6: #{_lambda_.43} parent=0 // pred_check
    _
  $region7: #{_lambda_.43} parent=0 // pred_check_branch
    %10 = sbr.rel (0) target = $region9
  $region8: #{_lambda_.43} parent=0 // pred_region
    _
  $region9: #{_lambda_.43} parent=0 // pred_fallthru
    _
  %v11 = vld [vmem:[%s0] sm:$0xff]
  %v12 = vld [vmem:[%s0 + $0x8] sm:$0xff]
  %v13 = vld [vmem:[%s1] sm:$0xff]
  %v14 = vld [vmem:[%s1 + $0x8] sm:$0xff]
  %v15 = vld [vmem:[%s1 + $0x10] sm:$0xff]
  %v16 = vld [vmem:[%s1 + $0x18] sm:$0xff]
  %v17 = vld [vmem:[%s1 + $0x20] sm:$0xff]
  %v18 = vld [vmem:[%s1 + $0x28] sm:$0xff]
  %v19 = vld [vmem:[%s1 + $0x30] sm:$0xff]
  %v20 = vld [vmem:[%s1 + $0x38] sm:$0xff]
  %v21 = vld [vmem:[%s1 + $0x40] sm:$0xff]
  %v22 = vld [vmem:[%s1 + $0x48] sm:$0xff]
  %v23 = vld [vmem:[%s1 + $0x50] sm:$0xff]
  %v24 = vld [vmem:[%s1 + $0x58] sm:$0xff]
  %v25 = vld [vmem:[%s1 + $0x60] sm:$0xff]
  %v26 = vld [vmem:[%s1 + $0x68] sm:$0xff]
  %v27 = vld [vmem:[%s1 + $0x70] sm:$0xff]
  %v28 = vld [vmem:[%s1 + $0x78] sm:$0xff]
  %v29 = vld [vmem:[%s1 + $0x80] sm:$0xff]
  %v30 = vld [vmem:[%s1 + $0x88] sm:$0xff]
  %v31 = vld [vmem:[%s1 + $0x90] sm:$0xff]
  %v32 = vld [vmem:[%s1 + $0x98] sm:$0xff]
  %v33 = vld [vmem:[%s1 + $0xa0] sm:$0xff]
  %v34 = vld [vmem:[%s1 + $0xa8] sm:$0xff]
  %v35 = vld [vmem:[%s1 + $0xb0] sm:$0xff]
  %v36 = vld [vmem:[%s1 + $0xb8] sm:$0xff]
  %v37 = vld [vmem:[%s1 + $0xc0] sm:$0xff]
  %v38 = vld [vmem:[%s1 + $0xc8] sm:$0xff]
  %v39 = vld [vmem:[%s1 + $0xd0] sm:$0xff]
  %v40 = vld [vmem:[%s1 + $0xd8] sm:$0xff]
  %v41 = vld [vmem:[%s1 + $0xe0] sm:$0xff]
  %v42 = vld [vmem:[%s1 + $0xe8] sm:$0xff]
  %v43 = vld [vmem:[%s1 + $0xf0] sm:$0xff]
  %v44 = vld [vmem:[%s1 + $0xf8] sm:$0xff]
  %45 = vmatprep.subr.mxu0 %v14
  %46 = vmatpush1.msra.mxu0 %v13
  %47 = vmatprep.subr.mxu0 %v16
  %48 = vmatpush1.msra.mxu0 %v15
  %49 = vmatprep.subr.mxu0 %v18
  %50 = vmatpush1.msra.mxu0 %v17
  %51 = vmatprep.subr.mxu0 %v20
  %52 = vmatpush1.msra.mxu0 %v19
  %53 = vmatprep.subr.mxu0 %v22
  %54 = vmatpush1.msra.mxu0 %v21
  %55 = vmatprep.subr.mxu0 %v24
  %56 = vmatpush1.msra.mxu0 %v23
  %57 = vmatprep.subr.mxu0 %v26
  %58 = vmatpush1.msra.mxu0 %v25
  %59 = vmatprep.subr.mxu0 %v28
  %60 = vmatpush1.msra.mxu0 %v27
  %61 = vmatprep.subr.mxu0 %v30
  %62 = vmatpush1.msra.mxu0 %v29
  %63 = vmatprep.subr.mxu0 %v32
  %64 = vmatpush1.msra.mxu0 %v31
  %65 = vmatprep.subr.mxu0 %v34
  %66 = vmatpush1.msra.mxu0 %v33
  %67 = vmatprep.subr.mxu0 %v36
  %68 = vmatpush1.msra.mxu0 %v35
  %69 = vmatprep.subr.mxu0 %v38
  %70 = vmatpush1.msra.mxu0 %v37
  %71 = vmatprep.subr.mxu0 %v40
  %72 = vmatpush1.msra.mxu0 %v39
  %73 = vmatprep.subr.mxu0 %v42
  %74 = vmatpush1.msra.mxu0 %v41
  %75 = vmatprep.subr.mxu0 %v44
  %76 = vmatpush1.msra.mxu0 %v43
  %77 = vmatprep.subr.mxu0 0.0
  %78 = vmatpush1.msra.mxu0 0.0
  %79 = vmatprep.subr.mxu0 0.0
  %80 = vmatpush1.msra.mxu0 0.0
  %81 = vmatprep.subr.mxu0 0.0
  %82 = vmatpush1.msra.mxu0 0.0
  %83 = vmatprep.subr.mxu0 0.0
  %84 = vmatpush1.msra.mxu0 0.0
  %85 = vmatprep.subr.mxu0 0.0
  %86 = vmatpush1.msra.mxu0 0.0
  %87 = vmatprep.subr.mxu0 0.0
  %88 = vmatpush1.msra.mxu0 0.0
  %89 = vmatprep.subr.mxu0 0.0
  %90 = vmatpush1.msra.mxu0 0.0
  %91 = vmatprep.subr.mxu0 0.0
  %92 = vmatpush1.msra.mxu0 0.0
  %93 = vmatprep.subr.mxu0 0.0
  %94 = vmatpush1.msra.mxu0 0.0
  %95 = vmatprep.subr.mxu0 0.0
  %96 = vmatpush1.msra.mxu0 0.0
  %97 = vmatprep.subr.mxu0 0.0
  %98 = vmatpush1.msra.mxu0 0.0
  %99 = vmatprep.subr.mxu0 0.0
  %100 = vmatpush1.msra.mxu0 0.0
  %101 = vmatprep.subr.mxu0 0.0
  %102 = vmatpush1.msra.mxu0 0.0
  %103 = vmatprep.subr.mxu0 0.0
  %104 = vmatpush1.msra.mxu0 0.0
  %105 = vmatprep.subr.mxu0 0.0
  %106 = vmatpush1.msra.mxu0 0.0
  %107 = vmatprep.subr.mxu0 0.0
  %108 = vmatpush1.msra.mxu0 0.0
  %109 = vmatprep.mubr.f32.mxu0 0.0
  %110 = vmatmul.mubr.f32.gmra.mrb[0].mxu0 %v11
  %v111 = vpop.f32.mrb[0].mxu0
  %v112 = vadd.f32 0.0, %v111
  %v113 = vpop.f32.mrb[0].mxu0
  %v114 = vadd.f32 0.0, %v113
  %115 = vmatprep.mubr.f32.mxu0 0.0
  %116 = vmatmul.mubr.f32.gmra.mrb[0].mxu0 %v12
  %v117 = vpop.f32.mrb[0].mxu0
  %v118 = vadd.f32 0.0, %v117
  %v119 = vpop.f32.mrb[0].mxu0
  %v120 = vadd.f32 0.0, %v119
  %121 = vdwg.mxu0
  %122 = vst [vmem:[%s2] sm:$0xff] %v112
  %123 = vst [vmem:[%s2 + $0x8] sm:$0xff] %v114
  %124 = vst [vmem:[%s2 + $0x10] sm:$0xff] %v118
  %125 = vst [vmem:[%s2 + $0x18] sm:$0xff] %v120
  // Predicated region
  $region10: #{_lambda_.43} parent=0 // pred_check
    _
  $region11: #{_lambda_.43} parent=0 // pred_check_branch
    %127 = sbr.rel (0) target = $region13
  $region12: #{_lambda_.43} parent=0 // pred_region
    _
  $region13: #{_lambda_.43} parent=0 // pred_fallthru
    _
  // Predicated region
  $region14: #{_lambda_.43} parent=0 // pred_check
    _
  $region15: #{_lambda_.43} parent=0 // pred_check_branch
    %129 = sbr.rel (0) target = $region17
  $region16: #{_lambda_.43} parent=0 // pred_region
    _
  $region17: #{_lambda_.43} parent=0 // pred_fallthru
    _

// kernel: _lambda_.38
$region0: #{_lambda_.38}
  #allocation0 [shape = 'u32[]', space=smem, size = 0x4, offset = 0x4, fixed_abs, tag = 'smem constant byte address 0x4 - core index']
  #allocation1 [shape = 'u32[144,128]{1,0:T(1,128)}', space=vmem, size = 0x12000, scoped, tag = 'internal scratch']
  #allocation2 [shape = 'f32[16,128]{1,0:T(8,128)}', space=vmem, size = 0x2000, scoped, tag = 'scratch operand']
  %s0 = inlined_call_operand.vmem [shape: s32[16,1], index: 0, kind: input, shape index: {}]
  %s1 = inlined_call_operand.vmem [shape: f32[256,128], index: 1, kind: input, shape index: {}]
  %s2 = inlined_call_operand.vmem [shape: f32[16,128], index: 2, kind: output, shape index: {}]
  %s3 = sld [smem:[#allocation0]]
  $region26: #{_lambda_.38} parent=0
    _
  %s5 = ssub.s32 1, %s3
  %s6 = scalar_select 0, %s5, %s3
  // Predicated region
  $region2: #{_lambda_.38} parent=0 // pred_check
    _
  $region3: #{_lambda_.38} parent=0 // pred_check_branch
    %8 = sbr.rel (0) target = $region5
  $region4: #{_lambda_.38} parent=0 // pred_region
    _
  $region5: #{_lambda_.38} parent=0 // pred_fallthru
    _
  // Predicated region
  $region6: #{_lambda_.38} parent=0 // pred_check
    _
  $region7: #{_lambda_.38} parent=0 // pred_check_branch
    %10 = sbr.rel (0) target = $region9
  $region8: #{_lambda_.38} parent=0 // pred_region
    _
  $region9: #{_lambda_.38} parent=0 // pred_fallthru
    _
  %p11 = scmp.eq.s32.totalorder 0, 0
  // Predicated region
  $region10: #{_lambda_.38} parent=0 // pred_check
    %p12 = pneg %p11
  $region11: #{_lambda_.38} parent=0 // pred_check_branch
    %14 = sbr.rel (%p12) target = $region13
  $region12: #{_lambda_.38} parent=0 // pred_region
    %15 = vst [vmem:[#allocation2] sm:$0xff] 0.0
    %16 = vst [vmem:[#allocation2 + $0x8] sm:$0xff] 0.0
  $region13: #{_lambda_.38} parent=0 // pred_fallthru
    _
  %v17 = vld [vmem:[%s0] sm:$0xff]
  %v18 = vld [vmem:[%s0 + $0x8] sm:$0xff]
  %v19 = vlaneseq
  %v20 = vand.u32 %v19, 127
  %v21 = vadd.s32 %v20, 128
  %s22 = smul.u32 0, 256
  %v23 = vstv %s22
  %v24 = vadd.s32 %v20, %v23
  %v25 = vadd.s32 %v21, %v23
  %26 = vset.pattern.permute.xlu0 0
  %27 = vperm.xlu0 %26, %v17
  %v28 = vpop.permute.xlu0 %27
  %29 = vset.pattern.permute.xlu0 0
  %30 = vperm.xlu0 %29, %v18
  %v31 = vpop.permute.xlu0 %30
  %vm32 = vcmp.eq.s32.totalorder %v24, %v28
  %vm33 = vcmp.eq.s32.totalorder %v25, %v28
  %vm34 = vcmp.eq.s32.totalorder %v24, %v31
  %vm35 = vcmp.eq.s32.totalorder %v25, %v31
  %v36 = vsel %vm32, 1, 0
  %v37 = vsel %vm33, 1, 0
  %v38 = vsel %vm34, 1, 0
  %v39 = vsel %vm35, 1, 0
  %v40 = vcvt.s32.f32 %v36
  %v41 = vcvt.s32.f32 %v37
  %v42 = vcvt.s32.f32 %v38
  %v43 = vcvt.s32.f32 %v39
  %v44 = vld [vmem:[#allocation2] sm:$0xff]
  %v45 = vld [vmem:[#allocation2 + $0x8] sm:$0xff]
  %v46 = vld [vmem:[%s1] sm:$0xff]
  %v47 = vld [vmem:[%s1 + $0x8] sm:$0xff]
  %v48 = vld [vmem:[%s1 + $0x10] sm:$0xff]
  %v49 = vld [vmem:[%s1 + $0x18] sm:$0xff]
  %v50 = vld [vmem:[%s1 + $0x20] sm:$0xff]
  %v51 = vld [vmem:[%s1 + $0x28] sm:$0xff]
  %v52 = vld [vmem:[%s1 + $0x30] sm:$0xff]
  %v53 = vld [vmem:[%s1 + $0x38] sm:$0xff]
  %v54 = vld [vmem:[%s1 + $0x40] sm:$0xff]
  %v55 = vld [vmem:[%s1 + $0x48] sm:$0xff]
  %v56 = vld [vmem:[%s1 + $0x50] sm:$0xff]
  %v57 = vld [vmem:[%s1 + $0x58] sm:$0xff]
  %v58 = vld [vmem:[%s1 + $0x60] sm:$0xff]
  %v59 = vld [vmem:[%s1 + $0x68] sm:$0xff]
  %v60 = vld [vmem:[%s1 + $0x70] sm:$0xff]
  %v61 = vld [vmem:[%s1 + $0x78] sm:$0xff]
  %v62 = vld [vmem:[%s1 + $0x80] sm:$0xff]
  %v63 = vld [vmem:[%s1 + $0x88] sm:$0xff]
  %v64 = vld [vmem:[%s1 + $0x90] sm:$0xff]
  %v65 = vld [vmem:[%s1 + $0x98] sm:$0xff]
  %v66 = vld [vmem:[%s1 + $0xa0] sm:$0xff]
  %v67 = vld [vmem:[%s1 + $0xa8] sm:$0xff]
  %v68 = vld [vmem:[%s1 + $0xb0] sm:$0xff]
  %v69 = vld [vmem:[%s1 + $0xb8] sm:$0xff]
  %v70 = vld [vmem:[%s1 + $0xc0] sm:$0xff]
  %v71 = vld [vmem:[%s1 + $0xc8] sm:$0xff]
  %v72 = vld [vmem:[%s1 + $0xd0] sm:$0xff]
  %v73 = vld [vmem:[%s1 + $0xd8] sm:$0xff]
  %v74 = vld [vmem:[%s1 + $0xe0] sm:$0xff]
  %v75 = vld [vmem:[%s1 + $0xe8] sm:$0xff]
  %v76 = vld [vmem:[%s1 + $0xf0] sm:$0xff]
  %v77 = vld [vmem:[%s1 + $0xf8] sm:$0xff]
  %78 = vmatprep.subr.mxu0 0.0
  %79 = vmatpush1.msra.mxu0 %v46
  %80 = vmatprep.subr.mxu0 0.0
  %81 = vmatpush1.msra.mxu0 %v47
  %82 = vmatprep.subr.mxu0 0.0
  %83 = vmatpush1.msra.mxu0 %v48
  %84 = vmatprep.subr.mxu0 0.0
  %85 = vmatpush1.msra.mxu0 %v49
  %86 = vmatprep.subr.mxu0 0.0
  %87 = vmatpush1.msra.mxu0 %v50
  %88 = vmatprep.subr.mxu0 0.0
  %89 = vmatpush1.msra.mxu0 %v51
  %90 = vmatprep.subr.mxu0 0.0
  %91 = vmatpush1.msra.mxu0 %v52
  %92 = vmatprep.subr.mxu0 0.0
  %93 = vmatpush1.msra.mxu0 %v53
  %94 = vmatprep.subr.mxu0 0.0
  %95 = vmatpush1.msra.mxu0 %v54
  %96 = vmatprep.subr.mxu0 0.0
  %97 = vmatpush1.msra.mxu0 %v55
  %98 = vmatprep.subr.mxu0 0.0
  %99 = vmatpush1.msra.mxu0 %v56
  %100 = vmatprep.subr.mxu0 0.0
  %101 = vmatpush1.msra.mxu0 %v57
  %102 = vmatprep.subr.mxu0 0.0
  %103 = vmatpush1.msra.mxu0 %v58
  %104 = vmatprep.subr.mxu0 0.0
  %105 = vmatpush1.msra.mxu0 %v59
  %106 = vmatprep.subr.mxu0 0.0
  %107 = vmatpush1.msra.mxu0 %v60
  %108 = vmatprep.subr.mxu0 0.0
  %109 = vmatpush1.msra.mxu0 %v61
  %110 = vmatprep.subr.mxu0 0.0
  %111 = vmatpush1.msra.mxu0 %v62
  %112 = vmatprep.subr.mxu0 0.0
  %113 = vmatpush1.msra.mxu0 %v63
  %114 = vmatprep.subr.mxu0 0.0
  %115 = vmatpush1.msra.mxu0 %v64
  %116 = vmatprep.subr.mxu0 0.0
  %117 = vmatpush1.msra.mxu0 %v65
  %118 = vmatprep.subr.mxu0 0.0
  %119 = vmatpush1.msra.mxu0 %v66
  %120 = vmatprep.subr.mxu0 0.0
  %121 = vmatpush1.msra.mxu0 %v67
  %122 = vmatprep.subr.mxu0 0.0
  %123 = vmatpush1.msra.mxu0 %v68
  %124 = vmatprep.subr.mxu0 0.0
  %125 = vmatpush1.msra.mxu0 %v69
  %126 = vmatprep.subr.mxu0 0.0
  %127 = vmatpush1.msra.mxu0 %v70
  %128 = vmatprep.subr.mxu0 0.0
  %129 = vmatpush1.msra.mxu0 %v71
  %130 = vmatprep.subr.mxu0 0.0
  %131 = vmatpush1.msra.mxu0 %v72
  %132 = vmatprep.subr.mxu0 0.0
  %133 = vmatpush1.msra.mxu0 %v73
  %134 = vmatprep.subr.mxu0 0.0
  %135 = vmatpush1.msra.mxu0 %v74
  %136 = vmatprep.subr.mxu0 0.0
  %137 = vmatpush1.msra.mxu0 %v75
  %138 = vmatprep.subr.mxu0 0.0
  %139 = vmatpush1.msra.mxu0 %v76
  %140 = vmatprep.subr.mxu0 0.0
  %141 = vmatpush1.msra.mxu0 %v77
  %142 = vmatprep.mubr.f32.mxu0 %v41
  %143 = vmatmul.mubr.f32.gmra.mrb[0].mxu0 %v40
  %v144 = vpop.f32.mrb[0].mxu0
  %v145 = vadd.f32 0.0, %v144
  %v146 = vpop.f32.mrb[0].mxu0
  %147 = vmatprep.mubr.f32.mxu0 %v43
  %148 = vmatmul.mubr.f32.gmra.mrb[0].mxu0 %v42
  %v149 = vpop.f32.mrb[0].mxu0
  %v150 = vadd.f32 0.0, %v149
  %v151 = vpop.f32.mrb[0].mxu0
  %152 = vdwg.mxu0
  %v153 = vadd.f32 %v44, %v145
  %v154 = vadd.f32 %v45, %v150
  %155 = vst [vmem:[#allocation2] sm:$0xff] %v153
  %156 = vst [vmem:[#allocation2 + $0x8] sm:$0xff] %v154
  // Predicated region
  $region14: #{_lambda_.38} parent=0 // pred_check
    %p157 = pneg %p11
  $region15: #{_lambda_.38} parent=0 // pred_check_branch
    %159 = sbr.rel (%p157) target = $region17
  $region16: #{_lambda_.38} parent=0 // pred_region
    %v160 = vld [vmem:[#allocation2] sm:$0xff]
    %v161 = vld [vmem:[#allocation2 + $0x8] sm:$0xff]
    %162 = vst [vmem:[%s2] sm:$0xff] %v160
    %163 = vst [vmem:[%s2 + $0x8] sm:$0xff] %v161
  $region17: #{_lambda_.38} parent=0 // pred_fallthru
    _
  // Predicated region
  $region18: #{_lambda_.38} parent=0 // pred_check
    _
  $region19: #{_lambda_.38} parent=0 // pred_check_branch
    %165 = sbr.rel (0) target = $region21
  $region20: #{_lambda_.38} parent=0 // pred_region
    _
  $region21: #{_lambda_.38} parent=0 // pred_fallthru
    _
  // Predicated region
  $region22: #{_lambda_.38} parent=0 // pred_check
    _
  $region23: #{_lambda_.38} parent=0 // pred_check_branch
    %167 = sbr.rel (0) target = $region25
  $region24: #{_lambda_.38} parent=0 // pred_region
    _
  $region25: #{_lambda_.38} parent=0 // pred_fallthru
    _

// kernel: _lambda_.42
$region0: #{_lambda_.42}
  #allocation0 [shape = 'u32[]', space=smem, size = 0x4, offset = 0x4, fixed_abs, tag = 'smem constant byte address 0x4 - core index']
  #allocation1 [shape = 'u32[144,128]{1,0:T(1,128)}', space=vmem, size = 0x12000, scoped, tag = 'internal scratch']
  %s0 = inlined_call_operand.vmem [shape: f32[16,128], index: 0, kind: input, shape index: {}]
  %s1 = inlined_call_operand.vmem [shape: f32[1,128], index: 1, kind: input, shape index: {}]
  %s2 = inlined_call_operand.vmem [shape: f32[128,128], index: 2, kind: input, shape index: {}]
  %s3 = inlined_call_operand.vmem [shape: f32[16,128], index: 3, kind: output, shape index: {}]
  %s4 = sld [smem:[#allocation0]]
  $region22: #{_lambda_.42} parent=0
    _
  %s6 = ssub.s32 1, %s4
  %s7 = scalar_select 0, %s6, %s4
  // Predicated region
  $region2: #{_lambda_.42} parent=0 // pred_check
    _
  $region3: #{_lambda_.42} parent=0 // pred_check_branch
    %9 = sbr.rel (0) target = $region5
  $region4: #{_lambda_.42} parent=0 // pred_region
    _
  $region5: #{_lambda_.42} parent=0 // pred_fallthru
    _
  // Predicated region
  $region6: #{_lambda_.42} parent=0 // pred_check
    _
  $region7: #{_lambda_.42} parent=0 // pred_check_branch
    %11 = sbr.rel (0) target = $region9
  $region8: #{_lambda_.42} parent=0 // pred_region
    _
  $region9: #{_lambda_.42} parent=0 // pred_fallthru
    _
  // Predicated region
  $region10: #{_lambda_.42} parent=0 // pred_check
    _
  $region11: #{_lambda_.42} parent=0 // pred_check_branch
    %13 = sbr.rel (0) target = $region13
  $region12: #{_lambda_.42} parent=0 // pred_region
    _
  $region13: #{_lambda_.42} parent=0 // pred_fallthru
    _
  %v14 = vld [vmem:[%s0] sm:$0xff]
  %v15 = vld [vmem:[%s0 + $0x8] sm:$0xff]
  %v16 = vmul.f32 %v14, %v14
  %v17 = vmul.f32 %v15, %v15
  %18 = vadd.xlane.f32.xlu0 %v16
  %v19 = vpop.xlane.xlu0 %18
  %20 = vadd.xlane.f32.xlu0 %v17
  %v21 = vpop.xlane.xlu0 %20
  %v22 = vrcp.pop 128.0
  %v23 = vmul.f32 %v19, %v22
  %v24 = vmul.f32 %v21, %v22
  %v25 = vld [vmem:[%s1] sm:$0x1]
  %v26 = vadd.f32 %v23, 1e-06
  %v27 = vadd.f32 %v24, 1e-06
  %v28 = vrsqrt.pop %v26
  %v29 = vrsqrt.pop %v27
  %v30 = vmul.f32 %v14, %v28
  %v31 = vmul.f32 %v15, %v29
  %v33 = vlaneseq
  %v34 = vshrl.u32 %v33, 7
  %v35 = vsub.s32 0, %v34
  %v36 = vrot.slane %v25, %v35
  %v38 = vmul.f32 %v36, %v30
  %v39 = vmul.f32 %v36, %v31
  %v40 = vld [vmem:[%s2] sm:$0xff]
  %v41 = vld [vmem:[%s2 + $0x8] sm:$0xff]
  %v42 = vld [vmem:[%s2 + $0x10] sm:$0xff]
  %v43 = vld [vmem:[%s2 + $0x18] sm:$0xff]
  %v44 = vld [vmem:[%s2 + $0x20] sm:$0xff]
  %v45 = vld [vmem:[%s2 + $0x28] sm:$0xff]
  %v46 = vld [vmem:[%s2 + $0x30] sm:$0xff]
  %v47 = vld [vmem:[%s2 + $0x38] sm:$0xff]
  %v48 = vld [vmem:[%s2 + $0x40] sm:$0xff]
  %v49 = vld [vmem:[%s2 + $0x48] sm:$0xff]
  %v50 = vld [vmem:[%s2 + $0x50] sm:$0xff]
  %v51 = vld [vmem:[%s2 + $0x58] sm:$0xff]
  %v52 = vld [vmem:[%s2 + $0x60] sm:$0xff]
  %v53 = vld [vmem:[%s2 + $0x68] sm:$0xff]
  %v54 = vld [vmem:[%s2 + $0x70] sm:$0xff]
  %v55 = vld [vmem:[%s2 + $0x78] sm:$0xff]
  %56 = vmatprep.subr.mxu0 0.0
  %57 = vmatpush1.msra.mxu0 %v40
  %58 = vmatprep.subr.mxu0 0.0
  %59 = vmatpush1.msra.mxu0 %v41
  %60 = vmatprep.subr.mxu0 0.0
  %61 = vmatpush1.msra.mxu0 %v42
  %62 = vmatprep.subr.mxu0 0.0
  %63 = vmatpush1.msra.mxu0 %v43
  %64 = vmatprep.subr.mxu0 0.0
  %65 = vmatpush1.msra.mxu0 %v44
  %66 = vmatprep.subr.mxu0 0.0
  %67 = vmatpush1.msra.mxu0 %v45
  %68 = vmatprep.subr.mxu0 0.0
  %69 = vmatpush1.msra.mxu0 %v46
  %70 = vmatprep.subr.mxu0 0.0
  %71 = vmatpush1.msra.mxu0 %v47
  %72 = vmatprep.subr.mxu0 0.0
  %73 = vmatpush1.msra.mxu0 %v48
  %74 = vmatprep.subr.mxu0 0.0
  %75 = vmatpush1.msra.mxu0 %v49
  %76 = vmatprep.subr.mxu0 0.0
  %77 = vmatpush1.msra.mxu0 %v50
  %78 = vmatprep.subr.mxu0 0.0
  %79 = vmatpush1.msra.mxu0 %v51
  %80 = vmatprep.subr.mxu0 0.0
  %81 = vmatpush1.msra.mxu0 %v52
  %82 = vmatprep.subr.mxu0 0.0
  %83 = vmatpush1.msra.mxu0 %v53
  %84 = vmatprep.subr.mxu0 0.0
  %85 = vmatpush1.msra.mxu0 %v54
  %86 = vmatprep.subr.mxu0 0.0
  %87 = vmatpush1.msra.mxu0 %v55
  %88 = vmatprep.subr.mxu0 0.0
  %89 = vmatpush1.msra.mxu0 0.0
  %90 = vmatprep.subr.mxu0 0.0
  %91 = vmatpush1.msra.mxu0 0.0
  %92 = vmatprep.subr.mxu0 0.0
  %93 = vmatpush1.msra.mxu0 0.0
  %94 = vmatprep.subr.mxu0 0.0
  %95 = vmatpush1.msra.mxu0 0.0
  %96 = vmatprep.subr.mxu0 0.0
  %97 = vmatpush1.msra.mxu0 0.0
  %98 = vmatprep.subr.mxu0 0.0
  %99 = vmatpush1.msra.mxu0 0.0
  %100 = vmatprep.subr.mxu0 0.0
  %101 = vmatpush1.msra.mxu0 0.0
  %102 = vmatprep.subr.mxu0 0.0
  %103 = vmatpush1.msra.mxu0 0.0
  %104 = vmatprep.subr.mxu0 0.0
  %105 = vmatpush1.msra.mxu0 0.0
  %106 = vmatprep.subr.mxu0 0.0
  %107 = vmatpush1.msra.mxu0 0.0
  %108 = vmatprep.subr.mxu0 0.0
  %109 = vmatpush1.msra.mxu0 0.0
  %110 = vmatprep.subr.mxu0 0.0
  %111 = vmatpush1.msra.mxu0 0.0
  %112 = vmatprep.subr.mxu0 0.0
  %113 = vmatpush1.msra.mxu0 0.0
  %114 = vmatprep.subr.mxu0 0.0
  %115 = vmatpush1.msra.mxu0 0.0
  %116 = vmatprep.subr.mxu0 0.0
  %117 = vmatpush1.msra.mxu0 0.0
  %118 = vmatprep.subr.mxu0 0.0
  %119 = vmatpush1.msra.mxu0 0.0
  %120 = vmatprep.mubr.f32.mxu0 0.0
  %121 = vmatmul.mubr.f32.gmra.mrb[0].mxu0 %v38
  %v122 = vpop.f32.mrb[0].mxu0
  %v123 = vadd.f32 0.0, %v122
  %v124 = vpop.f32.mrb[0].mxu0
  %125 = vmatprep.mubr.f32.mxu0 0.0
  %126 = vmatmul.mubr.f32.gmra.mrb[0].mxu0 %v39
  %v127 = vpop.f32.mrb[0].mxu0
  %v128 = vadd.f32 0.0, %v127
  %v129 = vpop.f32.mrb[0].mxu0
  %130 = vdwg.mxu0
  %131 = vst [vmem:[%s3] sm:$0xff] %v123
  %132 = vst [vmem:[%s3 + $0x8] sm:$0xff] %v128
  // Predicated region
  $region14: #{_lambda_.42} parent=0 // pred_check
    _
  $region15: #{_lambda_.42} parent=0 // pred_check_branch
    %134 = sbr.rel (0) target = $region17
  $region16: #{_lambda_.42} parent=0 // pred_region
    _
  $region17: #{_lambda_.42} parent=0 // pred_fallthru
    _
  // Predicated region
  $region18: #{_lambda_.42} parent=0 // pred_check
    _
  $region19: #{_lambda_.42} parent=0 // pred_check_branch
    %136 = sbr.rel (0) target = $region21
  $region20: #{_lambda_.42} parent=0 // pred_region
    _
  $region21: #{_lambda_.42} parent=0 // pred_fallthru
    _

// kernel: _lambda_.46
$region0: #{_lambda_.46}
  #allocation0 [shape = 'u32[]', space=smem, size = 0x4, offset = 0x4, fixed_abs, tag = 'smem constant byte address 0x4 - core index']
  #allocation1 [shape = 'u32[144,128]{1,0:T(1,128)}', space=vmem, size = 0x12000, scoped, tag = 'internal scratch']
  #allocation2 [shape = 'f32[16,128]{1,0:T(8,128)}', space=vmem, size = 0x2000, scoped, tag = 'scratch operand']
  #allocation3 [shape = 'f32[16,128]{1,0:T(8,128)}', space=vmem, size = 0x2000, scoped, tag = 'scratch operand']
  %s0 = inlined_call_operand.vmem [shape: f32[16,128], index: 0, kind: input, shape index: {}]
  %s1 = inlined_call_operand.vmem [shape: f32[1,128], index: 1, kind: input, shape index: {}]
  %s2 = inlined_call_operand.vmem [shape: f32[128,256], index: 2, kind: input, shape index: {}]
  %s3 = inlined_call_operand.vmem [shape: f32[256,128], index: 3, kind: input, shape index: {}]
  %s4 = inlined_call_operand.vmem [shape: f32[16,128], index: 4, kind: output, shape index: {}]
  %s5 = sld [smem:[#allocation0]]
  $region34: #{_lambda_.46} parent=0
    _
  %s7 = ssub.s32 1, %s5
  %s8 = scalar_select 0, %s7, %s5
  // Predicated region
  $region2: #{_lambda_.46} parent=0 // pred_check
    _
  $region3: #{_lambda_.46} parent=0 // pred_check_branch
    %10 = sbr.rel (0) target = $region5
  $region4: #{_lambda_.46} parent=0 // pred_region
    _
  $region5: #{_lambda_.46} parent=0 // pred_fallthru
    _
  // Predicated region
  $region6: #{_lambda_.46} parent=0 // pred_check
    _
  $region7: #{_lambda_.46} parent=0 // pred_check_branch
    %12 = sbr.rel (0) target = $region9
  $region8: #{_lambda_.46} parent=0 // pred_region
    _
  $region9: #{_lambda_.46} parent=0 // pred_fallthru
    _
  // Predicated region
  $region10: #{_lambda_.46} parent=0 // pred_check
    _
  $region11: #{_lambda_.46} parent=0 // pred_check_branch
    %14 = sbr.rel (0) target = $region13
  $region12: #{_lambda_.46} parent=0 // pred_region
    _
  $region13: #{_lambda_.46} parent=0 // pred_fallthru
    _
  // Predicated region
  $region14: #{_lambda_.46} parent=0 // pred_check
    _
  $region15: #{_lambda_.46} parent=0 // pred_check_branch
    %16 = sbr.rel (0) target = $region17
  $region16: #{_lambda_.46} parent=0 // pred_region
    _
  $region17: #{_lambda_.46} parent=0 // pred_fallthru
    _
  %p17 = scmp.eq.s32.totalorder 0, 0
  // Predicated region
  $region18: #{_lambda_.46} parent=0 // pred_check
    %p18 = pneg %p17
  $region19: #{_lambda_.46} parent=0 // pred_check_branch
    %20 = sbr.rel (%p18) target = $region21
  $region20: #{_lambda_.46} parent=0 // pred_region
    %v21 = vld [vmem:[%s0] sm:$0xff]
    %v22 = vld [vmem:[%s0 + $0x8] sm:$0xff]
    %23 = vst [vmem:[#allocation2] sm:$0xff] %v21
    %24 = vst [vmem:[#allocation2 + $0x8] sm:$0xff] %v22
    %25 = vst [vmem:[#allocation3] sm:$0xff] 0.0
    %26 = vst [vmem:[#allocation3 + $0x8] sm:$0xff] 0.0
  $region21: #{_lambda_.46} parent=0 // pred_fallthru
    _
  %v27 = vld [vmem:[#allocation2] sm:$0xff]
  %v28 = vld [vmem:[#allocation2 + $0x8] sm:$0xff]
  %v29 = vld [vmem:[%s2] sm:$0xff]
  %v30 = vld [vmem:[%s2 + $0x8] sm:$0xff]
  %v31 = vld [vmem:[%s2 + $0x10] sm:$0xff]
  %v32 = vld [vmem:[%s2 + $0x18] sm:$0xff]
  %v33 = vld [vmem:[%s2 + $0x20] sm:$0xff]
  %v34 = vld [vmem:[%s2 + $0x28] sm:$0xff]
  %v35 = vld [vmem:[%s2 + $0x30] sm:$0xff]
  %v36 = vld [vmem:[%s2 + $0x38] sm:$0xff]
  %v37 = vld [vmem:[%s2 + $0x40] sm:$0xff]
  %v38 = vld [vmem:[%s2 + $0x48] sm:$0xff]
  %v39 = vld [vmem:[%s2 + $0x50] sm:$0xff]
  %v40 = vld [vmem:[%s2 + $0x58] sm:$0xff]
  %v41 = vld [vmem:[%s2 + $0x60] sm:$0xff]
  %v42 = vld [vmem:[%s2 + $0x68] sm:$0xff]
  %v43 = vld [vmem:[%s2 + $0x70] sm:$0xff]
  %v44 = vld [vmem:[%s2 + $0x78] sm:$0xff]
  %v45 = vld [vmem:[%s2 + $0x80] sm:$0xff]
  %v46 = vld [vmem:[%s2 + $0x88] sm:$0xff]
  %v47 = vld [vmem:[%s2 + $0x90] sm:$0xff]
  %v48 = vld [vmem:[%s2 + $0x98] sm:$0xff]
  %v49 = vld [vmem:[%s2 + $0xa0] sm:$0xff]
  %v50 = vld [vmem:[%s2 + $0xa8] sm:$0xff]
  %v51 = vld [vmem:[%s2 + $0xb0] sm:$0xff]
  %v52 = vld [vmem:[%s2 + $0xb8] sm:$0xff]
  %v53 = vld [vmem:[%s2 + $0xc0] sm:$0xff]
  %v54 = vld [vmem:[%s2 + $0xc8] sm:$0xff]
  %v55 = vld [vmem:[%s2 + $0xd0] sm:$0xff]
  %v56 = vld [vmem:[%s2 + $0xd8] sm:$0xff]
  %v57 = vld [vmem:[%s2 + $0xe0] sm:$0xff]
  %v58 = vld [vmem:[%s2 + $0xe8] sm:$0xff]
  %v59 = vld [vmem:[%s2 + $0xf0] sm:$0xff]
  %v60 = vld [vmem:[%s2 + $0xf8] sm:$0xff]
  %61 = vmatprep.subr.mxu0 %v30
  %62 = vmatpush1.msra.mxu0 %v29
  %63 = vmatprep.subr.mxu0 %v32
  %64 = vmatpush1.msra.mxu0 %v31
  %65 = vmatprep.subr.mxu0 %v34
  %66 = vmatpush1.msra.mxu0 %v33
  %67 = vmatprep.subr.mxu0 %v36
  %68 = vmatpush1.msra.mxu0 %v35
  %69 = vmatprep.subr.mxu0 %v38
  %70 = vmatpush1.msra.mxu0 %v37
  %71 = vmatprep.subr.mxu0 %v40
  %72 = vmatpush1.msra.mxu0 %v39
  %73 = vmatprep.subr.mxu0 %v42
  %74 = vmatpush1.msra.mxu0 %v41
  %75 = vmatprep.subr.mxu0 %v44
  %76 = vmatpush1.msra.mxu0 %v43
  %77 = vmatprep.subr.mxu0 %v46
  %78 = vmatpush1.msra.mxu0 %v45
  %79 = vmatprep.subr.mxu0 %v48
  %80 = vmatpush1.msra.mxu0 %v47
  %81 = vmatprep.subr.mxu0 %v50
  %82 = vmatpush1.msra.mxu0 %v49
  %83 = vmatprep.subr.mxu0 %v52
  %84 = vmatpush1.msra.mxu0 %v51
  %85 = vmatprep.subr.mxu0 %v54
  %86 = vmatpush1.msra.mxu0 %v53
  %87 = vmatprep.subr.mxu0 %v56
  %88 = vmatpush1.msra.mxu0 %v55
  %89 = vmatprep.subr.mxu0 %v58
  %90 = vmatpush1.msra.mxu0 %v57
  %91 = vmatprep.subr.mxu0 %v60
  %92 = vmatpush1.msra.mxu0 %v59
  %93 = vmatprep.subr.mxu0 0.0
  %94 = vmatpush1.msra.mxu0 0.0
  %95 = vmatprep.subr.mxu0 0.0
  %96 = vmatpush1.msra.mxu0 0.0
  %97 = vmatprep.subr.mxu0 0.0
  %98 = vmatpush1.msra.mxu0 0.0
  %99 = vmatprep.subr.mxu0 0.0
  %100 = vmatpush1.msra.mxu0 0.0
  %101 = vmatprep.subr.mxu0 0.0
  %102 = vmatpush1.msra.mxu0 0.0
  %103 = vmatprep.subr.mxu0 0.0
  %104 = vmatpush1.msra.mxu0 0.0
  %105 = vmatprep.subr.mxu0 0.0
  %106 = vmatpush1.msra.mxu0 0.0
  %107 = vmatprep.subr.mxu0 0.0
  %108 = vmatpush1.msra.mxu0 0.0
  %109 = vmatprep.subr.mxu0 0.0
  %110 = vmatpush1.msra.mxu0 0.0
  %111 = vmatprep.subr.mxu0 0.0
  %112 = vmatpush1.msra.mxu0 0.0
  %113 = vmatprep.subr.mxu0 0.0
  %114 = vmatpush1.msra.mxu0 0.0
  %115 = vmatprep.subr.mxu0 0.0
  %116 = vmatpush1.msra.mxu0 0.0
  %117 = vmatprep.subr.mxu0 0.0
  %118 = vmatpush1.msra.mxu0 0.0
  %119 = vmatprep.subr.mxu0 0.0
  %120 = vmatpush1.msra.mxu0 0.0
  %121 = vmatprep.subr.mxu0 0.0
  %122 = vmatpush1.msra.mxu0 0.0
  %123 = vmatprep.subr.mxu0 0.0
  %124 = vmatpush1.msra.mxu0 0.0
  %125 = vmatprep.mubr.f32.mxu0 0.0
  %126 = vmatmul.mubr.f32.gmra.mrb[0].mxu0 %v27
  %v127 = vpop.f32.mrb[0].mxu0
  %v128 = vadd.f32 0.0, %v127
  %v129 = vpop.f32.mrb[0].mxu0
  %v130 = vadd.f32 0.0, %v129
  %131 = vmatprep.mubr.f32.mxu0 0.0
  %132 = vmatmul.mubr.f32.gmra.mrb[0].mxu0 %v28
  %v133 = vpop.f32.mrb[0].mxu0
  %v134 = vadd.f32 0.0, %v133
  %v135 = vpop.f32.mrb[0].mxu0
  %v136 = vadd.f32 0.0, %v135
  %137 = vdwg.mxu0
  %v138 = vmax.f32 %v128, 0.0
  %v139 = vmax.f32 %v130, 0.0
  %v140 = vmax.f32 %v134, 0.0
  %v141 = vmax.f32 %v136, 0.0
  %v142 = vld [vmem:[#allocation3] sm:$0xff]
  %v143 = vld [vmem:[#allocation3 + $0x8] sm:$0xff]
  %v144 = vld [vmem:[%s3] sm:$0xff]
  %v145 = vld [vmem:[%s3 + $0x8] sm:$0xff]
  %v146 = vld [vmem:[%s3 + $0x10] sm:$0xff]
  %v147 = vld [vmem:[%s3 + $0x18] sm:$0xff]
  %v148 = vld [vmem:[%s3 + $0x20] sm:$0xff]
  %v149 = vld [vmem:[%s3 + $0x28] sm:$0xff]
  %v150 = vld [vmem:[%s3 + $0x30] sm:$0xff]
  %v151 = vld [vmem:[%s3 + $0x38] sm:$0xff]
  %v152 = vld [vmem:[%s3 + $0x40] sm:$0xff]
  %v153 = vld [vmem:[%s3 + $0x48] sm:$0xff]
  %v154 = vld [vmem:[%s3 + $0x50] sm:$0xff]
  %v155 = vld [vmem:[%s3 + $0x58] sm:$0xff]
  %v156 = vld [vmem:[%s3 + $0x60] sm:$0xff]
  %v157 = vld [vmem:[%s3 + $0x68] sm:$0xff]
  %v158 = vld [vmem:[%s3 + $0x70] sm:$0xff]
  %v159 = vld [vmem:[%s3 + $0x78] sm:$0xff]
  %v160 = vld [vmem:[%s3 + $0x80] sm:$0xff]
  %v161 = vld [vmem:[%s3 + $0x88] sm:$0xff]
  %v162 = vld [vmem:[%s3 + $0x90] sm:$0xff]
  %v163 = vld [vmem:[%s3 + $0x98] sm:$0xff]
  %v164 = vld [vmem:[%s3 + $0xa0] sm:$0xff]
  %v165 = vld [vmem:[%s3 + $0xa8] sm:$0xff]
  %v166 = vld [vmem:[%s3 + $0xb0] sm:$0xff]
  %v167 = vld [vmem:[%s3 + $0xb8] sm:$0xff]
  %v168 = vld [vmem:[%s3 + $0xc0] sm:$0xff]
  %v169 = vld [vmem:[%s3 + $0xc8] sm:$0xff]
  %v170 = vld [vmem:[%s3 + $0xd0] sm:$0xff]
  %v171 = vld [vmem:[%s3 + $0xd8] sm:$0xff]
  %v172 = vld [vmem:[%s3 + $0xe0] sm:$0xff]
  %v173 = vld [vmem:[%s3 + $0xe8] sm:$0xff]
  %v174 = vld [vmem:[%s3 + $0xf0] sm:$0xff]
  %v175 = vld [vmem:[%s3 + $0xf8] sm:$0xff]
  %176 = vmatprep.subr.mxu0 0.0
  %177 = vmatpush1.msra.mxu0 %v144
  %178 = vmatprep.subr.mxu0 0.0
  %179 = vmatpush1.msra.mxu0 %v145
  %180 = vmatprep.subr.mxu0 0.0
  %181 = vmatpush1.msra.mxu0 %v146
  %182 = vmatprep.subr.mxu0 0.0
  %183 = vmatpush1.msra.mxu0 %v147
  %184 = vmatprep.subr.mxu0 0.0
  %185 = vmatpush1.msra.mxu0 %v148
  %186 = vmatprep.subr.mxu0 0.0
  %187 = vmatpush1.msra.mxu0 %v149
  %188 = vmatprep.subr.mxu0 0.0
  %189 = vmatpush1.msra.mxu0 %v150
  %190 = vmatprep.subr.mxu0 0.0
  %191 = vmatpush1.msra.mxu0 %v151
  %192 = vmatprep.subr.mxu0 0.0
  %193 = vmatpush1.msra.mxu0 %v152
  %194 = vmatprep.subr.mxu0 0.0
  %195 = vmatpush1.msra.mxu0 %v153
  %196 = vmatprep.subr.mxu0 0.0
  %197 = vmatpush1.msra.mxu0 %v154
  %198 = vmatprep.subr.mxu0 0.0
  %199 = vmatpush1.msra.mxu0 %v155
  %200 = vmatprep.subr.mxu0 0.0
  %201 = vmatpush1.msra.mxu0 %v156
  %202 = vmatprep.subr.mxu0 0.0
  %203 = vmatpush1.msra.mxu0 %v157
  %204 = vmatprep.subr.mxu0 0.0
  %205 = vmatpush1.msra.mxu0 %v158
  %206 = vmatprep.subr.mxu0 0.0
  %207 = vmatpush1.msra.mxu0 %v159
  %208 = vmatprep.subr.mxu0 0.0
  %209 = vmatpush1.msra.mxu0 %v160
  %210 = vmatprep.subr.mxu0 0.0
  %211 = vmatpush1.msra.mxu0 %v161
  %212 = vmatprep.subr.mxu0 0.0
  %213 = vmatpush1.msra.mxu0 %v162
  %214 = vmatprep.subr.mxu0 0.0
  %215 = vmatpush1.msra.mxu0 %v163
  %216 = vmatprep.subr.mxu0 0.0
  %217 = vmatpush1.msra.mxu0 %v164
  %218 = vmatprep.subr.mxu0 0.0
  %219 = vmatpush1.msra.mxu0 %v165
  %220 = vmatprep.subr.mxu0 0.0
  %221 = vmatpush1.msra.mxu0 %v166
  %222 = vmatprep.subr.mxu0 0.0
  %223 = vmatpush1.msra.mxu0 %v167
  %224 = vmatprep.subr.mxu0 0.0
  %225 = vmatpush1.msra.mxu0 %v168
  %226 = vmatprep.subr.mxu0 0.0
  %227 = vmatpush1.msra.mxu0 %v169
  %228 = vmatprep.subr.mxu0 0.0
  %229 = vmatpush1.msra.mxu0 %v170
  %230 = vmatprep.subr.mxu0 0.0
  %231 = vmatpush1.msra.mxu0 %v171
  %232 = vmatprep.subr.mxu0 0.0
  %233 = vmatpush1.msra.mxu0 %v172
  %234 = vmatprep.subr.mxu0 0.0
  %235 = vmatpush1.msra.mxu0 %v173
  %236 = vmatprep.subr.mxu0 0.0
  %237 = vmatpush1.msra.mxu0 %v174
  %238 = vmatprep.subr.mxu0 0.0
  %239 = vmatpush1.msra.mxu0 %v175
  %240 = vmatprep.mubr.f32.mxu0 %v139
  %241 = vmatmul.mubr.f32.gmra.mrb[0].mxu0 %v138
  %v242 = vpop.f32.mrb[0].mxu0
  %v243 = vadd.f32 0.0, %v242
  %v244 = vpop.f32.mrb[0].mxu0
  %245 = vmatprep.mubr.f32.mxu0 %v141
  %246 = vmatmul.mubr.f32.gmra.mrb[0].mxu0 %v140
  %v247 = vpop.f32.mrb[0].mxu0
  %v248 = vadd.f32 0.0, %v247
  %v249 = vpop.f32.mrb[0].mxu0
  %250 = vdwg.mxu0
  %v251 = vadd.f32 %v142, %v243
  %v252 = vadd.f32 %v143, %v248
  %253 = vst [vmem:[#allocation3] sm:$0xff] %v251
  %254 = vst [vmem:[#allocation3 + $0x8] sm:$0xff] %v252
  // Predicated region
  $region22: #{_lambda_.46} parent=0 // pred_check
    %p255 = pneg %p17
  $region23: #{_lambda_.46} parent=0 // pred_check_branch
    %257 = sbr.rel (%p255) target = $region25
  $region24: #{_lambda_.46} parent=0 // pred_region
    %v258 = vld [vmem:[#allocation3] sm:$0xff]
    %v259 = vld [vmem:[#allocation3 + $0x8] sm:$0xff]
    %v260 = vld [vmem:[%s0] sm:$0xff]
    %v261 = vld [vmem:[%s0 + $0x8] sm:$0xff]
    %v262 = vadd.f32 %v258, %v260
    %v263 = vadd.f32 %v259, %v261
    %264 = vst [vmem:[%s4] sm:$0xff] %v262
    %265 = vst [vmem:[%s4 + $0x8] sm:$0xff] %v263
  $region25: #{_lambda_.46} parent=0 // pred_fallthru
    _
  // Predicated region
  $region26: #{_lambda_.46} parent=0 // pred_check
    _
  $region27: #{_lambda_.46} parent=0 // pred_check_branch
    %267 = sbr.rel (0) target = $region29
  $region28: #{_lambda_.46} parent=0 // pred_region
    _
  $region29: #{_lambda_.46} parent=0 // pred_fallthru
    _
  // Predicated region
  $region30: #{_lambda_.46} parent=0 // pred_check
    _
  $region31: #{_lambda_.46} parent=0 // pred_check_branch
    %269 = sbr.rel (0) target = $region33
  $region32: #{_lambda_.46} parent=0 // pred_region
    _
  $region33: #{_lambda_.46} parent=0 // pred_fallthru
    _

// kernel: _lambda_.40
$region0: #{_lambda_.40}
  #allocation0 [shape = 'u32[]', space=smem, size = 0x4, offset = 0x4, fixed_abs, tag = 'smem constant byte address 0x4 - core index']
  #allocation1 [shape = 'u32[144,128]{1,0:T(1,128)}', space=vmem, size = 0x12000, scoped, tag = 'internal scratch']
  %s0 = inlined_call_operand.vmem [shape: f32[2,4,8,32], index: 0, kind: input, shape index: {}]
  %s1 = inlined_call_operand.vmem [shape: f32[2,4,8,32], index: 1, kind: input, shape index: {}]
  %s2 = inlined_call_operand.vmem [shape: f32[2,4,8,32], index: 2, kind: input, shape index: {}]
  %s3 = inlined_call_operand.vmem [shape: f32[1,4,8,8], index: 3, kind: input, shape index: {}]
  %s4 = inlined_call_operand.vmem [shape: f32[2,1,8,8], index: 4, kind: input, shape index: {}]
  %s5 = inlined_call_operand.vmem [shape: f32[2,4,8,32], index: 5, kind: output, shape index: {0}]
  %s6 = inlined_call_operand.hbm [shape: f32[2,4,8,8], index: 6, kind: output, shape index: {1}]
  %7 = xla_tuple %s5, %s6
  %s8 = sld [smem:[#allocation0]]
  $region61: #{_lambda_.40} parent=0
    _
  %s10 = ssub.s32 1, %s8
  %s11 = scalar_select 0, %s10, %s8
  $region1: #{_lambda_.40} parent=0
    #allocation2 [shape = 'u8[32768]{0}', space=vmem, size = 0x8000, scoped, tag = 'output window, operand 1']
    #allocation3 [shape = 's32[2]{0}', space=sflag, size = 0x8, scoped, tag = 'scoped memory for _lambda_.40']
    %12 = vsyncpa [#allocation3], 0
    %s13 = scalar_lea.sflag [#allocation3], 1
    %14 = vsyncpa %s13, 0
    loop: start=0, step=1, limit=4
    $region2: #{_lambda_.40} parent=1 // loop_pre_header
      _
    $region3: #{_lambda_.40} parent=1 // loop_header
      %s16 = sphi 0, %s20
      %p17 = scmp.ge.s32.totalorder %s16, 4
      %s26 = sphi 0, %s28
      %s29 = sphi 0, %s26
      %s30 = sphi 0, %s29
      %s46 = sphi 0, %s30
      %s52 = sphi 0, %s54
      %s55 = sphi 0, %s52
      %s56 = sphi 0, %s55
      %s72 = sphi 0, %s56
      %s78 = sphi 0, %s80
      %s81 = sphi 0, %s78
      %s82 = sphi 0, %s81
      %s98 = sphi 0, %s82
      %s102 = sphi 0, %s102
      %s104 = sphi 0, %s102
      %s105 = sphi 0, %s104
      %s119 = sphi 0, %s105
      %s125 = sphi 0, %s127
      %s128 = sphi 0, %s125
      %s129 = sphi 0, %s128
      %s145 = sphi 0, %s129
      %s151 = sphi 0, %s153
      %s154 = sphi 0, %s151
      %s155 = sphi 0, %s154
      %s171 = sphi 0, %s155
      %s177 = sphi 0, %s179
      %s180 = sphi 0, %s177
      %s181 = sphi 0, %s180
      %s197 = sphi 0, %s181
    $region4: #{_lambda_.40} parent=1 // loop_header_branch
      %19 = sbr.rel (%p17) target = $region8
    $region5: #{_lambda_.40} parent=1 // loop_body
      %s21 = ssub.s32 %s16, 1
      %s22 = ssub.s32 %s16, 2
      %s23 = sadd.s32 %s16, 1
      %s24 = ssub.s32 %s16, %s23
      %p25 = scmp.eq.s32.totalorder %s24, 0
      %s27 = sadd.s32 %s26, 1
      %s28 = scalar_select %p25, %s26, %s27
      %p31 = pneg %p25
      %p32 = scmp.eq.s32.totalorder %s16, 1
      %p33 = por %p31, %p32
      %p34 = scmp.ne.s32.totalorder %s26, %s29
      %p35 = scmp.eq.s32.totalorder %s16, 0
      %p36 = por %p34, %p35
      %p37 = scmp.ne.s32.totalorder %s26, %s29
      %p38 = scmp.eq.s32.totalorder %s21, 1
      %p39 = por %p37, %p38
      %p40 = scmp.ne.s32.totalorder %s29, %s30
      %p41 = scmp.eq.s32.totalorder %s21, 0
      %p42 = por %p40, %p41
      %p43 = scmp.ne.s32.totalorder %s29, %s30
      %p44 = scmp.eq.s32.totalorder %s22, 1
      %p45 = por %p43, %p44
      %p47 = scmp.ne.s32.totalorder %s30, %s46
      %p48 = scmp.eq.s32.totalorder %s22, 0
      %p49 = por %p47, %p48
      %s50 = ssub.s32 %s16, %s23
      %p51 = scmp.eq.s32.totalorder %s50, 0
      %s53 = sadd.s32 %s52, 1
      %s54 = scalar_select %p51, %s52, %s53
      %p57 = pneg %p51
      %p58 = scmp.eq.s32.totalorder %s16, 1
      %p59 = por %p57, %p58
      %p60 = scmp.ne.s32.totalorder %s52, %s55
      %p61 = scmp.eq.s32.totalorder %s16, 0
      %p62 = por %p60, %p61
      %p63 = scmp.ne.s32.totalorder %s52, %s55
      %p64 = scmp.eq.s32.totalorder %s21, 1
      %p65 = por %p63, %p64
      %p66 = scmp.ne.s32.totalorder %s55, %s56
      %p67 = scmp.eq.s32.totalorder %s21, 0
      %p68 = por %p66, %p67
      %p69 = scmp.ne.s32.totalorder %s55, %s56
      %p70 = scmp.eq.s32.totalorder %s22, 1
      %p71 = por %p69, %p70
      %p73 = scmp.ne.s32.totalorder %s56, %s72
      %p74 = scmp.eq.s32.totalorder %s22, 0
      %p75 = por %p73, %p74
      %s76 = ssub.s32 %s16, %s23
      %p77 = scmp.eq.s32.totalorder %s76, 0
      %s79 = sadd.s32 %s78, 1
      %s80 = scalar_select %p77, %s78, %s79
      %p83 = pneg %p77
      %p84 = scmp.eq.s32.totalorder %s16, 1
      %p85 = por %p83, %p84
      %p86 = scmp.ne.s32.totalorder %s78, %s81
      %p87 = scmp.eq.s32.totalorder %s16, 0
      %p88 = por %p86, %p87
      %p89 = scmp.ne.s32.totalorder %s78, %s81
      %p90 = scmp.eq.s32.totalorder %s21, 1
      %p91 = por %p89, %p90
      %p92 = scmp.ne.s32.totalorder %s81, %s82
      %p93 = scmp.eq.s32.totalorder %s21, 0
      %p94 = por %p92, %p93
      %p95 = scmp.ne.s32.totalorder %s81, %s82
      %p96 = scmp.eq.s32.totalorder %s22, 1
      %p97 = por %p95, %p96
      %p99 = scmp.ne.s32.totalorder %s82, %s98
      %p100 = scmp.eq.s32.totalorder %s22, 0
      %p101 = por %p99, %p100
      %s103 = sadd.s32 %s102, 1
      %p106 = scmp.eq.s32.totalorder %s16, 1
      %p107 = scmp.ne.s32.totalorder %s102, %s104
      %p108 = scmp.eq.s32.totalorder %s16, 0
      %p109 = por %p107, %p108
      %p110 = scmp.ne.s32.totalorder %s102, %s104
      %p111 = scmp.eq.s32.totalorder %s21, 1
      %p112 = por %p110, %p111
      %p113 = scmp.ne.s32.totalorder %s104, %s105
      %p114 = scmp.eq.s32.totalorder %s21, 0
      %p115 = por %p113, %p114
      %p116 = scmp.ne.s32.totalorder %s104, %s105
      %p117 = scmp.eq.s32.totalorder %s22, 1
      %p118 = por %p116, %p117
      %p120 = scmp.ne.s32.totalorder %s105, %s119
      %p121 = scmp.eq.s32.totalorder %s22, 0
      %p122 = por %p120, %p121
      %s123 = ssub.s32 %s16, %s23
      %p124 = scmp.eq.s32.totalorder %s123, 0
      %s126 = sadd.s32 %s125, 1
      %s127 = scalar_select %p124, %s125, %s126
      %p130 = pneg %p124
      %p131 = scmp.eq.s32.totalorder %s16, 1
      %p132 = por %p130, %p131
      %p133 = scmp.ne.s32.totalorder %s125, %s128
      %p134 = scmp.eq.s32.totalorder %s16, 0
      %p135 = por %p133, %p134
      %p136 = scmp.ne.s32.totalorder %s125, %s128
      %p137 = scmp.eq.s32.totalorder %s21, 1
      %p138 = por %p136, %p137
      %p139 = scmp.ne.s32.totalorder %s128, %s129
      %p140 = scmp.eq.s32.totalorder %s21, 0
      %p141 = por %p139, %p140
      %p142 = scmp.ne.s32.totalorder %s128, %s129
      %p143 = scmp.eq.s32.totalorder %s22, 1
      %p144 = por %p142, %p143
      %p146 = scmp.ne.s32.totalorder %s129, %s145
      %p147 = scmp.eq.s32.totalorder %s22, 0
      %p148 = por %p146, %p147
      %s149 = ssub.s32 %s16, %s23
      %p150 = scmp.eq.s32.totalorder %s149, 0
      %s152 = sadd.s32 %s151, 1
      %s153 = scalar_select %p150, %s151, %s152
      %p156 = pneg %p150
      %p157 = scmp.eq.s32.totalorder %s16, 1
      %p158 = por %p156, %p157
      %p159 = scmp.ne.s32.totalorder %s151, %s154
      %p160 = scmp.eq.s32.totalorder %s16, 0
      %p161 = por %p159, %p160
      %p162 = scmp.ne.s32.totalorder %s151, %s154
      %p163 = scmp.eq.s32.totalorder %s21, 1
      %p164 = por %p162, %p163
      %p165 = scmp.ne.s32.totalorder %s154, %s155
      %p166 = scmp.eq.s32.totalorder %s21, 0
      %p167 = por %p165, %p166
      %p168 = scmp.ne.s32.totalorder %s154, %s155
      %p169 = scmp.eq.s32.totalorder %s22, 1
      %p170 = por %p168, %p169
      %p172 = scmp.ne.s32.totalorder %s155, %s171
      %p173 = scmp.eq.s32.totalorder %s22, 0
      %p174 = por %p172, %p173
      %s175 = ssub.s32 %s16, %s23
      %p176 = scmp.eq.s32.totalorder %s175, 0
      %s178 = sadd.s32 %s177, 1
      %s179 = scalar_select %p176, %s177, %s178
      %p182 = pneg %p176
      %p183 = scmp.eq.s32.totalorder %s16, 1
      %p184 = por %p182, %p183
      %p185 = scmp.ne.s32.totalorder %s177, %s180
      %p186 = scmp.eq.s32.totalorder %s16, 0
      %p187 = por %p185, %p186
      %p188 = scmp.ne.s32.totalorder %s177, %s180
      %p189 = scmp.eq.s32.totalorder %s21, 1
      %p190 = por %p188, %p189
      %p191 = scmp.ne.s32.totalorder %s180, %s181
      %p192 = scmp.eq.s32.totalorder %s21, 0
      %p193 = por %p191, %p192
      %p194 = scmp.ne.s32.totalorder %s180, %s181
      %p195 = scmp.eq.s32.totalorder %s22, 1
      %p196 = por %p194, %p195
      %p198 = scmp.ne.s32.totalorder %s181, %s197
      %p199 = scmp.eq.s32.totalorder %s22, 0
      %p200 = por %p198, %p199
      %p201 = scmp.le.s32.totalorder 1, %s16
      %p202 = scmp.lt.s32.totalorder %s16, 3
      %p203 = pnand %p201, %p202
      %p204 = pneg %p203
      // Predicated region
      $region9: #{_lambda_.40} parent=5 // pred_check
        _
      $region10: #{_lambda_.40} parent=5 // pred_check_branch
        %206 = sbr.rel (%p203) target = $region12
      $region11: #{_lambda_.40} parent=5 // pred_region
        %s207 = ssub.s32 %s16, 1
        // Predicated region
        $region13: #{_lambda_.40} parent=11 // pred_check
          %p208 = pneg %p115
        $region14: #{_lambda_.40} parent=11 // pred_check_branch
          %210 = sbr.rel (%p208) target = $region16
        $region15: #{_lambda_.40} parent=11 // pred_region
          _
        $region16: #{_lambda_.40} parent=11 // pred_fallthru
          _
      $region12: #{_lambda_.40} parent=5 // pred_fallthru
        _
      %p211 = scmp.lt.s32.totalorder %s16, 2
      // Predicated region
      $region17: #{_lambda_.40} parent=5 // pred_check
        %p212 = pneg %p211
      $region18: #{_lambda_.40} parent=5 // pred_check_branch
        %214 = sbr.rel (%p212) target = $region20
      $region19: #{_lambda_.40} parent=5 // pred_region
        // Predicated region
        $region21: #{_lambda_.40} parent=19 // pred_check
          %p215 = pneg %p36
        $region22: #{_lambda_.40} parent=19 // pred_check_branch
          %217 = sbr.rel (%p215) target = $region24
        $region23: #{_lambda_.40} parent=19 // pred_region
          %p218 = scmp.lt.s32.totalorder %s16, 1
          %s219 = scalar_select %p218, %s16, 1
          %s220 = smul.addr %s219, 4
          %s221 = smul.addr %s220, 8
          %s222 = scalar_lea.vmem %s0, %s221
        $region24: #{_lambda_.40} parent=19 // pred_fallthru
          _
        // Predicated region
        $region25: #{_lambda_.40} parent=19 // pred_check
          %p223 = pneg %p62
        $region26: #{_lambda_.40} parent=19 // pred_check_branch
          %225 = sbr.rel (%p223) target = $region28
        $region27: #{_lambda_.40} parent=19 // pred_region
          %p226 = scmp.lt.s32.totalorder %s16, 1
          %s227 = scalar_select %p226, %s16, 1
          %s228 = smul.addr %s227, 4
          %s229 = smul.addr %s228, 8
          %s230 = scalar_lea.vmem %s1, %s229
        $region28: #{_lambda_.40} parent=19 // pred_fallthru
          _
        // Predicated region
        $region29: #{_lambda_.40} parent=19 // pred_check
          %p231 = pneg %p88
        $region30: #{_lambda_.40} parent=19 // pred_check_branch
          %233 = sbr.rel (%p231) target = $region32
        $region31: #{_lambda_.40} parent=19 // pred_region
          %p234 = scmp.lt.s32.totalorder %s16, 1
          %s235 = scalar_select %p234, %s16, 1
          %s236 = smul.addr %s235, 4
          %s237 = smul.addr %s236, 8
          %s238 = scalar_lea.vmem %s2, %s237
        $region32: #{_lambda_.40} parent=19 // pred_fallthru
          _
        // Predicated region
        $region33: #{_lambda_.40} parent=19 // pred_check
          %p239 = pneg %p135
        $region34: #{_lambda_.40} parent=19 // pred_check_branch
          %241 = sbr.rel (%p239) target = $region36
        $region35: #{_lambda_.40} parent=19 // pred_region
          %p242 = scmp.lt.s32.totalorder %s16, 1
          %s243 = scalar_select %p242, %s16, 1
          %s244 = smul.addr %s243, 8
          %s245 = scalar_lea.vmem %s4, %s244
        $region36: #{_lambda_.40} parent=19 // pred_fallthru
          _
      $region20: #{_lambda_.40} parent=5 // pred_fallthru
        _
      %p246 = scmp.le.s32.totalorder 1, %s16
      %p247 = scmp.lt.s32.totalorder %s16, 3
      %p248 = pnand %p246, %p247
      %p249 = pneg %p248
      // Predicated region
      $region37: #{_lambda_.40} parent=5 // pred_check
        _
      $region38: #{_lambda_.40} parent=5 // pred_check_branch
        %251 = sbr.rel (%p248) target = $region40
      $region39: #{_lambda_.40} parent=5 // pred_region
        %s252 = ssub.s32 %s16, 1
        %p253 = scmp.lt.s32.totalorder %s21, 1
        %s254 = scalar_select %p253, %s21, 1
        %s255 = smul.addr %s254, 4
        %s256 = smul.addr %s255, 8
        %s257 = scalar_lea.vmem %s0, %s256
        %p258 = pneg %p42
        %p259 = pneg %p39
        %p260 = scmp.lt.s32.totalorder %s21, 1
        %s261 = scalar_select %p260, %s21, 1
        %s262 = smul.addr %s261, 4
        %s263 = smul.addr %s262, 8
        %s264 = scalar_lea.vmem %s1, %s263
        %p265 = pneg %p68
        %p266 = pneg %p65
        %p267 = scmp.lt.s32.totalorder %s21, 1
        %s268 = scalar_select %p267, %s21, 1
        %s269 = smul.addr %s268, 4
        %s270 = smul.addr %s269, 8
        %s271 = scalar_lea.vmem %s2, %s270
        %p272 = pneg %p94
        %p273 = pneg %p91
        %p274 = pneg %p115
        %p275 = pneg %p112
        %p276 = scmp.lt.s32.totalorder %s21, 1
        %s277 = scalar_select %p276, %s21, 1
        %s278 = smul.addr %s277, 8
        %s279 = scalar_lea.vmem %s4, %s278
        %p280 = pneg %p141
        %p281 = pneg %p138
        %p282 = pneg %p167
        %p283 = pneg %p164
        %p284 = scmp.lt.s32.totalorder %s21, 1
        %s285 = scalar_select %p284, %s21, 1
        %s286 = smul.addr %s285, 4
        %s287 = smul.addr %s286, 8
        %s288 = scalar_lea.vmem %s5, %s287
        %p289 = pneg %p193
        %p290 = pneg %p190
        %s291 = sand.u32 %s180, 1
        %s292 = scalar_lea.sflag [#allocation3], %s291
        %s293 = sand.u32 %s180, 1
        %s294 = smul.addr %s293, 32
        %s295 = scalar_lea.vmem [#allocation2], %s294
        %p296 = scmp.lt.s32.totalorder %s21, 1
        %s297 = scalar_select %p296, %s21, 1
        %s298 = smul.addr %s297, 4
        %s299 = smul.addr %s298, 8
        %s300 = scalar_lea.vmem %s0, %s299
        %p301 = scmp.lt.s32.totalorder %s21, 1
        %s302 = scalar_select %p301, %s21, 1
        %s303 = smul.addr %s302, 4
        %s304 = smul.addr %s303, 8
        %s305 = scalar_lea.vmem %s1, %s304
        %p306 = scmp.lt.s32.totalorder %s21, 1
        %s307 = scalar_select %p306, %s21, 1
        %s308 = smul.addr %s307, 4
        %s309 = smul.addr %s308, 8
        %s310 = scalar_lea.vmem %s2, %s309
        %p311 = scmp.lt.s32.totalorder %s21, 1
        %s312 = scalar_select %p311, %s21, 1
        %s313 = smul.addr %s312, 8
        %s314 = scalar_lea.vmem %s4, %s313
        %p315 = scmp.lt.s32.totalorder %s21, 1
        %s316 = scalar_select %p315, %s21, 1
        %s317 = smul.addr %s316, 4
        %s318 = smul.addr %s317, 8
        %s319 = scalar_lea.vmem %s5, %s318
        %v320 = vld [vmem:[%s300] sm:$0xff]
        %v321 = vld [vmem:[%s300 + $0x8] sm:$0xff]
        %v322 = vld [vmem:[%s300 + $0x10] sm:$0xff]
        %v323 = vld [vmem:[%s300 + $0x18] sm:$0xff]
        %v324 = vld [vmem:[%s305] sm:$0xff]
        %v325 = vld [vmem:[%s305 + $0x8] sm:$0xff]
        %v326 = vld [vmem:[%s305 + $0x10] sm:$0xff]
        %v327 = vld [vmem:[%s305 + $0x18] sm:$0xff]
        %v328 = vld [vmem:[%s310] sm:$0xff]
        %v329 = vld [vmem:[%s310 + $0x8] sm:$0xff]
        %v330 = vld [vmem:[%s310 + $0x10] sm:$0xff]
        %v331 = vld [vmem:[%s310 + $0x18] sm:$0xff]
        %v332 = vld [vmem:[%s3] sm:$0xff]
        %v333 = vld [vmem:[%s3 + $0x8] sm:$0xff]
        %v334 = vld [vmem:[%s3 + $0x10] sm:$0xff]
        %v335 = vld [vmem:[%s3 + $0x18] sm:$0xff]
        %vm336 = vcmask 261120
        %v338 = vsel %vm336, %v320, 0
        %v341 = vsel %vm336, %v324, 0
        %343 = vmatprep.subr.mxu0 0.0
        %344 = vmatpush1.xpose.msra.mxu0 %v341
        %345 = vmatprep.subr.mxu0 0.0
        %346 = vmatpush1.xpose.msra.mxu0 0.0
        %347 = vmatprep.subr.mxu0 0.0
        %348 = vmatpush1.xpose.msra.mxu0 0.0
        %349 = vmatprep.subr.mxu0 0.0
        %350 = vmatpush1.xpose.msra.mxu0 0.0
        %351 = vmatprep.subr.mxu0 0.0
        %352 = vmatpush1.xpose.msra.mxu0 0.0
        %353 = vmatprep.subr.mxu0 0.0
        %354 = vmatpush1.xpose.msra.mxu0 0.0
        %355 = vmatprep.subr.mxu0 0.0
        %356 = vmatpush1.xpose.msra.mxu0 0.0
        %357 = vmatprep.subr.mxu0 0.0
        %358 = vmatpush1.xpose.msra.mxu0 0.0
        %359 = vmatprep.subr.mxu0 0.0
        %360 = vmatpush1.xpose.msra.mxu0 0.0
        %361 = vmatprep.subr.mxu0 0.0
        %362 = vmatpush1.xpose.msra.mxu0 0.0
        %363 = vmatprep.subr.mxu0 0.0
        %364 = vmatpush1.xpose.msra.mxu0 0.0
        %365 = vmatprep.subr.mxu0 0.0
        %366 = vmatpush1.xpose.msra.mxu0 0.0
        %367 = vmatprep.subr.mxu0 0.0
        %368 = vmatpush1.xpose.msra.mxu0 0.0
        %369 = vmatprep.subr.mxu0 0.0
        %370 = vmatpush1.xpose.msra.mxu0 0.0
        %371 = vmatprep.subr.mxu0 0.0
        %372 = vmatpush1.xpose.msra.mxu0 0.0
        %373 = vmatprep.subr.mxu0 0.0
        %374 = vmatpush1.xpose.msra.mxu0 0.0
        %375 = vmatprep.subr.mxu0 0.0
        %376 = vmatpush1.xpose.msra.mxu0 0.0
        %377 = vmatprep.subr.mxu0 0.0
        %378 = vmatpush1.xpose.msra.mxu0 0.0
        %379 = vmatprep.subr.mxu0 0.0
        %380 = vmatpush1.xpose.msra.mxu0 0.0
        %381 = vmatprep.subr.mxu0 0.0
        %382 = vmatpush1.xpose.msra.mxu0 0.0
        %383 = vmatprep.subr.mxu0 0.0
        %384 = vmatpush1.xpose.msra.mxu0 0.0
        %385 = vmatprep.subr.mxu0 0.0
        %386 = vmatpush1.xpose.msra.mxu0 0.0
        %387 = vmatprep.subr.mxu0 0.0
        %388 = vmatpush1.xpose.msra.mxu0 0.0
        %389 = vmatprep.subr.mxu0 0.0
        %390 = vmatpush1.xpose.msra.mxu0 0.0
        %391 = vmatprep.subr.mxu0 0.0
        %392 = vmatpush1.xpose.msra.mxu0 0.0
        %393 = vmatprep.subr.mxu0 0.0
        %394 = vmatpush1.xpose.msra.mxu0 0.0
        %395 = vmatprep.subr.mxu0 0.0
        %396 = vmatpush1.xpose.msra.mxu0 0.0
        %397 = vmatprep.subr.mxu0 0.0
        %398 = vmatpush1.xpose.msra.mxu0 0.0
        %399 = vmatprep.subr.mxu0 0.0
        %400 = vmatpush1.xpose.msra.mxu0 0.0
        %401 = vmatprep.subr.mxu0 0.0
        %402 = vmatpush1.xpose.msra.mxu0 0.0
        %403 = vmatprep.subr.mxu0 0.0
        %404 = vmatpush1.xpose.msra.mxu0 0.0
        %405 = vmatprep.subr.mxu0 0.0
        %406 = vmatpush1.xpose.msra.mxu0 0.0
        %407 = vmatprep.mubr.f32.mxu0 0.0
        %408 = vmatmul.mubr.f32.gmra.mrb[0].mxu0 %v338
        %v409 = vpop.f32.mrb[0].mxu0
        %v410 = vadd.f32 %v332, %v409
        %v411 = vpop.f32.mrb[0].mxu0
        %412 = vdwg.mxu0
        %v414 = vsel %vm336, %v321, 0
        %v417 = vsel %vm336, %v325, 0
        %419 = vmatprep.subr.mxu0 0.0
        %420 = vmatpush1.xpose.msra.mxu0 %v417
        %421 = vmatprep.subr.mxu0 0.0
        %422 = vmatpush1.xpose.msra.mxu0 0.0
        %423 = vmatprep.subr.mxu0 0.0
        %424 = vmatpush1.xpose.msra.mxu0 0.0
        %425 = vmatprep.subr.mxu0 0.0
        %426 = vmatpush1.xpose.msra.mxu0 0.0
        %427 = vmatprep.subr.mxu0 0.0
        %428 = vmatpush1.xpose.msra.mxu0 0.0
        %429 = vmatprep.subr.mxu0 0.0
        %430 = vmatpush1.xpose.msra.mxu0 0.0
        %431 = vmatprep.subr.mxu0 0.0
        %432 = vmatpush1.xpose.msra.mxu0 0.0
        %433 = vmatprep.subr.mxu0 0.0
        %434 = vmatpush1.xpose.msra.mxu0 0.0
        %435 = vmatprep.subr.mxu0 0.0
        %436 = vmatpush1.xpose.msra.mxu0 0.0
        %437 = vmatprep.subr.mxu0 0.0
        %438 = vmatpush1.xpose.msra.mxu0 0.0
        %439 = vmatprep.subr.mxu0 0.0
        %440 = vmatpush1.xpose.msra.mxu0 0.0
        %441 = vmatprep.subr.mxu0 0.0
        %442 = vmatpush1.xpose.msra.mxu0 0.0
        %443 = vmatprep.subr.mxu0 0.0
        %444 = vmatpush1.xpose.msra.mxu0 0.0
        %445 = vmatprep.subr.mxu0 0.0
        %446 = vmatpush1.xpose.msra.mxu0 0.0
        %447 = vmatprep.subr.mxu0 0.0
        %448 = vmatpush1.xpose.msra.mxu0 0.0
        %449 = vmatprep.subr.mxu0 0.0
        %450 = vmatpush1.xpose.msra.mxu0 0.0
        %451 = vmatprep.subr.mxu0 0.0
        %452 = vmatpush1.xpose.msra.mxu0 0.0
        %453 = vmatprep.subr.mxu0 0.0
        %454 = vmatpush1.xpose.msra.mxu0 0.0
        %455 = vmatprep.subr.mxu0 0.0
        %456 = vmatpush1.xpose.msra.mxu0 0.0
        %457 = vmatprep.subr.mxu0 0.0
        %458 = vmatpush1.xpose.msra.mxu0 0.0
        %459 = vmatprep.subr.mxu0 0.0
        %460 = vmatpush1.xpose.msra.mxu0 0.0
        %461 = vmatprep.subr.mxu0 0.0
        %462 = vmatpush1.xpose.msra.mxu0 0.0
        %463 = vmatprep.subr.mxu0 0.0
        %464 = vmatpush1.xpose.msra.mxu0 0.0
        %465 = vmatprep.subr.mxu0 0.0
        %466 = vmatpush1.xpose.msra.mxu0 0.0
        %467 = vmatprep.subr.mxu0 0.0
        %468 = vmatpush1.xpose.msra.mxu0 0.0
        %469 = vmatprep.subr.mxu0 0.0
        %470 = vmatpush1.xpose.msra.mxu0 0.0
        %471 = vmatprep.subr.mxu0 0.0
        %472 = vmatpush1.xpose.msra.mxu0 0.0
        %473 = vmatprep.subr.mxu0 0.0
        %474 = vmatpush1.xpose.msra.mxu0 0.0
        %475 = vmatprep.subr.mxu0 0.0
        %476 = vmatpush1.xpose.msra.mxu0 0.0
        %477 = vmatprep.subr.mxu0 0.0
        %478 = vmatpush1.xpose.msra.mxu0 0.0
        %479 = vmatprep.subr.mxu0 0.0
        %480 = vmatpush1.xpose.msra.mxu0 0.0
        %481 = vmatprep.subr.mxu0 0.0
        %482 = vmatpush1.xpose.msra.mxu0 0.0
        %483 = vmatprep.mubr.f32.mxu0 0.0
        %484 = vmatmul.mubr.f32.gmra.mrb[0].mxu0 %v414
        %v485 = vpop.f32.mrb[0].mxu0
        %v486 = vadd.f32 %v333, %v485
        %v487 = vpop.f32.mrb[0].mxu0
        %488 = vdwg.mxu0
        %v490 = vsel %vm336, %v322, 0
        %v493 = vsel %vm336, %v326, 0
        %495 = vmatprep.subr.mxu0 0.0
        %496 = vmatpush1.xpose.msra.mxu0 %v493
        %497 = vmatprep.subr.mxu0 0.0
        %498 = vmatpush1.xpose.msra.mxu0 0.0
        %499 = vmatprep.subr.mxu0 0.0
        %500 = vmatpush1.xpose.msra.mxu0 0.0
        %501 = vmatprep.subr.mxu0 0.0
        %502 = vmatpush1.xpose.msra.mxu0 0.0
        %503 = vmatprep.subr.mxu0 0.0
        %504 = vmatpush1.xpose.msra.mxu0 0.0
        %505 = vmatprep.subr.mxu0 0.0
        %506 = vmatpush1.xpose.msra.mxu0 0.0
        %507 = vmatprep.subr.mxu0 0.0
        %508 = vmatpush1.xpose.msra.mxu0 0.0
        %509 = vmatprep.subr.mxu0 0.0
        %510 = vmatpush1.xpose.msra.mxu0 0.0
        %511 = vmatprep.subr.mxu0 0.0
        %512 = vmatpush1.xpose.msra.mxu0 0.0
        %513 = vmatprep.subr.mxu0 0.0
        %514 = vmatpush1.xpose.msra.mxu0 0.0
        %515 = vmatprep.subr.mxu0 0.0
        %516 = vmatpush1.xpose.msra.mxu0 0.0
        %517 = vmatprep.subr.mxu0 0.0
        %518 = vmatpush1.xpose.msra.mxu0 0.0
        %519 = vmatprep.subr.mxu0 0.0
        %520 = vmatpush1.xpose.msra.mxu0 0.0
        %521 = vmatprep.subr.mxu0 0.0
        %522 = vmatpush1.xpose.msra.mxu0 0.0
        %523 = vmatprep.subr.mxu0 0.0
        %524 = vmatpush1.xpose.msra.mxu0 0.0
        %525 = vmatprep.subr.mxu0 0.0
        %526 = vmatpush1.xpose.msra.mxu0 0.0
        %527 = vmatprep.subr.mxu0 0.0
        %528 = vmatpush1.xpose.msra.mxu0 0.0
        %529 = vmatprep.subr.mxu0 0.0
        %530 = vmatpush1.xpose.msra.mxu0 0.0
        %531 = vmatprep.subr.mxu0 0.0
        %532 = vmatpush1.xpose.msra.mxu0 0.0
        %533 = vmatprep.subr.mxu0 0.0
        %534 = vmatpush1.xpose.msra.mxu0 0.0
        %535 = vmatprep.subr.mxu0 0.0
        %536 = vmatpush1.xpose.msra.mxu0 0.0
        %537 = vmatprep.subr.mxu0 0.0
        %538 = vmatpush1.xpose.msra.mxu0 0.0
        %539 = vmatprep.subr.mxu0 0.0
        %540 = vmatpush1.xpose.msra.mxu0 0.0
        %541 = vmatprep.subr.mxu0 0.0
        %542 = vmatpush1.xpose.msra.mxu0 0.0
        %543 = vmatprep.subr.mxu0 0.0
        %544 = vmatpush1.xpose.msra.mxu0 0.0
        %545 = vmatprep.subr.mxu0 0.0
        %546 = vmatpush1.xpose.msra.mxu0 0.0
        %547 = vmatprep.subr.mxu0 0.0
        %548 = vmatpush1.xpose.msra.mxu0 0.0
        %549 = vmatprep.subr.mxu0 0.0
        %550 = vmatpush1.xpose.msra.mxu0 0.0
        %551 = vmatprep.subr.mxu0 0.0
        %552 = vmatpush1.xpose.msra.mxu0 0.0
        %553 = vmatprep.subr.mxu0 0.0
        %554 = vmatpush1.xpose.msra.mxu0 0.0
        %555 = vmatprep.subr.mxu0 0.0
        %556 = vmatpush1.xpose.msra.mxu0 0.0
        %557 = vmatprep.subr.mxu0 0.0
        %558 = vmatpush1.xpose.msra.mxu0 0.0
        %559 = vmatprep.mubr.f32.mxu0 0.0
        %560 = vmatmul.mubr.f32.gmra.mrb[0].mxu0 %v490
        %v561 = vpop.f32.mrb[0].mxu0
        %v562 = vadd.f32 %v334, %v561
        %v563 = vpop.f32.mrb[0].mxu0
        %564 = vdwg.mxu0
        %v566 = vsel %vm336, %v323, 0
        %v569 = vsel %vm336, %v327, 0
        %571 = vmatprep.subr.mxu0 0.0
        %572 = vmatpush1.xpose.msra.mxu0 %v569
        %573 = vmatprep.subr.mxu0 0.0
        %574 = vmatpush1.xpose.msra.mxu0 0.0
        %575 = vmatprep.subr.mxu0 0.0
        %576 = vmatpush1.xpose.msra.mxu0 0.0
        %577 = vmatprep.subr.mxu0 0.0
        %578 = vmatpush1.xpose.msra.mxu0 0.0
        %579 = vmatprep.subr.mxu0 0.0
        %580 = vmatpush1.xpose.msra.mxu0 0.0
        %581 = vmatprep.subr.mxu0 0.0
        %582 = vmatpush1.xpose.msra.mxu0 0.0
        %583 = vmatprep.subr.mxu0 0.0
        %584 = vmatpush1.xpose.msra.mxu0 0.0
        %585 = vmatprep.subr.mxu0 0.0
        %586 = vmatpush1.xpose.msra.mxu0 0.0
        %587 = vmatprep.subr.mxu0 0.0
        %588 = vmatpush1.xpose.msra.mxu0 0.0
        %589 = vmatprep.subr.mxu0 0.0
        %590 = vmatpush1.xpose.msra.mxu0 0.0
        %591 = vmatprep.subr.mxu0 0.0
        %592 = vmatpush1.xpose.msra.mxu0 0.0
        %593 = vmatprep.subr.mxu0 0.0
        %594 = vmatpush1.xpose.msra.mxu0 0.0
        %595 = vmatprep.subr.mxu0 0.0
        %596 = vmatpush1.xpose.msra.mxu0 0.0
        %597 = vmatprep.subr.mxu0 0.0
        %598 = vmatpush1.xpose.msra.mxu0 0.0
        %599 = vmatprep.subr.mxu0 0.0
        %600 = vmatpush1.xpose.msra.mxu0 0.0
        %601 = vmatprep.subr.mxu0 0.0
        %602 = vmatpush1.xpose.msra.mxu0 0.0
        %603 = vmatprep.subr.mxu0 0.0
        %604 = vmatpush1.xpose.msra.mxu0 0.0
        %605 = vmatprep.subr.mxu0 0.0
        %606 = vmatpush1.xpose.msra.mxu0 0.0
        %607 = vmatprep.subr.mxu0 0.0
        %608 = vmatpush1.xpose.msra.mxu0 0.0
        %609 = vmatprep.subr.mxu0 0.0
        %610 = vmatpush1.xpose.msra.mxu0 0.0
        %611 = vmatprep.subr.mxu0 0.0
        %612 = vmatpush1.xpose.msra.mxu0 0.0
        %613 = vmatprep.subr.mxu0 0.0
        %614 = vmatpush1.xpose.msra.mxu0 0.0
        %615 = vmatprep.subr.mxu0 0.0
        %616 = vmatpush1.xpose.msra.mxu0 0.0
        %617 = vmatprep.subr.mxu0 0.0
        %618 = vmatpush1.xpose.msra.mxu0 0.0
        %619 = vmatprep.subr.mxu0 0.0
        %620 = vmatpush1.xpose.msra.mxu0 0.0
        %621 = vmatprep.subr.mxu0 0.0
        %622 = vmatpush1.xpose.msra.mxu0 0.0
        %623 = vmatprep.subr.mxu0 0.0
        %624 = vmatpush1.xpose.msra.mxu0 0.0
        %625 = vmatprep.subr.mxu0 0.0
        %626 = vmatpush1.xpose.msra.mxu0 0.0
        %627 = vmatprep.subr.mxu0 0.0
        %628 = vmatpush1.xpose.msra.mxu0 0.0
        %629 = vmatprep.subr.mxu0 0.0
        %630 = vmatpush1.xpose.msra.mxu0 0.0
        %631 = vmatprep.subr.mxu0 0.0
        %632 = vmatpush1.xpose.msra.mxu0 0.0
        %633 = vmatprep.subr.mxu0 0.0
        %634 = vmatpush1.xpose.msra.mxu0 0.0
        %635 = vmatprep.mubr.f32.mxu0 0.0
        %636 = vmatmul.mubr.f32.gmra.mrb[0].mxu0 %v566
        %v637 = vpop.f32.mrb[0].mxu0
        %v638 = vadd.f32 %v335, %v637
        %v639 = vpop.f32.mrb[0].mxu0
        %640 = vdwg.mxu0
        %v641 = vld [vmem:[%s314] sm:$0xff]
        %v642 = vadd.f32 %v410, %v641
        %v643 = vadd.f32 %v486, %v641
        %v644 = vadd.f32 %v562, %v641
        %v645 = vadd.f32 %v638, %v641
        %vm646 = vcmask 64512
        %v647 = vsel %vm646, %v642, -inf
        %648 = vmax.xlane.f32.xlu0 %v647
        %v649 = vpop.xlane.xlu0 %648
        %v650 = vsel %vm646, %v643, -inf
        %651 = vmax.xlane.f32.xlu0 %v650
        %v652 = vpop.xlane.xlu0 %651
        %v653 = vsel %vm646, %v644, -inf
        %654 = vmax.xlane.f32.xlu0 %v653
        %v655 = vpop.xlane.xlu0 %654
        %v656 = vsel %vm646, %v645, -inf
        %657 = vmax.xlane.f32.xlu0 %v656
        %v658 = vpop.xlane.xlu0 %657
        %v659 = vsub.f32 %v642, %v649
        %v660 = vsub.f32 %v643, %v652
        %v661 = vsub.f32 %v644, %v655
        %v662 = vsub.f32 %v645, %v658
        %v663 = vmul.f32 %v659, 1.442695
        %v664 = vpow.pop %v663
        %v665 = vmul.f32 %v660, 1.442695
        %v666 = vpow.pop %v665
        %v667 = vmul.f32 %v661, 1.442695
        %v668 = vpow.pop %v667
        %v669 = vmul.f32 %v662, 1.442695
        %v670 = vpow.pop %v669
        %v671 = vsel %vm646, %v664, 0.0
        %672 = vadd.xlane.f32.xlu0 %v671
        %v673 = vpop.xlane.xlu0 %672
        %v674 = vsel %vm646, %v666, 0.0
        %675 = vadd.xlane.f32.xlu0 %v674
        %v676 = vpop.xlane.xlu0 %675
        %v677 = vsel %vm646, %v668, 0.0
        %678 = vadd.xlane.f32.xlu0 %v677
        %v679 = vpop.xlane.xlu0 %678
        %v680 = vsel %vm646, %v670, 0.0
        %681 = vadd.xlane.f32.xlu0 %v680
        %v682 = vpop.xlane.xlu0 %681
        %v683 = vrcp.pop %v673
        %v684 = vrcp.pop %v676
        %v685 = vrcp.pop %v679
        %v686 = vrcp.pop %v682
        %v687 = vmul.f32 %v664, %v683
        %v688 = vmul.f32 %v666, %v684
        %v689 = vmul.f32 %v668, %v685
        %v690 = vmul.f32 %v670, %v686
        %691 = vst.msk [vmem:[%s295] sm:$0xff] %vm646, %v687
        %692 = vst.msk [vmem:[%s295 + $0x8] sm:$0xff] %vm646, %v688
        %693 = vst.msk [vmem:[%s295 + $0x10] sm:$0xff] %vm646, %v689
        %694 = vst.msk [vmem:[%s295 + $0x18] sm:$0xff] %vm646, %v690
        %v696 = vsel %vm646, %v687, 0
        %698 = vmatprep.subr.mxu0 0.0
        %699 = vmatpush1.msra.mxu0 %v328
        %700 = vmatprep.subr.mxu0 0.0
        %701 = vmatpush1.msra.mxu0 0.0
        %702 = vmatprep.subr.mxu0 0.0
        %703 = vmatpush1.msra.mxu0 0.0
        %704 = vmatprep.subr.mxu0 0.0
        %705 = vmatpush1.msra.mxu0 0.0
        %706 = vmatprep.subr.mxu0 0.0
        %707 = vmatpush1.msra.mxu0 0.0
        %708 = vmatprep.subr.mxu0 0.0
        %709 = vmatpush1.msra.mxu0 0.0
        %710 = vmatprep.subr.mxu0 0.0
        %711 = vmatpush1.msra.mxu0 0.0
        %712 = vmatprep.subr.mxu0 0.0
        %713 = vmatpush1.msra.mxu0 0.0
        %714 = vmatprep.subr.mxu0 0.0
        %715 = vmatpush1.msra.mxu0 0.0
        %716 = vmatprep.subr.mxu0 0.0
        %717 = vmatpush1.msra.mxu0 0.0
        %718 = vmatprep.subr.mxu0 0.0
        %719 = vmatpush1.msra.mxu0 0.0
        %720 = vmatprep.subr.mxu0 0.0
        %721 = vmatpush1.msra.mxu0 0.0
        %722 = vmatprep.subr.mxu0 0.0
        %723 = vmatpush1.msra.mxu0 0.0
        %724 = vmatprep.subr.mxu0 0.0
        %725 = vmatpush1.msra.mxu0 0.0
        %726 = vmatprep.subr.mxu0 0.0
        %727 = vmatpush1.msra.mxu0 0.0
        %728 = vmatprep.subr.mxu0 0.0
        %729 = vmatpush1.msra.mxu0 0.0
        %730 = vmatprep.subr.mxu0 0.0
        %731 = vmatpush1.msra.mxu0 0.0
        %732 = vmatprep.subr.mxu0 0.0
        %733 = vmatpush1.msra.mxu0 0.0
        %734 = vmatprep.subr.mxu0 0.0
        %735 = vmatpush1.msra.mxu0 0.0
        %736 = vmatprep.subr.mxu0 0.0
        %737 = vmatpush1.msra.mxu0 0.0
        %738 = vmatprep.subr.mxu0 0.0
        %739 = vmatpush1.msra.mxu0 0.0
        %740 = vmatprep.subr.mxu0 0.0
        %741 = vmatpush1.msra.mxu0 0.0
        %742 = vmatprep.subr.mxu0 0.0
        %743 = vmatpush1.msra.mxu0 0.0
        %744 = vmatprep.subr.mxu0 0.0
        %745 = vmatpush1.msra.mxu0 0.0
        %746 = vmatprep.subr.mxu0 0.0
        %747 = vmatpush1.msra.mxu0 0.0
        %748 = vmatprep.subr.mxu0 0.0
        %749 = vmatpush1.msra.mxu0 0.0
        %750 = vmatprep.subr.mxu0 0.0
        %751 = vmatpush1.msra.mxu0 0.0
        %752 = vmatprep.subr.mxu0 0.0
        %753 = vmatpush1.msra.mxu0 0.0
        %754 = vmatprep.subr.mxu0 0.0
        %755 = vmatpush1.msra.mxu0 0.0
        %756 = vmatprep.subr.mxu0 0.0
        %757 = vmatpush1.msra.mxu0 0.0
        %758 = vmatprep.subr.mxu0 0.0
        %759 = vmatpush1.msra.mxu0 0.0
        %760 = vmatprep.subr.mxu0 0.0
        %761 = vmatpush1.msra.mxu0 0.0
        %762 = vmatprep.mubr.f32.mxu0 0.0
        %763 = vmatmul.mubr.f32.gmra.mrb[0].mxu0 %v696
        %v764 = vpop.f32.mrb[0].mxu0
        %v765 = vadd.f32 0.0, %v764
        %v766 = vpop.f32.mrb[0].mxu0
        %767 = vdwg.mxu0
        %v769 = vsel %vm646, %v688, 0
        %771 = vmatprep.subr.mxu0 0.0
        %772 = vmatpush1.msra.mxu0 %v329
        %773 = vmatprep.subr.mxu0 0.0
        %774 = vmatpush1.msra.mxu0 0.0
        %775 = vmatprep.subr.mxu0 0.0
        %776 = vmatpush1.msra.mxu0 0.0
        %777 = vmatprep.subr.mxu0 0.0
        %778 = vmatpush1.msra.mxu0 0.0
        %779 = vmatprep.subr.mxu0 0.0
        %780 = vmatpush1.msra.mxu0 0.0
        %781 = vmatprep.subr.mxu0 0.0
        %782 = vmatpush1.msra.mxu0 0.0
        %783 = vmatprep.subr.mxu0 0.0
        %784 = vmatpush1.msra.mxu0 0.0
        %785 = vmatprep.subr.mxu0 0.0
        %786 = vmatpush1.msra.mxu0 0.0
        %787 = vmatprep.subr.mxu0 0.0
        %788 = vmatpush1.msra.mxu0 0.0
        %789 = vmatprep.subr.mxu0 0.0
        %790 = vmatpush1.msra.mxu0 0.0
        %791 = vmatprep.subr.mxu0 0.0
        %792 = vmatpush1.msra.mxu0 0.0
        %793 = vmatprep.subr.mxu0 0.0
        %794 = vmatpush1.msra.mxu0 0.0
        %795 = vmatprep.subr.mxu0 0.0
        %796 = vmatpush1.msra.mxu0 0.0
        %797 = vmatprep.subr.mxu0 0.0
        %798 = vmatpush1.msra.mxu0 0.0
        %799 = vmatprep.subr.mxu0 0.0
        %800 = vmatpush1.msra.mxu0 0.0
        %801 = vmatprep.subr.mxu0 0.0
        %802 = vmatpush1.msra.mxu0 0.0
        %803 = vmatprep.subr.mxu0 0.0
        %804 = vmatpush1.msra.mxu0 0.0
        %805 = vmatprep.subr.mxu0 0.0
        %806 = vmatpush1.msra.mxu0 0.0
        %807 = vmatprep.subr.mxu0 0.0
        %808 = vmatpush1.msra.mxu0 0.0
        %809 = vmatprep.subr.mxu0 0.0
        %810 = vmatpush1.msra.mxu0 0.0
        %811 = vmatprep.subr.mxu0 0.0
        %812 = vmatpush1.msra.mxu0 0.0
        %813 = vmatprep.subr.mxu0 0.0
        %814 = vmatpush1.msra.mxu0 0.0
        %815 = vmatprep.subr.mxu0 0.0
        %816 = vmatpush1.msra.mxu0 0.0
        %817 = vmatprep.subr.mxu0 0.0
        %818 = vmatpush1.msra.mxu0 0.0
        %819 = vmatprep.subr.mxu0 0.0
        %820 = vmatpush1.msra.mxu0 0.0
        %821 = vmatprep.subr.mxu0 0.0
        %822 = vmatpush1.msra.mxu0 0.0
        %823 = vmatprep.subr.mxu0 0.0
        %824 = vmatpush1.msra.mxu0 0.0
        %825 = vmatprep.subr.mxu0 0.0
        %826 = vmatpush1.msra.mxu0 0.0
        %827 = vmatprep.subr.mxu0 0.0
        %828 = vmatpush1.msra.mxu0 0.0
        %829 = vmatprep.subr.mxu0 0.0
        %830 = vmatpush1.msra.mxu0 0.0
        %831 = vmatprep.subr.mxu0 0.0
        %832 = vmatpush1.msra.mxu0 0.0
        %833 = vmatprep.subr.mxu0 0.0
        %834 = vmatpush1.msra.mxu0 0.0
        %835 = vmatprep.mubr.f32.mxu0 0.0
        %836 = vmatmul.mubr.f32.gmra.mrb[0].mxu0 %v769
        %v837 = vpop.f32.mrb[0].mxu0
        %v838 = vadd.f32 0.0, %v837
        %v839 = vpop.f32.mrb[0].mxu0
        %840 = vdwg.mxu0
        %v842 = vsel %vm646, %v689, 0
        %844 = vmatprep.subr.mxu0 0.0
        %845 = vmatpush1.msra.mxu0 %v330
        %846 = vmatprep.subr.mxu0 0.0
        %847 = vmatpush1.msra.mxu0 0.0
        %848 = vmatprep.subr.mxu0 0.0
        %849 = vmatpush1.msra.mxu0 0.0
        %850 = vmatprep.subr.mxu0 0.0
        %851 = vmatpush1.msra.mxu0 0.0
        %852 = vmatprep.subr.mxu0 0.0
        %853 = vmatpush1.msra.mxu0 0.0
        %854 = vmatprep.subr.mxu0 0.0
        %855 = vmatpush1.msra.mxu0 0.0
        %856 = vmatprep.subr.mxu0 0.0
        %857 = vmatpush1.msra.mxu0 0.0
        %858 = vmatprep.subr.mxu0 0.0
        %859 = vmatpush1.msra.mxu0 0.0
        %860 = vmatprep.subr.mxu0 0.0
        %861 = vmatpush1.msra.mxu0 0.0
        %862 = vmatprep.subr.mxu0 0.0
        %863 = vmatpush1.msra.mxu0 0.0
        %864 = vmatprep.subr.mxu0 0.0
        %865 = vmatpush1.msra.mxu0 0.0
        %866 = vmatprep.subr.mxu0 0.0
        %867 = vmatpush1.msra.mxu0 0.0
        %868 = vmatprep.subr.mxu0 0.0
        %869 = vmatpush1.msra.mxu0 0.0
        %870 = vmatprep.subr.mxu0 0.0
        %871 = vmatpush1.msra.mxu0 0.0
        %872 = vmatprep.subr.mxu0 0.0
        %873 = vmatpush1.msra.mxu0 0.0
        %874 = vmatprep.subr.mxu0 0.0
        %875 = vmatpush1.msra.mxu0 0.0
        %876 = vmatprep.subr.mxu0 0.0
        %877 = vmatpush1.msra.mxu0 0.0
        %878 = vmatprep.subr.mxu0 0.0
        %879 = vmatpush1.msra.mxu0 0.0
        %880 = vmatprep.subr.mxu0 0.0
        %881 = vmatpush1.msra.mxu0 0.0
        %882 = vmatprep.subr.mxu0 0.0
        %883 = vmatpush1.msra.mxu0 0.0
        %884 = vmatprep.subr.mxu0 0.0
        %885 = vmatpush1.msra.mxu0 0.0
        %886 = vmatprep.subr.mxu0 0.0
        %887 = vmatpush1.msra.mxu0 0.0
        %888 = vmatprep.subr.mxu0 0.0
        %889 = vmatpush1.msra.mxu0 0.0
        %890 = vmatprep.subr.mxu0 0.0
        %891 = vmatpush1.msra.mxu0 0.0
        %892 = vmatprep.subr.mxu0 0.0
        %893 = vmatpush1.msra.mxu0 0.0
        %894 = vmatprep.subr.mxu0 0.0
        %895 = vmatpush1.msra.mxu0 0.0
        %896 = vmatprep.subr.mxu0 0.0
        %897 = vmatpush1.msra.mxu0 0.0
        %898 = vmatprep.subr.mxu0 0.0
        %899 = vmatpush1.msra.mxu0 0.0
        %900 = vmatprep.subr.mxu0 0.0
        %901 = vmatpush1.msra.mxu0 0.0
        %902 = vmatprep.subr.mxu0 0.0
        %903 = vmatpush1.msra.mxu0 0.0
        %904 = vmatprep.subr.mxu0 0.0
        %905 = vmatpush1.msra.mxu0 0.0
        %906 = vmatprep.subr.mxu0 0.0
        %907 = vmatpush1.msra.mxu0 0.0
        %908 = vmatprep.mubr.f32.mxu0 0.0
        %909 = vmatmul.mubr.f32.gmra.mrb[0].mxu0 %v842
        %v910 = vpop.f32.mrb[0].mxu0
        %v911 = vadd.f32 0.0, %v910
        %v912 = vpop.f32.mrb[0].mxu0
        %913 = vdwg.mxu0
        %v915 = vsel %vm646, %v690, 0
        %917 = vmatprep.subr.mxu0 0.0
        %918 = vmatpush1.msra.mxu0 %v331
        %919 = vmatprep.subr.mxu0 0.0
        %920 = vmatpush1.msra.mxu0 0.0
        %921 = vmatprep.subr.mxu0 0.0
        %922 = vmatpush1.msra.mxu0 0.0
        %923 = vmatprep.subr.mxu0 0.0
        %924 = vmatpush1.msra.mxu0 0.0
        %925 = vmatprep.subr.mxu0 0.0
        %926 = vmatpush1.msra.mxu0 0.0
        %927 = vmatprep.subr.mxu0 0.0
        %928 = vmatpush1.msra.mxu0 0.0
        %929 = vmatprep.subr.mxu0 0.0
        %930 = vmatpush1.msra.mxu0 0.0
        %931 = vmatprep.subr.mxu0 0.0
        %932 = vmatpush1.msra.mxu0 0.0
        %933 = vmatprep.subr.mxu0 0.0
        %934 = vmatpush1.msra.mxu0 0.0
        %935 = vmatprep.subr.mxu0 0.0
        %936 = vmatpush1.msra.mxu0 0.0
        %937 = vmatprep.subr.mxu0 0.0
        %938 = vmatpush1.msra.mxu0 0.0
        %939 = vmatprep.subr.mxu0 0.0
        %940 = vmatpush1.msra.mxu0 0.0
        %941 = vmatprep.subr.mxu0 0.0
        %942 = vmatpush1.msra.mxu0 0.0
        %943 = vmatprep.subr.mxu0 0.0
        %944 = vmatpush1.msra.mxu0 0.0
        %945 = vmatprep.subr.mxu0 0.0
        %946 = vmatpush1.msra.mxu0 0.0
        %947 = vmatprep.subr.mxu0 0.0
        %948 = vmatpush1.msra.mxu0 0.0
        %949 = vmatprep.subr.mxu0 0.0
        %950 = vmatpush1.msra.mxu0 0.0
        %951 = vmatprep.subr.mxu0 0.0
        %952 = vmatpush1.msra.mxu0 0.0
        %953 = vmatprep.subr.mxu0 0.0
        %954 = vmatpush1.msra.mxu0 0.0
        %955 = vmatprep.subr.mxu0 0.0
        %956 = vmatpush1.msra.mxu0 0.0
        %957 = vmatprep.subr.mxu0 0.0
        %958 = vmatpush1.msra.mxu0 0.0
        %959 = vmatprep.subr.mxu0 0.0
        %960 = vmatpush1.msra.mxu0 0.0
        %961 = vmatprep.subr.mxu0 0.0
        %962 = vmatpush1.msra.mxu0 0.0
        %963 = vmatprep.subr.mxu0 0.0
        %964 = vmatpush1.msra.mxu0 0.0
        %965 = vmatprep.subr.mxu0 0.0
        %966 = vmatpush1.msra.mxu0 0.0
        %967 = vmatprep.subr.mxu0 0.0
        %968 = vmatpush1.msra.mxu0 0.0
        %969 = vmatprep.subr.mxu0 0.0
        %970 = vmatpush1.msra.mxu0 0.0
        %971 = vmatprep.subr.mxu0 0.0
        %972 = vmatpush1.msra.mxu0 0.0
        %973 = vmatprep.subr.mxu0 0.0
        %974 = vmatpush1.msra.mxu0 0.0
        %975 = vmatprep.subr.mxu0 0.0
        %976 = vmatpush1.msra.mxu0 0.0
        %977 = vmatprep.subr.mxu0 0.0
        %978 = vmatpush1.msra.mxu0 0.0
        %979 = vmatprep.subr.mxu0 0.0
        %980 = vmatpush1.msra.mxu0 0.0
        %981 = vmatprep.mubr.f32.mxu0 0.0
        %982 = vmatmul.mubr.f32.gmra.mrb[0].mxu0 %v915
        %v983 = vpop.f32.mrb[0].mxu0
        %v984 = vadd.f32 0.0, %v983
        %v985 = vpop.f32.mrb[0].mxu0
        %986 = vdwg.mxu0
        %987 = vst.msk [vmem:[%s319] sm:$0xff] %vm336, %v765
        %988 = vst.msk [vmem:[%s319 + $0x8] sm:$0xff] %vm336, %v838
        %989 = vst.msk [vmem:[%s319 + $0x10] sm:$0xff] %vm336, %v911
        %990 = vst.msk [vmem:[%s319 + $0x18] sm:$0xff] %vm336, %v984
        %p991 = scmp.lt.s32.totalorder %s21, 1
        %s992 = scalar_select %p991, %s21, 1
        %s993 = smul.addr %s992, 4
        %s994 = smul.addr %s993, 8
        %s995 = scalar_lea.vmem %s5, %s994
        %s996 = sand.u32 %s180, 1
        %s997 = scalar_lea.sflag [#allocation3], %s996
        %s998 = sand.u32 %s180, 1
        %s999 = smul.addr %s998, 32
        %s1000 = scalar_lea.vmem [#allocation2], %s999
        // Predicated region
        $region41: #{_lambda_.40} parent=39 // pred_check
          %p1001 = pneg %p164
        $region42: #{_lambda_.40} parent=39 // pred_check_branch
          %1003 = sbr.rel (%p1001) target = $region44
        $region43: #{_lambda_.40} parent=39 // pred_region
          _
        $region44: #{_lambda_.40} parent=39 // pred_fallthru
          _
        // Predicated region
        $region45: #{_lambda_.40} parent=39 // pred_check
          %p1004 = pneg %p190
        $region46: #{_lambda_.40} parent=39 // pred_check_branch
          %1006 = sbr.rel (%p1004) target = $region48
        $region47: #{_lambda_.40} parent=39 // pred_region
          %s1008 = ssub.s32 512, 512
          %1009 = vsyncadd %s997, %s1008
          %s1010 = smul.addr %s21, 4
          %s1011 = smul.addr %s1010, 128
          %s1012 = scalar_lea.hbm %s6, %s1011
          %s1013 = sshll.u32 %s1000, 4
          %s1014 = int_to_ptr.vmem [resolvable:$true] %s1013
          %1019 = dma.vmem_to_hbm [thread:$0]  %s1014, 512, %s1012, %s997, 128, 128, 8
        $region48: #{_lambda_.40} parent=39 // pred_fallthru
          _
      $region40: #{_lambda_.40} parent=5 // pred_fallthru
        _
      %p1020 = scmp.le.s32.totalorder 2, %s16
      // Predicated region
      $region49: #{_lambda_.40} parent=5 // pred_check
        %p1021 = pneg %p1020
      $region50: #{_lambda_.40} parent=5 // pred_check_branch
        %1023 = sbr.rel (%p1021) target = $region52
      $region51: #{_lambda_.40} parent=5 // pred_region
        %s1024 = ssub.s32 %s16, 2
        // Predicated region
        $region53: #{_lambda_.40} parent=51 // pred_check
          %p1025 = pneg %p170
        $region54: #{_lambda_.40} parent=51 // pred_check_branch
          %1027 = sbr.rel (%p1025) target = $region56
        $region55: #{_lambda_.40} parent=51 // pred_region
          %p1028 = scmp.lt.s32.totalorder %s22, 1
          %s1029 = scalar_select %p1028, %s22, 1
          %s1030 = smul.addr %s1029, 4
          %s1031 = smul.addr %s1030, 8
          %s1032 = scalar_lea.vmem %s5, %s1031
        $region56: #{_lambda_.40} parent=51 // pred_fallthru
          _
        // Predicated region
        $region57: #{_lambda_.40} parent=51 // pred_check
          %p1033 = pneg %p196
        $region58: #{_lambda_.40} parent=51 // pred_check_branch
          %1035 = sbr.rel (%p1033) target = $region60
        $region59: #{_lambda_.40} parent=51 // pred_region
          %s1036 = sand.u32 %s181, 1
          %s1037 = scalar_lea.sflag [#allocation3], %s1036
          %s1038 = sand.u32 %s181, 1
          %s1039 = smul.addr %s1038, 32
          %s1040 = scalar_lea.vmem [#allocation2], %s1039
          %1041 = dma.done %s1037, 512
        $region60: #{_lambda_.40} parent=51 // pred_fallthru
          _
      $region52: #{_lambda_.40} parent=5 // pred_fallthru
        _
    $region6: #{_lambda_.40} parent=1 // loop_footer
      %s20 = sadd.s32 1, %s16
    $region7: #{_lambda_.40} parent=1 // loop_footer_branch
      %15 = sbr.rel target = $region3
    $region8: #{_lambda_.40} parent=1 // loop_exit
      _
    %1042 = vsyncpa [#allocation3], 1
    %s1043 = scalar_lea.sflag [#allocation3], 1
    %1044 = vsyncpa %s1043, 1

// kernel: _lambda_.55
$region0: #{_lambda_.55}
  #allocation0 [shape = 'u32[]', space=smem, size = 0x4, offset = 0x4, fixed_abs, tag = 'smem constant byte address 0x4 - core index']
  #allocation1 [shape = 'u32[144,128]{1,0:T(1,128)}', space=vmem, size = 0x12000, scoped, tag = 'internal scratch']
  %s0 = inlined_call_operand.vmem [shape: f32[16,128], index: 0, kind: input, shape index: {}]
  %s1 = inlined_call_operand.vmem [shape: f32[1,128], index: 1, kind: input, shape index: {}]
  %s2 = inlined_call_operand.vmem [shape: f32[128,256], index: 2, kind: input, shape index: {}]
  %s3 = inlined_call_operand.vmem [shape: f32[1,256], index: 3, kind: input, shape index: {}]
  %s4 = inlined_call_operand.hbm [shape: f32[16,256], index: 4, kind: output, shape index: {}]
  %s5 = sld [smem:[#allocation0]]
  $region26: #{_lambda_.55} parent=0
    _
  %s7 = ssub.s32 1, %s5
  %s8 = scalar_select 0, %s7, %s5
  $region1: #{_lambda_.55} parent=0
    #allocation2 [shape = 'u8[16384]{0}', space=vmem, size = 0x4000, scoped, tag = 'output window, operand 0, single buffered']
    #allocation3 [shape = 's32[1]{0}', space=sflag, size = 0x4, scoped, tag = 'scoped memory for _lambda_.55']
    %9 = vsyncpa [#allocation3], 0
    // Predicated region
    $region2: #{_lambda_.55} parent=1 // pred_check
      _
    $region3: #{_lambda_.55} parent=1 // pred_check_branch
      %11 = sbr.rel (0) target = $region5
    $region4: #{_lambda_.55} parent=1 // pred_region
      _
    $region5: #{_lambda_.55} parent=1 // pred_fallthru
      _
    // Predicated region
    $region6: #{_lambda_.55} parent=1 // pred_check
      _
    $region7: #{_lambda_.55} parent=1 // pred_check_branch
      %13 = sbr.rel (0) target = $region9
    $region8: #{_lambda_.55} parent=1 // pred_region
      _
    $region9: #{_lambda_.55} parent=1 // pred_fallthru
      _
    // Predicated region
    $region10: #{_lambda_.55} parent=1 // pred_check
      _
    $region11: #{_lambda_.55} parent=1 // pred_check_branch
      %15 = sbr.rel (0) target = $region13
    $region12: #{_lambda_.55} parent=1 // pred_region
      _
    $region13: #{_lambda_.55} parent=1 // pred_fallthru
      _
    // Predicated region
    $region14: #{_lambda_.55} parent=1 // pred_check
      _
    $region15: #{_lambda_.55} parent=1 // pred_check_branch
      %17 = sbr.rel (0) target = $region17
    $region16: #{_lambda_.55} parent=1 // pred_region
      _
    $region17: #{_lambda_.55} parent=1 // pred_fallthru
      _
    %v18 = vld [vmem:[%s0] sm:$0xff]
    %v19 = vld [vmem:[%s0 + $0x8] sm:$0xff]
    %v20 = vmul.f32 %v18, %v18
    %v21 = vmul.f32 %v19, %v19
    %22 = vadd.xlane.f32.xlu0 %v20
    %v23 = vpop.xlane.xlu0 %22
    %24 = vadd.xlane.f32.xlu0 %v21
    %v25 = vpop.xlane.xlu0 %24
    %v26 = vrcp.pop 128.0
    %v27 = vmul.f32 %v23, %v26
    %v28 = vmul.f32 %v25, %v26
    %v29 = vld [vmem:[%s1] sm:$0x1]
    %v30 = vadd.f32 %v27, 1e-06
    %v31 = vadd.f32 %v28, 1e-06
    %v32 = vrsqrt.pop %v30
    %v33 = vrsqrt.pop %v31
    %v34 = vmul.f32 %v18, %v32
    %v35 = vmul.f32 %v19, %v33
    %v37 = vlaneseq
    %v38 = vshrl.u32 %v37, 7
    %v39 = vsub.s32 0, %v38
    %v40 = vrot.slane %v29, %v39
    %v42 = vmul.f32 %v40, %v34
    %v43 = vmul.f32 %v40, %v35
    %v44 = vld [vmem:[%s2] sm:$0xff]
    %v45 = vld [vmem:[%s2 + $0x8] sm:$0xff]
    %v46 = vld [vmem:[%s2 + $0x10] sm:$0xff]
    %v47 = vld [vmem:[%s2 + $0x18] sm:$0xff]
    %v48 = vld [vmem:[%s2 + $0x20] sm:$0xff]
    %v49 = vld [vmem:[%s2 + $0x28] sm:$0xff]
    %v50 = vld [vmem:[%s2 + $0x30] sm:$0xff]
    %v51 = vld [vmem:[%s2 + $0x38] sm:$0xff]
    %v52 = vld [vmem:[%s2 + $0x40] sm:$0xff]
    %v53 = vld [vmem:[%s2 + $0x48] sm:$0xff]
    %v54 = vld [vmem:[%s2 + $0x50] sm:$0xff]
    %v55 = vld [vmem:[%s2 + $0x58] sm:$0xff]
    %v56 = vld [vmem:[%s2 + $0x60] sm:$0xff]
    %v57 = vld [vmem:[%s2 + $0x68] sm:$0xff]
    %v58 = vld [vmem:[%s2 + $0x70] sm:$0xff]
    %v59 = vld [vmem:[%s2 + $0x78] sm:$0xff]
    %v60 = vld [vmem:[%s2 + $0x80] sm:$0xff]
    %v61 = vld [vmem:[%s2 + $0x88] sm:$0xff]
    %v62 = vld [vmem:[%s2 + $0x90] sm:$0xff]
    %v63 = vld [vmem:[%s2 + $0x98] sm:$0xff]
    %v64 = vld [vmem:[%s2 + $0xa0] sm:$0xff]
    %v65 = vld [vmem:[%s2 + $0xa8] sm:$0xff]
    %v66 = vld [vmem:[%s2 + $0xb0] sm:$0xff]
    %v67 = vld [vmem:[%s2 + $0xb8] sm:$0xff]
    %v68 = vld [vmem:[%s2 + $0xc0] sm:$0xff]
    %v69 = vld [vmem:[%s2 + $0xc8] sm:$0xff]
    %v70 = vld [vmem:[%s2 + $0xd0] sm:$0xff]
    %v71 = vld [vmem:[%s2 + $0xd8] sm:$0xff]
    %v72 = vld [vmem:[%s2 + $0xe0] sm:$0xff]
    %v73 = vld [vmem:[%s2 + $0xe8] sm:$0xff]
    %v74 = vld [vmem:[%s2 + $0xf0] sm:$0xff]
    %v75 = vld [vmem:[%s2 + $0xf8] sm:$0xff]
    %v76 = vld [vmem:[%s3] sm:$0x3]
    %v78 = vlaneseq
    %v79 = vshrl.u32 %v78, 7
    %v80 = vsub.s32 0, %v79
    %v81 = vrot.slane %v76, %v80
    %v82 = vlaneseq
    %v83 = vshrl.u32 %v82, 7
    %v84 = vsub.s32 1, %v83
    %v85 = vrot.slane %v76, %v84
    %88 = vmatprep.subr.mxu0 %v45
    %89 = vmatpush1.msra.mxu0 %v44
    %90 = vmatprep.subr.mxu0 %v47
    %91 = vmatpush1.msra.mxu0 %v46
    %92 = vmatprep.subr.mxu0 %v49
    %93 = vmatpush1.msra.mxu0 %v48
    %94 = vmatprep.subr.mxu0 %v51
    %95 = vmatpush1.msra.mxu0 %v50
    %96 = vmatprep.subr.mxu0 %v53
    %97 = vmatpush1.msra.mxu0 %v52
    %98 = vmatprep.subr.mxu0 %v55
    %99 = vmatpush1.msra.mxu0 %v54
    %100 = vmatprep.subr.mxu0 %v57
    %101 = vmatpush1.msra.mxu0 %v56
    %102 = vmatprep.subr.mxu0 %v59
    %103 = vmatpush1.msra.mxu0 %v58
    %104 = vmatprep.subr.mxu0 %v61
    %105 = vmatpush1.msra.mxu0 %v60
    %106 = vmatprep.subr.mxu0 %v63
    %107 = vmatpush1.msra.mxu0 %v62
    %108 = vmatprep.subr.mxu0 %v65
    %109 = vmatpush1.msra.mxu0 %v64
    %110 = vmatprep.subr.mxu0 %v67
    %111 = vmatpush1.msra.mxu0 %v66
    %112 = vmatprep.subr.mxu0 %v69
    %113 = vmatpush1.msra.mxu0 %v68
    %114 = vmatprep.subr.mxu0 %v71
    %115 = vmatpush1.msra.mxu0 %v70
    %116 = vmatprep.subr.mxu0 %v73
    %117 = vmatpush1.msra.mxu0 %v72
    %118 = vmatprep.subr.mxu0 %v75
    %119 = vmatpush1.msra.mxu0 %v74
    %120 = vmatprep.subr.mxu0 0.0
    %121 = vmatpush1.msra.mxu0 0.0
    %122 = vmatprep.subr.mxu0 0.0
    %123 = vmatpush1.msra.mxu0 0.0
    %124 = vmatprep.subr.mxu0 0.0
    %125 = vmatpush1.msra.mxu0 0.0
    %126 = vmatprep.subr.mxu0 0.0
    %127 = vmatpush1.msra.mxu0 0.0
    %128 = vmatprep.subr.mxu0 0.0
    %129 = vmatpush1.msra.mxu0 0.0
    %130 = vmatprep.subr.mxu0 0.0
    %131 = vmatpush1.msra.mxu0 0.0
    %132 = vmatprep.subr.mxu0 0.0
    %133 = vmatpush1.msra.mxu0 0.0
    %134 = vmatprep.subr.mxu0 0.0
    %135 = vmatpush1.msra.mxu0 0.0
    %136 = vmatprep.subr.mxu0 0.0
    %137 = vmatpush1.msra.mxu0 0.0
    %138 = vmatprep.subr.mxu0 0.0
    %139 = vmatpush1.msra.mxu0 0.0
    %140 = vmatprep.subr.mxu0 0.0
    %141 = vmatpush1.msra.mxu0 0.0
    %142 = vmatprep.subr.mxu0 0.0
    %143 = vmatpush1.msra.mxu0 0.0
    %144 = vmatprep.subr.mxu0 0.0
    %145 = vmatpush1.msra.mxu0 0.0
    %146 = vmatprep.subr.mxu0 0.0
    %147 = vmatpush1.msra.mxu0 0.0
    %148 = vmatprep.subr.mxu0 0.0
    %149 = vmatpush1.msra.mxu0 0.0
    %150 = vmatprep.subr.mxu0 0.0
    %151 = vmatpush1.msra.mxu0 0.0
    %152 = vmatprep.mubr.f32.mxu0 0.0
    %153 = vmatmul.mubr.f32.gmra.mrb[0].mxu0 %v42
    %v154 = vpop.f32.mrb[0].mxu0
    %v155 = vadd.f32 %v81, %v154
    %v156 = vpop.f32.mrb[0].mxu0
    %v157 = vadd.f32 %v85, %v156
    %158 = vmatprep.mubr.f32.mxu0 0.0
    %159 = vmatmul.mubr.f32.gmra.mrb[0].mxu0 %v43
    %v160 = vpop.f32.mrb[0].mxu0
    %v161 = vadd.f32 %v81, %v160
    %v162 = vpop.f32.mrb[0].mxu0
    %v163 = vadd.f32 %v85, %v162
    %164 = vdwg.mxu0
    %165 = vst [vmem:[#allocation2] sm:$0xff] %v155
    %166 = vst [vmem:[#allocation2 + $0x8] sm:$0xff] %v157
    %167 = vst [vmem:[#allocation2 + $0x10] sm:$0xff] %v161
    %168 = vst [vmem:[#allocation2 + $0x18] sm:$0xff] %v163
    // Predicated region
    $region18: #{_lambda_.55} parent=1 // pred_check
      _
    $region19: #{_lambda_.55} parent=1 // pred_check_branch
      %170 = sbr.rel (0) target = $region21
    $region20: #{_lambda_.55} parent=1 // pred_region
      %s172 = ssub.s32 512, 512
      %173 = vsyncadd [#allocation3], %s172
      %s174 = sshll.u32 [#allocation2], 4
      %s175 = int_to_ptr.vmem [resolvable:$true] %s174
      %180 = dma.vmem_to_hbm [thread:$0]  %s175, 512, %s4, [#allocation3], 256, 256, 16
    $region21: #{_lambda_.55} parent=1 // pred_fallthru
      _
    // Predicated region
    $region22: #{_lambda_.55} parent=1 // pred_check
      _
    $region23: #{_lambda_.55} parent=1 // pred_check_branch
      %182 = sbr.rel (0) target = $region25
    $region24: #{_lambda_.55} parent=1 // pred_region
      %183 = dma.done [#allocation3], 512
    $region25: #{_lambda_.55} parent=1 // pred_fallthru
      _
    %184 = vsyncpa [#allocation3], 1

</llo_original>
